<compile_context>
chip_gen: v5e
topology: v5e:2x2
jax: 0.10.0
libtpu: 0.0.40
codegen_flags: <defaults>
</compile_context>

<pallas_src>
import functools
import math

import jax
import jax.numpy as jnp
from jax.experimental import pallas as pl
from jax.experimental.pallas import tpu as pltpu


def _layernorm(x, g, b, eps=1e-12):
    mu = jnp.mean(x, axis=-1, keepdims=True)
    var = jnp.mean(jnp.square(x - mu), axis=-1, keepdims=True)
    return (x - mu) * jax.lax.rsqrt(var + eps) * g + b


def encoder_stack_kernel(x_ref, m_ref,
                         wqkv_ref, bqkv_ref, wo_ref, bo_ref,
                         ln1g_ref, ln1b_ref,
                         w1_ref, b1_ref, w2_ref, b2_ref,
                         ln2g_ref, ln2b_ref,
                         o_ref, *, num_heads):
    l = pl.program_id(1)

    # Layer 0: seed the resident output block (the residual-stream carry)
    # with this example's embeddings.
    @pl.when(l == 0)
    def _():
        o_ref[...] = x_ref[...].astype(o_ref.dtype)

    x = o_ref[...].astype(jnp.float32)              # (S, H) f32 residual stream
    S, H = x.shape
    hd = H // num_heads

    mask = m_ref[...].astype(jnp.float32)           # (1, S); 1 = keep, 0 = pad
    neg_bias = (mask - 1.0) * 1e9                   # additive mask, kept in f32

    xb = x.astype(jnp.bfloat16)

    # ---- fused QKV projection (1/sqrt(hd) already folded into Q weights) ---
    qkv = jnp.dot(xb, wqkv_ref[...], preferred_element_type=jnp.float32)
    qkv = qkv + bqkv_ref[...]
    q = qkv[:, 0 * H:1 * H]
    k = qkv[:, 1 * H:2 * H]
    v = qkv[:, 2 * H:3 * H]

    # ---- multi-head attention: static unroll over heads, per-head output
    #      projection accumulated into `attn` (no lane-dim concatenate) ------
    attn = jnp.zeros((S, H), jnp.float32)
    for h in range(num_heads):                      # static Python unroll
        sl = slice(h * hd, (h + 1) * hd)            # lane-aligned in the demo
        qh = q[:, sl].astype(jnp.bfloat16)
        kh = k[:, sl].astype(jnp.bfloat16)
        vh = v[:, sl].astype(jnp.bfloat16)
        # scores = qh @ kh.T  (contract last dims; no explicit transpose)
        s = jax.lax.dot_general(qh, kh, (((1,), (1,)), ((), ())),
                                preferred_element_type=jnp.float32)
        s = s + neg_bias
        s = s - jnp.max(s, axis=-1, keepdims=True)
        p = jnp.exp(s)
        p = p * pl.reciprocal(jnp.sum(p, axis=-1, keepdims=True), approx=True)
        ctx = jnp.dot(p.astype(jnp.bfloat16), vh,
                      preferred_element_type=jnp.float32)
        attn = attn + jnp.dot(ctx.astype(jnp.bfloat16), wo_ref[sl, :],
                              preferred_element_type=jnp.float32)
    attn = attn + bo_ref[...]

    h1 = _layernorm(x + attn, ln1g_ref[...], ln1b_ref[...])

    # ---- feed-forward ------------------------------------------------------
    ff = jnp.dot(h1.astype(jnp.bfloat16), w1_ref[...],
                 preferred_element_type=jnp.float32) + b1_ref[...]
    # TODO(synk): pretrained BERT uses exact erf GELU; the tanh approximation
    # is kept for robust Mosaic lowering (small numeric drift vs a checkpoint).
    ff = jax.nn.gelu(ff, approximate=True)
    ff = jnp.dot(ff.astype(jnp.bfloat16), w2_ref[...],
                 preferred_element_type=jnp.float32) + b2_ref[...]
    out = _layernorm(h1 + ff, ln2g_ref[...], ln2b_ref[...])

    # Carry the new hidden state; after the last layer this block is written
    # back to HBM (output block index depends only on b).
    o_ref[...] = out.astype(o_ref.dtype)


# Order must match the kernel signature above.
_STACK_KEYS = ("wqkv", "bqkv", "wo", "bo", "ln1_g", "ln1_b",
               "w1", "b1", "w2", "b2", "ln2_g", "ln2_b")


def encoder_stack_pallas(x_emb, attn_mask, stacked, num_heads):
    """Runs the full L-layer encoder stack in a single pallas_call."""
    B, S, H = x_emb.shape
    L = stacked["wqkv"].shape[0]
    F = stacked["w1"].shape[-1]

    weights = [stacked[k] for k in _STACK_KEYS]
    mask3 = attn_mask.astype(jnp.float32)[:, None, :]            # (B, 1, S)

    in_specs = [
        pl.BlockSpec((None, S, H), lambda b, l: (b, 0, 0)),      # x_emb  -> (S, H)
        pl.BlockSpec((None, 1, S), lambda b, l: (b, 0, 0)),      # mask   -> (1, S)
    ]
    for w in weights:                                            # layer-l slab
        in_specs.append(
            pl.BlockSpec((None,) + tuple(w.shape[1:]), lambda b, l: (l, 0, 0)))

    out_spec = pl.BlockSpec((None, S, H), lambda b, l: (b, 0, 0))

    # Scoped-VMEM budget: double-buffered input/output blocks + f32 in-kernel
    # intermediates (qkv / scores / ffn), ~25% headroom, capped below the
    # 64 MiB physical VMEM of a v7x TensorCore.
    block_bytes = sum(math.prod(w.shape[1:]) * w.dtype.itemsize for w in weights)
    block_bytes += S * H * (x_emb.dtype.itemsize + 4) + S * 4
    interm_bytes = 4 * S * (3 * H + 2 * F + 8 * H) + 4 * S * S
    vmem_limit = int(1.25 * (2 * block_bytes + interm_bytes))
    vmem_limit = max(vmem_limit, 16 * 1024 * 1024)
    vmem_limit = min(vmem_limit, 60 * 1024 * 1024)

    kernel = functools.partial(encoder_stack_kernel, num_heads=num_heads)
    return pl.pallas_call(
        kernel,
        out_shape=jax.ShapeDtypeStruct((B, S, H), jnp.float32),
        grid=(B, L),
        in_specs=in_specs,
        out_specs=out_spec,
        compiler_params=pltpu.CompilerParams(
            dimension_semantics=("parallel", "arbitrary"),
            vmem_limit_bytes=vmem_limit),
    )(x_emb, mask3, *weights)


def init_params(key, *, vocab, max_seq, hidden, ffn, num_layers):
    """Deterministic stand-in for a pretrained BERT-style checkpoint (f32)."""
    def rnd(k, shape, scale=0.02):
        return jax.random.normal(k, shape, dtype=jnp.float32) * scale

    key, ke, kp = jax.random.split(key, 3)
    params = {"tok_emb": rnd(ke, (vocab, hidden)),
              "pos_emb": rnd(kp, (max_seq, hidden)),
              "layers": []}
    for _ in range(num_layers):
        key, *ks = jax.random.split(key, 7)
        params["layers"].append({
            "wq": rnd(ks[0], (hidden, hidden)), "bq": jnp.zeros((hidden,), jnp.float32),
            "wk": rnd(ks[1], (hidden, hidden)), "bk": jnp.zeros((hidden,), jnp.float32),
            "wv": rnd(ks[2], (hidden, hidden)), "bv": jnp.zeros((hidden,), jnp.float32),
            "wo": rnd(ks[3], (hidden, hidden)), "bo": jnp.zeros((hidden,), jnp.float32),
            "ln1_g": jnp.ones((hidden,), jnp.float32),
            "ln1_b": jnp.zeros((hidden,), jnp.float32),
            "w1": rnd(ks[4], (hidden, ffn)), "b1": jnp.zeros((ffn,), jnp.float32),
            "w2": rnd(ks[5], (ffn, hidden)), "b2": jnp.zeros((hidden,), jnp.float32),
            "ln2_g": jnp.ones((hidden,), jnp.float32),
            "ln2_b": jnp.zeros((hidden,), jnp.float32),
        })
    return params


def prepare_encoder_params(params, num_heads):
    """Fuse QKV (folding in 1/sqrt(head_dim)), stack layers along a leading L
    dim, and cast matmul weights to bfloat16 (biases / LN params stay f32)."""
    hidden = params["tok_emb"].shape[1]
    assert hidden % num_heads == 0, "hidden must be divisible by num_heads"
    scale = 1.0 / math.sqrt(hidden // num_heads)

    def fuse(lp):
        wqkv = jnp.concatenate([lp["wq"] * scale, lp["wk"], lp["wv"]], axis=1)
        bqkv = jnp.concatenate([lp["bq"] * scale, lp["bk"], lp["bv"]], axis=0)
        return {
            "wqkv": wqkv.astype(jnp.bfloat16),
            "bqkv": bqkv[None, :].astype(jnp.float32),
            "wo": lp["wo"].astype(jnp.bfloat16),
            "bo": lp["bo"][None, :].astype(jnp.float32),
            "ln1_g": lp["ln1_g"][None, :], "ln1_b": lp["ln1_b"][None, :],
            "w1": lp["w1"].astype(jnp.bfloat16), "b1": lp["b1"][None, :],
            "w2": lp["w2"].astype(jnp.bfloat16), "b2": lp["b2"][None, :],
            "ln2_g": lp["ln2_g"][None, :], "ln2_b": lp["ln2_b"][None, :],
        }

    fused = [fuse(lp) for lp in params["layers"]]
    return {k: jnp.stack([f[k] for f in fused], axis=0) for k in _STACK_KEYS}


def encoder_forward(input_ids, attn_mask, params, *, num_heads, output_mask=None):
    """Mirrors Encoder.forward (the `freeze` flag only affects grads)."""
    B, S = input_ids.shape
    # Embedding gather stays in plain JAX (data-dependent gather = glue).
    x = params["tok_emb"][input_ids] + params["pos_emb"][None, :S, :]
    x = x.astype(jnp.bfloat16)                      # halve HBM->VMEM traffic

    stacked = prepare_encoder_params(params, num_heads)
    hidden = encoder_stack_pallas(x, attn_mask, stacked, num_heads)  # (B,S,H) f32

    if output_mask is None:
        # output[:, 0, :].squeeze(dim=1)  -> (B, H)   (CLS pooling)
        return hidden[:, 0, :]
    # TODO(synk): `process_encoder_outputs` is not defined in the reference
    # source; the output_mask branch cannot be reproduced faithfully.
    raise NotImplementedError("output_mask path requires process_encoder_outputs")


if __name__ == "__main__":
    # Small but lane-aligned demo shapes: H / FFN multiples of 128, S multiple
    # of 16 (bf16 sublane packing), head_dim = 128 (aligned per-head slices).
    B, S, H, FFN, V, L, NH = 2, 16, 256, 512, 64, 2, 2

    key = jax.random.PRNGKey(0)
    key, kids, kparams = jax.random.split(key, 3)

    input_ids = jax.random.randint(kids, (B, S), 0, V, dtype=jnp.int32)
    attn_mask = jnp.ones((B, S), dtype=jnp.int32).at[1, 12:].set(0)  # pad tail

    params = init_params(kparams, vocab=V, max_seq=S, hidden=H, ffn=FFN,
                         num_layers=L)

    out = encoder_forward(input_ids, attn_mask, params, num_heads=NH,
                          output_mask=None)
    out = jax.block_until_ready(out)
    assert out.shape == (B, H)
    assert bool(jnp.all(jnp.isfinite(out)))
    print("KERNEL_OK")
</pallas_src>

<mosaic_0001>
module attributes {stable_mosaic.version = 11 : i64} {
  func.func @encoder_stack_kernel(%arg0: i32, %arg1: i32, %arg2: memref<1x16x256xbf16, #tpu.memory_space<vmem>>, %arg3: memref<1x1x16xf32, #tpu.memory_space<vmem>>, %arg4: memref<1x256x768xbf16, #tpu.memory_space<vmem>>, %arg5: memref<1x1x768xf32, #tpu.memory_space<vmem>>, %arg6: memref<1x256x256xbf16, #tpu.memory_space<vmem>>, %arg7: memref<1x1x256xf32, #tpu.memory_space<vmem>>, %arg8: memref<1x1x256xf32, #tpu.memory_space<vmem>>, %arg9: memref<1x1x256xf32, #tpu.memory_space<vmem>>, %arg10: memref<1x256x512xbf16, #tpu.memory_space<vmem>>, %arg11: memref<1x1x512xf32, #tpu.memory_space<vmem>>, %arg12: memref<1x512x256xbf16, #tpu.memory_space<vmem>>, %arg13: memref<1x1x256xf32, #tpu.memory_space<vmem>>, %arg14: memref<1x1x256xf32, #tpu.memory_space<vmem>>, %arg15: memref<1x1x256xf32, #tpu.memory_space<vmem>>, %arg16: memref<1x16x256xf32, #tpu.memory_space<vmem>>) attributes {dimension_semantics = [#tpu.dimension_semantics<parallel>, #tpu.dimension_semantics<arbitrary>], iteration_bounds = array<i64: 2, 2>, scalar_prefetch = 0 : i64, scratch_operands = 0 : i64, tpu.core_type = #tpu.core_type<tc>, window_params = [{transform_indices = @transform_0, window_bounds = array<i64: 1, 16, 256>}, {transform_indices = @transform_1, window_bounds = array<i64: 1, 1, 16>}, {transform_indices = @transform_2, window_bounds = array<i64: 1, 256, 768>}, {transform_indices = @transform_3, window_bounds = array<i64: 1, 1, 768>}, {transform_indices = @transform_4, window_bounds = array<i64: 1, 256, 256>}, {transform_indices = @transform_5, window_bounds = array<i64: 1, 1, 256>}, {transform_indices = @transform_6, window_bounds = array<i64: 1, 1, 256>}, {transform_indices = @transform_7, window_bounds = array<i64: 1, 1, 256>}, {transform_indices = @transform_8, window_bounds = array<i64: 1, 256, 512>}, {transform_indices = @transform_9, window_bounds = array<i64: 1, 1, 512>}, {transform_indices = @transform_10, window_bounds = array<i64: 1, 512, 256>}, {transform_indices = @transform_11, window_bounds = array<i64: 1, 1, 256>}, {transform_indices = @transform_12, window_bounds = array<i64: 1, 1, 256>}, {transform_indices = @transform_13, window_bounds = array<i64: 1, 1, 256>}, {transform_indices = @transform_14, window_bounds = array<i64: 1, 16, 256>}]} {
    %c0_i32 = arith.constant 0 : i32
    %0 = arith.cmpi eq, %arg1, %c0_i32 : i32
    %1 = arith.extui %0 : i1 to i32
    %c0_i32_0 = arith.constant 0 : i32
    %2 = arith.cmpi ne, %1, %c0_i32_0 : i32
    scf.if %2 {
      %c0_76 = arith.constant 0 : index
      %c0_77 = arith.constant 0 : index
      %c0_78 = arith.constant 0 : index
      %165 = vector.load %arg2[%c0_76, %c0_77, %c0_78] : memref<1x16x256xbf16, #tpu.memory_space<vmem>>, vector<1x16x256xbf16>
      %166 = vector.shape_cast %165 : vector<1x16x256xbf16> to vector<16x256xbf16>
      %167 = arith.extf %166 : vector<16x256xbf16> to vector<16x256xf32>
      %c0_79 = arith.constant 0 : index
      %c0_80 = arith.constant 0 : index
      %c0_81 = arith.constant 0 : index
      %168 = vector.load %arg16[%c0_79, %c0_80, %c0_81] : memref<1x16x256xf32, #tpu.memory_space<vmem>>, vector<1x16x256xf32>
      %169 = vector.shape_cast %168 : vector<1x16x256xf32> to vector<16x256xf32>
      %170 = vector.shape_cast %167 : vector<16x256xf32> to vector<1x16x256xf32>
      tpu.vector_store %arg16[%c0_79, %c0_80, %c0_81], %170 {strides = array<i32>} : memref<1x16x256xf32, #tpu.memory_space<vmem>>, vector<1x16x256xf32>,
    } else {
    }
    %c0 = arith.constant 0 : index
    %c0_1 = arith.constant 0 : index
    %c0_2 = arith.constant 0 : index
    %3 = vector.load %arg16[%c0, %c0_1, %c0_2] : memref<1x16x256xf32, #tpu.memory_space<vmem>>, vector<1x16x256xf32>
    %4 = vector.shape_cast %3 : vector<1x16x256xf32> to vector<16x256xf32>
    %c0_3 = arith.constant 0 : index
    %c0_4 = arith.constant 0 : index
    %c0_5 = arith.constant 0 : index
    %5 = vector.load %arg3[%c0_3, %c0_4, %c0_5] : memref<1x1x16xf32, #tpu.memory_space<vmem>>, vector<1x1x16xf32>
    %6 = vector.shape_cast %5 : vector<1x1x16xf32> to vector<1x16xf32>
    %cst = arith.constant 1.000000e+00 : f32
    %7 = vector.broadcast %cst : f32 to vector<1x16xf32>
    %8 = arith.subf %6, %7 : vector<1x16xf32>
    %cst_6 = arith.constant 1.000000e+09 : f32
    %9 = vector.broadcast %cst_6 : f32 to vector<1x16xf32>
    %10 = arith.mulf %8, %9 : vector<1x16xf32>
    %11 = arith.truncf %4 : vector<16x256xf32> to vector<16x256xbf16>
    %c0_7 = arith.constant 0 : index
    %c0_8 = arith.constant 0 : index
    %c0_9 = arith.constant 0 : index
    %12 = vector.load %arg4[%c0_7, %c0_8, %c0_9] : memref<1x256x768xbf16, #tpu.memory_space<vmem>>, vector<1x256x768xbf16>
    %13 = vector.shape_cast %12 : vector<1x256x768xbf16> to vector<256x768xbf16>
    %cst_10 = arith.constant dense<0.000000e+00> : vector<16x768xf32>
    %14 = tpu.matmul %11, %13, %cst_10 {dimension_numbers = #tpu.dot_dimension_numbers<[1], [0], [0], [1], [0, 0, 1, 1], [], []>} : vector<16x256xbf16>, vector<256x768xbf16>, vector<16x768xf32> -> vector<16x768xf32>
    %c0_11 = arith.constant 0 : index
    %c0_12 = arith.constant 0 : index
    %c0_13 = arith.constant 0 : index
    %15 = vector.load %arg5[%c0_11, %c0_12, %c0_13] : memref<1x1x768xf32, #tpu.memory_space<vmem>>, vector<1x1x768xf32>
    %16 = vector.shape_cast %15 : vector<1x1x768xf32> to vector<1x768xf32>
    %17 = vector.broadcast %16 : vector<1x768xf32> to vector<16x768xf32>
    %18 = arith.addf %14, %17 : vector<16x768xf32>
    %19 = vector.extract_strided_slice %18 {offsets = [0, 0], sizes = [16, 256], strides = [1, 1]} : vector<16x768xf32> to vector<16x256xf32>
    %20 = vector.extract_strided_slice %18 {offsets = [0, 256], sizes = [16, 256], strides = [1, 1]} : vector<16x768xf32> to vector<16x256xf32>
    %21 = vector.extract_strided_slice %18 {offsets = [0, 512], sizes = [16, 256], strides = [1, 1]} : vector<16x768xf32> to vector<16x256xf32>
    %cst_14 = arith.constant 0.000000e+00 : f32
    %22 = vector.broadcast %cst_14 : f32 to vector<16x256xf32>
    %23 = vector.extract_strided_slice %19 {offsets = [0, 0], sizes = [16, 128], strides = [1, 1]} : vector<16x256xf32> to vector<16x128xf32>
    %24 = arith.truncf %23 : vector<16x128xf32> to vector<16x128xbf16>
    %25 = vector.extract_strided_slice %20 {offsets = [0, 0], sizes = [16, 128], strides = [1, 1]} : vector<16x256xf32> to vector<16x128xf32>
    %26 = arith.truncf %25 : vector<16x128xf32> to vector<16x128xbf16>
    %27 = vector.extract_strided_slice %21 {offsets = [0, 0], sizes = [16, 128], strides = [1, 1]} : vector<16x256xf32> to vector<16x128xf32>
    %28 = arith.truncf %27 : vector<16x128xf32> to vector<16x128xbf16>
    %cst_15 = arith.constant dense<0.000000e+00> : vector<16x16xf32>
    %29 = tpu.matmul %24, %26, %cst_15 {dimension_numbers = #tpu.dot_dimension_numbers<[1], [1], [0], [0], [0, 0, 1, 0], [], []>} : vector<16x128xbf16>, vector<16x128xbf16>, vector<16x16xf32> -> vector<16x16xf32>
    %30 = vector.broadcast %10 : vector<1x16xf32> to vector<16x16xf32>
    %31 = arith.addf %29, %30 : vector<16x16xf32>
    %cst_16 = arith.constant dense<0xFF800000> : vector<16xf32>
    %32 = vector.multi_reduction <maximumf>, %31, %cst_16 [1] : vector<16x16xf32> to vector<16xf32>
    %33 = vector.shape_cast %32 : vector<16xf32> to vector<16x1xf32>
    %34 = vector.broadcast %33 : vector<16x1xf32> to vector<16x16xf32>
    %35 = arith.subf %31, %34 : vector<16x16xf32>
    %36 = math.exp %35 : vector<16x16xf32>
    %cst_17 = arith.constant dense<0.000000e+00> : vector<16xf32>
    %37 = vector.multi_reduction <add>, %36, %cst_17 [1] : vector<16x16xf32> to vector<16xf32>
    %38 = vector.shape_cast %37 : vector<16xf32> to vector<16x1xf32>
    %39 = tpu.reciprocal %38 {approx = true} : vector<16x1xf32> -> vector<16x1xf32>
    %40 = vector.broadcast %39 : vector<16x1xf32> to vector<16x16xf32>
    %41 = arith.mulf %36, %40 : vector<16x16xf32>
    %42 = arith.truncf %41 : vector<16x16xf32> to vector<16x16xbf16>
    %cst_18 = arith.constant dense<0.000000e+00> : vector<16x128xf32>
    %43 = tpu.matmul %42, %28, %cst_18 {dimension_numbers = #tpu.dot_dimension_numbers<[1], [0], [0], [1], [0, 0, 1, 1], [], []>} : vector<16x16xbf16>, vector<16x128xbf16>, vector<16x128xf32> -> vector<16x128xf32>
    %44 = arith.truncf %43 : vector<16x128xf32> to vector<16x128xbf16>
    %c0_19 = arith.constant 0 : index
    %c0_20 = arith.constant 0 : index
    %c0_21 = arith.constant 0 : index
    %45 = vector.load %arg6[%c0_19, %c0_20, %c0_21] : memref<1x256x256xbf16, #tpu.memory_space<vmem>>, vector<1x128x256xbf16>
    %46 = vector.shape_cast %45 : vector<1x128x256xbf16> to vector<128x256xbf16>
    %cst_22 = arith.constant dense<0.000000e+00> : vector<16x256xf32>
    %47 = tpu.matmul %44, %46, %cst_22 {dimension_numbers = #tpu.dot_dimension_numbers<[1], [0], [0], [1], [0, 0, 1, 1], [], []>} : vector<16x128xbf16>, vector<128x256xbf16>, vector<16x256xf32> -> vector<16x256xf32>
    %48 = arith.addf %22, %47 : vector<16x256xf32>
    %49 = vector.extract_strided_slice %19 {offsets = [0, 128], sizes = [16, 128], strides = [1, 1]} : vector<16x256xf32> to vector<16x128xf32>
    %50 = arith.truncf %49 : vector<16x128xf32> to vector<16x128xbf16>
    %51 = vector.extract_strided_slice %20 {offsets = [0, 128], sizes = [16, 128], strides = [1, 1]} : vector<16x256xf32> to vector<16x128xf32>
    %52 = arith.truncf %51 : vector<16x128xf32> to vector<16x128xbf16>
    %53 = vector.extract_strided_slice %21 {offsets = [0, 128], sizes = [16, 128], strides = [1, 1]} : vector<16x256xf32> to vector<16x128xf32>
    %54 = arith.truncf %53 : vector<16x128xf32> to vector<16x128xbf16>
    %cst_23 = arith.constant dense<0.000000e+00> : vector<16x16xf32>
    %55 = tpu.matmul %50, %52, %cst_23 {dimension_numbers = #tpu.dot_dimension_numbers<[1], [1], [0], [0], [0, 0, 1, 0], [], []>} : vector<16x128xbf16>, vector<16x128xbf16>, vector<16x16xf32> -> vector<16x16xf32>
    %56 = vector.broadcast %10 : vector<1x16xf32> to vector<16x16xf32>
    %57 = arith.addf %55, %56 : vector<16x16xf32>
    %cst_24 = arith.constant dense<0xFF800000> : vector<16xf32>
    %58 = vector.multi_reduction <maximumf>, %57, %cst_24 [1] : vector<16x16xf32> to vector<16xf32>
    %59 = vector.shape_cast %58 : vector<16xf32> to vector<16x1xf32>
    %60 = vector.broadcast %59 : vector<16x1xf32> to vector<16x16xf32>
    %61 = arith.subf %57, %60 : vector<16x16xf32>
    %62 = math.exp %61 : vector<16x16xf32>
    %cst_25 = arith.constant dense<0.000000e+00> : vector<16xf32>
    %63 = vector.multi_reduction <add>, %62, %cst_25 [1] : vector<16x16xf32> to vector<16xf32>
    %64 = vector.shape_cast %63 : vector<16xf32> to vector<16x1xf32>
    %65 = tpu.reciprocal %64 {approx = true} : vector<16x1xf32> -> vector<16x1xf32>
    %66 = vector.broadcast %65 : vector<16x1xf32> to vector<16x16xf32>
    %67 = arith.mulf %62, %66 : vector<16x16xf32>
    %68 = arith.truncf %67 : vector<16x16xf32> to vector<16x16xbf16>
    %cst_26 = arith.constant dense<0.000000e+00> : vector<16x128xf32>
    %69 = tpu.matmul %68, %54, %cst_26 {dimension_numbers = #tpu.dot_dimension_numbers<[1], [0], [0], [1], [0, 0, 1, 1], [], []>} : vector<16x16xbf16>, vector<16x128xbf16>, vector<16x128xf32> -> vector<16x128xf32>
    %70 = arith.truncf %69 : vector<16x128xf32> to vector<16x128xbf16>
    %c0_27 = arith.constant 0 : index
    %c128 = arith.constant 128 : index
    %c0_28 = arith.constant 0 : index
    %71 = vector.load %arg6[%c0_27, %c128, %c0_28] : memref<1x256x256xbf16, #tpu.memory_space<vmem>>, vector<1x128x256xbf16>
    %72 = vector.shape_cast %71 : vector<1x128x256xbf16> to vector<128x256xbf16>
    %cst_29 = arith.constant dense<0.000000e+00> : vector<16x256xf32>
    %73 = tpu.matmul %70, %72, %cst_29 {dimension_numbers = #tpu.dot_dimension_numbers<[1], [0], [0], [1], [0, 0, 1, 1], [], []>} : vector<16x128xbf16>, vector<128x256xbf16>, vector<16x256xf32> -> vector<16x256xf32>
    %74 = arith.addf %48, %73 : vector<16x256xf32>
    %c0_30 = arith.constant 0 : index
    %c0_31 = arith.constant 0 : index
    %c0_32 = arith.constant 0 : index
    %75 = vector.load %arg7[%c0_30, %c0_31, %c0_32] : memref<1x1x256xf32, #tpu.memory_space<vmem>>, vector<1x1x256xf32>
    %76 = vector.shape_cast %75 : vector<1x1x256xf32> to vector<1x256xf32>
    %77 = vector.broadcast %76 : vector<1x256xf32> to vector<16x256xf32>
    %78 = arith.addf %74, %77 : vector<16x256xf32>
    %79 = arith.addf %4, %78 : vector<16x256xf32>
    %c0_33 = arith.constant 0 : index
    %c0_34 = arith.constant 0 : index
    %c0_35 = arith.constant 0 : index
    %80 = vector.load %arg8[%c0_33, %c0_34, %c0_35] : memref<1x1x256xf32, #tpu.memory_space<vmem>>, vector<1x1x256xf32>
    %81 = vector.shape_cast %80 : vector<1x1x256xf32> to vector<1x256xf32>
    %c0_36 = arith.constant 0 : index
    %c0_37 = arith.constant 0 : index
    %c0_38 = arith.constant 0 : index
    %82 = vector.load %arg9[%c0_36, %c0_37, %c0_38] : memref<1x1x256xf32, #tpu.memory_space<vmem>>, vector<1x1x256xf32>
    %83 = vector.shape_cast %82 : vector<1x1x256xf32> to vector<1x256xf32>
    %cst_39 = arith.constant dense<0.000000e+00> : vector<16xf32>
    %84 = vector.multi_reduction <add>, %79, %cst_39 [1] : vector<16x256xf32> to vector<16xf32>
    %85 = vector.shape_cast %84 : vector<16xf32> to vector<16x1xf32>
    %cst_40 = arith.constant 2.560000e+02 : f32
    %86 = vector.broadcast %cst_40 : f32 to vector<16x1xf32>
    %87 = arith.divf %85, %86 : vector<16x1xf32>
    %88 = vector.broadcast %87 : vector<16x1xf32> to vector<16x256xf32>
    %89 = arith.subf %79, %88 : vector<16x256xf32>
    %90 = arith.mulf %89, %89 : vector<16x256xf32>
    %cst_41 = arith.constant dense<0.000000e+00> : vector<16xf32>
    %91 = vector.multi_reduction <add>, %90, %cst_41 [1] : vector<16x256xf32> to vector<16xf32>
    %92 = vector.shape_cast %91 : vector<16xf32> to vector<16x1xf32>
    %cst_42 = arith.constant 2.560000e+02 : f32
    %93 = vector.broadcast %cst_42 : f32 to vector<16x1xf32>
    %94 = arith.divf %92, %93 : vector<16x1xf32>
    %95 = vector.broadcast %87 : vector<16x1xf32> to vector<16x256xf32>
    %96 = arith.subf %79, %95 : vector<16x256xf32>
    %cst_43 = arith.constant 9.99999996E-13 : f32
    %97 = vector.broadcast %cst_43 : f32 to vector<16x1xf32>
    %98 = arith.addf %94, %97 : vector<16x1xf32>
    %99 = math.rsqrt %98 : vector<16x1xf32>
    %100 = vector.broadcast %99 : vector<16x1xf32> to vector<16x256xf32>
    %101 = arith.mulf %96, %100 : vector<16x256xf32>
    %102 = vector.broadcast %81 : vector<1x256xf32> to vector<16x256xf32>
    %103 = arith.mulf %101, %102 : vector<16x256xf32>
    %104 = vector.broadcast %83 : vector<1x256xf32> to vector<16x256xf32>
    %105 = arith.addf %103, %104 : vector<16x256xf32>
    %106 = arith.truncf %105 : vector<16x256xf32> to vector<16x256xbf16>
    %c0_44 = arith.constant 0 : index
    %c0_45 = arith.constant 0 : index
    %c0_46 = arith.constant 0 : index
    %107 = vector.load %arg10[%c0_44, %c0_45, %c0_46] : memref<1x256x512xbf16, #tpu.memory_space<vmem>>, vector<1x256x512xbf16>
    %108 = vector.shape_cast %107 : vector<1x256x512xbf16> to vector<256x512xbf16>
    %cst_47 = arith.constant dense<0.000000e+00> : vector<16x512xf32>
    %109 = tpu.matmul %106, %108, %cst_47 {dimension_numbers = #tpu.dot_dimension_numbers<[1], [0], [0], [1], [0, 0, 1, 1], [], []>} : vector<16x256xbf16>, vector<256x512xbf16>, vector<16x512xf32> -> vector<16x512xf32>
    %c0_48 = arith.constant 0 : index
    %c0_49 = arith.constant 0 : index
    %c0_50 = arith.constant 0 : index
    %110 = vector.load %arg11[%c0_48, %c0_49, %c0_50] : memref<1x1x512xf32, #tpu.memory_space<vmem>>, vector<1x1x512xf32>
    %111 = vector.shape_cast %110 : vector<1x1x512xf32> to vector<1x512xf32>
    %112 = vector.broadcast %111 : vector<1x512xf32> to vector<16x512xf32>
    %113 = arith.addf %109, %112 : vector<16x512xf32>
    %114 = arith.mulf %113, %113 : vector<16x512xf32>
    %115 = arith.mulf %113, %114 : vector<16x512xf32>
    %cst_51 = arith.constant 4.471500e-02 : f32
    %116 = vector.broadcast %cst_51 : f32 to vector<16x512xf32>
    %117 = arith.mulf %116, %115 : vector<16x512xf32>
    %118 = arith.addf %113, %117 : vector<16x512xf32>
    %cst_52 = arith.constant 0.797884583 : f32
    %119 = vector.broadcast %cst_52 : f32 to vector<16x512xf32>
    %120 = arith.mulf %119, %118 : vector<16x512xf32>
    %121 = math.tanh %120 : vector<16x512xf32>
    %cst_53 = arith.constant 1.000000e+00 : f32
    %122 = vector.broadcast %cst_53 : f32 to vector<16x512xf32>
    %123 = arith.addf %122, %121 : vector<16x512xf32>
    %cst_54 = arith.constant 5.000000e-01 : f32
    %124 = vector.broadcast %cst_54 : f32 to vector<16x512xf32>
    %125 = arith.mulf %124, %123 : vector<16x512xf32>
    %126 = arith.mulf %113, %125 : vector<16x512xf32>
    %127 = arith.truncf %126 : vector<16x512xf32> to vector<16x512xbf16>
    %c0_55 = arith.constant 0 : index
    %c0_56 = arith.constant 0 : index
    %c0_57 = arith.constant 0 : index
    %128 = vector.load %arg12[%c0_55, %c0_56, %c0_57] : memref<1x512x256xbf16, #tpu.memory_space<vmem>>, vector<1x512x256xbf16>
    %129 = vector.shape_cast %128 : vector<1x512x256xbf16> to vector<512x256xbf16>
    %cst_58 = arith.constant dense<0.000000e+00> : vector<16x256xf32>
    %130 = tpu.matmul %127, %129, %cst_58 {dimension_numbers = #tpu.dot_dimension_numbers<[1], [0], [0], [1], [0, 0, 1, 1], [], []>} : vector<16x512xbf16>, vector<512x256xbf16>, vector<16x256xf32> -> vector<16x256xf32>
    %c0_59 = arith.constant 0 : index
    %c0_60 = arith.constant 0 : index
    %c0_61 = arith.constant 0 : index
    %131 = vector.load %arg13[%c0_59, %c0_60, %c0_61] : memref<1x1x256xf32, #tpu.memory_space<vmem>>, vector<1x1x256xf32>
    %132 = vector.shape_cast %131 : vector<1x1x256xf32> to vector<1x256xf32>
    %133 = vector.broadcast %132 : vector<1x256xf32> to vector<16x256xf32>
    %134 = arith.addf %130, %133 : vector<16x256xf32>
    %135 = arith.addf %105, %134 : vector<16x256xf32>
    %c0_62 = arith.constant 0 : index
    %c0_63 = arith.constant 0 : index
    %c0_64 = arith.constant 0 : index
    %136 = vector.load %arg14[%c0_62, %c0_63, %c0_64] : memref<1x1x256xf32, #tpu.memory_space<vmem>>, vector<1x1x256xf32>
    %137 = vector.shape_cast %136 : vector<1x1x256xf32> to vector<1x256xf32>
    %c0_65 = arith.constant 0 : index
    %c0_66 = arith.constant 0 : index
    %c0_67 = arith.constant 0 : index
    %138 = vector.load %arg15[%c0_65, %c0_66, %c0_67] : memref<1x1x256xf32, #tpu.memory_space<vmem>>, vector<1x1x256xf32>
    %139 = vector.shape_cast %138 : vector<1x1x256xf32> to vector<1x256xf32>
    %cst_68 = arith.constant dense<0.000000e+00> : vector<16xf32>
    %140 = vector.multi_reduction <add>, %135, %cst_68 [1] : vector<16x256xf32> to vector<16xf32>
    %141 = vector.shape_cast %140 : vector<16xf32> to vector<16x1xf32>
    %cst_69 = arith.constant 2.560000e+02 : f32
    %142 = vector.broadcast %cst_69 : f32 to vector<16x1xf32>
    %143 = arith.divf %141, %142 : vector<16x1xf32>
    %144 = vector.broadcast %143 : vector<16x1xf32> to vector<16x256xf32>
    %145 = arith.subf %135, %144 : vector<16x256xf32>
    %146 = arith.mulf %145, %145 : vector<16x256xf32>
    %cst_70 = arith.constant dense<0.000000e+00> : vector<16xf32>
    %147 = vector.multi_reduction <add>, %146, %cst_70 [1] : vector<16x256xf32> to vector<16xf32>
    %148 = vector.shape_cast %147 : vector<16xf32> to vector<16x1xf32>
    %cst_71 = arith.constant 2.560000e+02 : f32
    %149 = vector.broadcast %cst_71 : f32 to vector<16x1xf32>
    %150 = arith.divf %148, %149 : vector<16x1xf32>
    %151 = vector.broadcast %143 : vector<16x1xf32> to vector<16x256xf32>
    %152 = arith.subf %135, %151 : vector<16x256xf32>
    %cst_72 = arith.constant 9.99999996E-13 : f32
    %153 = vector.broadcast %cst_72 : f32 to vector<16x1xf32>
    %154 = arith.addf %150, %153 : vector<16x1xf32>
    %155 = math.rsqrt %154 : vector<16x1xf32>
    %156 = vector.broadcast %155 : vector<16x1xf32> to vector<16x256xf32>
    %157 = arith.mulf %152, %156 : vector<16x256xf32>
    %158 = vector.broadcast %137 : vector<1x256xf32> to vector<16x256xf32>
    %159 = arith.mulf %157, %158 : vector<16x256xf32>
    %160 = vector.broadcast %139 : vector<1x256xf32> to vector<16x256xf32>
    %161 = arith.addf %159, %160 : vector<16x256xf32>
    %c0_73 = arith.constant 0 : index
    %c0_74 = arith.constant 0 : index
    %c0_75 = arith.constant 0 : index
    %162 = vector.load %arg16[%c0_73, %c0_74, %c0_75] : memref<1x16x256xf32, #tpu.memory_space<vmem>>, vector<1x16x256xf32>
    %163 = vector.shape_cast %162 : vector<1x16x256xf32> to vector<16x256xf32>
    %164 = vector.shape_cast %161 : vector<16x256xf32> to vector<1x16x256xf32>
    tpu.vector_store %arg16[%c0_73, %c0_74, %c0_75], %164 {strides = array<i32>} : memref<1x16x256xf32, #tpu.memory_space<vmem>>, vector<1x16x256xf32>,
    return
  }
  func.func @transform_0(%arg0: i32, %arg1: i32) -> (i32, i32, i32) {
    %c0_i32 = arith.constant 0 : i32
    %c0_i32_0 = arith.constant 0 : i32
    %c0_i32_1 = arith.constant 0 : i32
    return %arg0, %c0_i32, %c0_i32_0 : i32, i32, i32
  }
  func.func @transform_1(%arg0: i32, %arg1: i32) -> (i32, i32, i32) {
    %c0_i32 = arith.constant 0 : i32
    %c0_i32_0 = arith.constant 0 : i32
    %c0_i32_1 = arith.constant 0 : i32
    return %arg0, %c0_i32, %c0_i32_0 : i32, i32, i32
  }
  func.func @transform_2(%arg0: i32, %arg1: i32) -> (i32, i32, i32) {
    %c0_i32 = arith.constant 0 : i32
    %c0_i32_0 = arith.constant 0 : i32
    %c0_i32_1 = arith.constant 0 : i32
    return %arg1, %c0_i32, %c0_i32_0 : i32, i32, i32
  }
  func.func @transform_3(%arg0: i32, %arg1: i32) -> (i32, i32, i32) {
    %c0_i32 = arith.constant 0 : i32
    %c0_i32_0 = arith.constant 0 : i32
    %c0_i32_1 = arith.constant 0 : i32
    return %arg1, %c0_i32, %c0_i32_0 : i32, i32, i32
  }
  func.func @transform_4(%arg0: i32, %arg1: i32) -> (i32, i32, i32) {
    %c0_i32 = arith.constant 0 : i32
    %c0_i32_0 = arith.constant 0 : i32
    %c0_i32_1 = arith.constant 0 : i32
    return %arg1, %c0_i32, %c0_i32_0 : i32, i32, i32
  }
  func.func @transform_5(%arg0: i32, %arg1: i32) -> (i32, i32, i32) {
    %c0_i32 = arith.constant 0 : i32
    %c0_i32_0 = arith.constant 0 : i32
    %c0_i32_1 = arith.constant 0 : i32
    return %arg1, %c0_i32, %c0_i32_0 : i32, i32, i32
  }
  func.func @transform_6(%arg0: i32, %arg1: i32) -> (i32, i32, i32) {
    %c0_i32 = arith.constant 0 : i32
    %c0_i32_0 = arith.constant 0 : i32
    %c0_i32_1 = arith.constant 0 : i32
    return %arg1, %c0_i32, %c0_i32_0 : i32, i32, i32
  }
  func.func @transform_7(%arg0: i32, %arg1: i32) -> (i32, i32, i32) {
    %c0_i32 = arith.constant 0 : i32
    %c0_i32_0 = arith.constant 0 : i32
    %c0_i32_1 = arith.constant 0 : i32
    return %arg1, %c0_i32, %c0_i32_0 : i32, i32, i32
  }
  func.func @transform_8(%arg0: i32, %arg1: i32) -> (i32, i32, i32) {
    %c0_i32 = arith.constant 0 : i32
    %c0_i32_0 = arith.constant 0 : i32
    %c0_i32_1 = arith.constant 0 : i32
    return %arg1, %c0_i32, %c0_i32_0 : i32, i32, i32
  }
  func.func @transform_9(%arg0: i32, %arg1: i32) -> (i32, i32, i32) {
    %c0_i32 = arith.constant 0 : i32
    %c0_i32_0 = arith.constant 0 : i32
    %c0_i32_1 = arith.constant 0 : i32
    return %arg1, %c0_i32, %c0_i32_0 : i32, i32, i32
  }
  func.func @transform_10(%arg0: i32, %arg1: i32) -> (i32, i32, i32) {
    %c0_i32 = arith.constant 0 : i32
    %c0_i32_0 = arith.constant 0 : i32
    %c0_i32_1 = arith.constant 0 : i32
    return %arg1, %c0_i32, %c0_i32_0 : i32, i32, i32
  }
  func.func @transform_11(%arg0: i32, %arg1: i32) -> (i32, i32, i32) {
    %c0_i32 = arith.constant 0 : i32
    %c0_i32_0 = arith.constant 0 : i32
    %c0_i32_1 = arith.constant 0 : i32
    return %arg1, %c0_i32, %c0_i32_0 : i32, i32, i32
  }
  func.func @transform_12(%arg0: i32, %arg1: i32) -> (i32, i32, i32) {
    %c0_i32 = arith.constant 0 : i32
    %c0_i32_0 = arith.constant 0 : i32
    %c0_i32_1 = arith.constant 0 : i32
    return %arg1, %c0_i32, %c0_i32_0 : i32, i32, i32
  }
  func.func @transform_13(%arg0: i32, %arg1: i32) -> (i32, i32, i32) {
    %c0_i32 = arith.constant 0 : i32
    %c0_i32_0 = arith.constant 0 : i32
    %c0_i32_1 = arith.constant 0 : i32
    return %arg1, %c0_i32, %c0_i32_0 : i32, i32, i32
  }
  func.func @transform_14(%arg0: i32, %arg1: i32) -> (i32, i32, i32) {
    %c0_i32 = arith.constant 0 : i32
    %c0_i32_0 = arith.constant 0 : i32
    %c0_i32_1 = arith.constant 0 : i32
    return %arg0, %c0_i32, %c0_i32_0 : i32, i32, i32
  }
}

</mosaic_0001>

<llo_original>
// kernel: tpu_custom_call.1
$region0: #{tpu_custom_call.1}
  #allocation0 [shape = 'u32[]', space=smem, size = 0x4, offset = 0x4, fixed_abs, tag = 'smem constant byte address 0x4 - core index']
  #allocation1 [shape = 'u32[72,128]{1,0:T(1,128)}', space=vmem, size = 0x9000, scoped, tag = 'internal scratch']
  %s0 = inlined_call_operand.hbm [shape: bf16[2,16,256], index: 0, kind: input, shape index: {}]
  %s1 = inlined_call_operand.hbm [shape: f32[2,1,16], index: 1, kind: input, shape index: {}]
  %s2 = inlined_call_operand.hbm [shape: bf16[2,256,768], index: 2, kind: input, shape index: {}]
  %s3 = inlined_call_operand.hbm [shape: f32[2,1,768], index: 3, kind: input, shape index: {}]
  %s4 = inlined_call_operand.hbm [shape: bf16[2,256,256], index: 4, kind: input, shape index: {}]
  %s5 = inlined_call_operand.hbm [shape: f32[2,1,256], index: 5, kind: input, shape index: {}]
  %s6 = inlined_call_operand.hbm [shape: f32[2,1,256], index: 6, kind: input, shape index: {}]
  %s7 = inlined_call_operand.hbm [shape: f32[2,1,256], index: 7, kind: input, shape index: {}]
  %s8 = inlined_call_operand.hbm [shape: bf16[2,256,512], index: 8, kind: input, shape index: {}]
  %s9 = inlined_call_operand.vmem [shape: f32[2,1,512], index: 9, kind: input, shape index: {}]
  %s10 = inlined_call_operand.hbm [shape: bf16[2,512,256], index: 10, kind: input, shape index: {}]
  %s11 = inlined_call_operand.hbm [shape: f32[2,1,256], index: 11, kind: input, shape index: {}]
  %s12 = inlined_call_operand.hbm [shape: f32[2,1,256], index: 12, kind: input, shape index: {}]
  %s13 = inlined_call_operand.vmem [shape: f32[2,1,256], index: 13, kind: input, shape index: {}]
  %s14 = inlined_call_operand.hbm [shape: f32[2,16,256], index: 14, kind: output, shape index: {}]
  %s15 = sld [smem:[#allocation0]]
  $region141: #{tpu_custom_call.1} parent=0
    _
  %s17 = ssub.s32 1, %s15
  %s18 = scalar_select 0, %s17, %s15
  $region1: #{tpu_custom_call.1} parent=0
    #allocation2 [shape = 'u8[16384]{0}', space=vmem, size = 0x4000, scoped, tag = 'input window, operand 0']
    #allocation3 [shape = 's32[2]{0}', space=sflag, size = 0x8, scoped, tag = 'scoped memory for tpu_custom_call.1']
    #allocation4 [shape = 's32[2]{0}', space=sflag, size = 0x8, scoped, tag = 'scoped memory for tpu_custom_call.1']
    #allocation5 [shape = 'u8[1024]{0}', space=vmem, size = 0x400, scoped, tag = 'input window, operand 1']
    #allocation6 [shape = 's32[2]{0}', space=sflag, size = 0x8, scoped, tag = 'scoped memory for tpu_custom_call.1']
    #allocation7 [shape = 'u8[786432]{0}', space=vmem, size = 0xc0000, scoped, tag = 'input window, operand 2']
    #allocation8 [shape = 'u8[6144]{0}', space=vmem, size = 0x1800, scoped, tag = 'input window, operand 3']
    #allocation9 [shape = 's32[2]{0}', space=sflag, size = 0x8, scoped, tag = 'scoped memory for tpu_custom_call.1']
    #allocation10 [shape = 'u8[262144]{0}', space=vmem, size = 0x40000, scoped, tag = 'input window, operand 4']
    #allocation11 [shape = 'u8[2048]{0}', space=vmem, size = 0x800, scoped, tag = 'input window, operand 5']
    #allocation12 [shape = 's32[2]{0}', space=sflag, size = 0x8, scoped, tag = 'scoped memory for tpu_custom_call.1']
    #allocation13 [shape = 'u8[2048]{0}', space=vmem, size = 0x800, scoped, tag = 'input window, operand 6']
    #allocation14 [shape = 'u8[2048]{0}', space=vmem, size = 0x800, scoped, tag = 'input window, operand 7']
    #allocation15 [shape = 's32[2]{0}', space=sflag, size = 0x8, scoped, tag = 'scoped memory for tpu_custom_call.1']
    #allocation16 [shape = 'u8[524288]{0}', space=vmem, size = 0x80000, scoped, tag = 'input window, operand 8']
    #allocation17 [shape = 'u8[524288]{0}', space=vmem, size = 0x80000, scoped, tag = 'input window, operand 10']
    #allocation18 [shape = 's32[2]{0}', space=sflag, size = 0x8, scoped, tag = 'scoped memory for tpu_custom_call.1']
    #allocation19 [shape = 'u8[2048]{0}', space=vmem, size = 0x800, scoped, tag = 'input window, operand 11']
    #allocation20 [shape = 'u8[2048]{0}', space=vmem, size = 0x800, scoped, tag = 'input window, operand 12']
    #allocation21 [shape = 's32[2]{0}', space=sflag, size = 0x8, scoped, tag = 'scoped memory for tpu_custom_call.1']
    #allocation22 [shape = 'u8[32768]{0}', space=vmem, size = 0x8000, scoped, tag = 'output window, operand 0']
    %19 = vsyncpa [#allocation3], 0
    %s20 = scalar_lea.sflag [#allocation3], 1
    %21 = vsyncpa %s20, 0
    %22 = vsyncpa [#allocation6], 0
    %s23 = scalar_lea.sflag [#allocation6], 1
    %24 = vsyncpa %s23, 0
    %25 = vsyncpa [#allocation9], 0
    %s26 = scalar_lea.sflag [#allocation9], 1
    %27 = vsyncpa %s26, 0
    %28 = vsyncpa [#allocation12], 0
    %s29 = scalar_lea.sflag [#allocation12], 1
    %30 = vsyncpa %s29, 0
    %31 = vsyncpa [#allocation15], 0
    %s32 = scalar_lea.sflag [#allocation15], 1
    %33 = vsyncpa %s32, 0
    %34 = vsyncpa [#allocation18], 0
    %s35 = scalar_lea.sflag [#allocation18], 1
    %36 = vsyncpa %s35, 0
    %37 = vsyncpa [#allocation21], 0
    %s38 = scalar_lea.sflag [#allocation21], 1
    %39 = vsyncpa %s38, 0
    %40 = vsyncpa [#allocation4], 0
    %s41 = scalar_lea.sflag [#allocation4], 1
    %42 = vsyncpa %s41, 0
    loop: start=0, step=1, limit=6
    $region2: #{tpu_custom_call.1} parent=1 // loop_pre_header
      _
    $region3: #{tpu_custom_call.1} parent=1 // loop_header
      %s44 = sphi 0, %s48
      %p45 = scmp.ge.s32.totalorder %s44, 6
      %s51 = sphi 0, %s63
      %s52 = sphi 0, %s59
      %s53 = sphi 0, %s51
      %s54 = sphi 0, %s52
      %s55 = sphi 0, %s53
      %s56 = sphi 0, %s54
      %s66 = sphi 0, %s68
      %s69 = sphi 0, %s66
      %s70 = sphi 0, %s69
      %s86 = sphi 0, %s70
      %s92 = sphi 0, %s94
      %s95 = sphi 0, %s92
      %s96 = sphi 0, %s95
      %s112 = sphi 0, %s96
      %s118 = sphi 0, %s120
      %s121 = sphi 0, %s118
      %s122 = sphi 0, %s121
      %s138 = sphi 0, %s122
      %s144 = sphi 0, %s146
      %s147 = sphi 0, %s144
      %s148 = sphi 0, %s147
      %s164 = sphi 0, %s148
      %s170 = sphi 0, %s172
      %s173 = sphi 0, %s170
      %s174 = sphi 0, %s173
      %s190 = sphi 0, %s174
      %s196 = sphi 0, %s198
      %s199 = sphi 0, %s196
      %s200 = sphi 0, %s199
      %s216 = sphi 0, %s200
      %s222 = sphi 0, %s224
      %s225 = sphi 0, %s222
      %s226 = sphi 0, %s225
      %s242 = sphi 0, %s226
      %s248 = sphi 0, %s250
      %s251 = sphi 0, %s248
      %s252 = sphi 0, %s251
      %s268 = sphi 0, %s252
      %s274 = sphi 0, %s276
      %s277 = sphi 0, %s274
      %s278 = sphi 0, %s277
      %s294 = sphi 0, %s278
      %s300 = sphi 0, %s302
      %s303 = sphi 0, %s300
      %s304 = sphi 0, %s303
      %s320 = sphi 0, %s304
      %s326 = sphi 0, %s328
      %s329 = sphi 0, %s326
      %s330 = sphi 0, %s329
      %s346 = sphi 0, %s330
      %s352 = sphi 0, %s354
      %s355 = sphi 0, %s352
      %s356 = sphi 0, %s355
      %s372 = sphi 0, %s356
      %s378 = sphi 0, %s380
      %s381 = sphi 0, %s378
      %s382 = sphi 0, %s381
      %s398 = sphi 0, %s382
      %s404 = sphi 0, %s406
      %s407 = sphi 0, %s404
      %s408 = sphi 0, %s407
      %s424 = sphi 0, %s408
      %s430 = sphi 0, %s432
      %s433 = sphi 0, %s430
      %s434 = sphi 0, %s433
      %s450 = sphi 0, %s434
    $region4: #{tpu_custom_call.1} parent=1 // loop_header_branch
      %47 = sbr.rel (%p45) target = $region8
    $region5: #{tpu_custom_call.1} parent=1 // loop_body
      %s49 = ssub.s32 %s44, 1
      %s50 = ssub.s32 %s44, 2
      %s57 = sadd.s32 1, %s52
      %p58 = scmp.ge.s32.totalorder %s57, 2
      %s59 = scalar_select %p58, 0, %s57
      %s60 = sadd.s32 1, %s51
      %s61 = scalar_select %p58, %s60, %s51
      %p62 = scmp.ge.s32.totalorder %s61, 2
      %s63 = scalar_select %p62, 0, %s61
      %s64 = ssub.s32 %s51, %s63
      %p65 = scmp.eq.s32.totalorder %s64, 0
      %s67 = sadd.s32 %s66, 1
      %s68 = scalar_select %p65, %s66, %s67
      %p71 = pneg %p65
      %p72 = scmp.eq.s32.totalorder %s44, 3
      %p73 = por %p71, %p72
      %p74 = scmp.ne.s32.totalorder %s66, %s69
      %p75 = scmp.eq.s32.totalorder %s44, 0
      %p76 = por %p74, %p75
      %p77 = scmp.ne.s32.totalorder %s66, %s69
      %p78 = scmp.eq.s32.totalorder %s49, 3
      %p79 = por %p77, %p78
      %p80 = scmp.ne.s32.totalorder %s69, %s70
      %p81 = scmp.eq.s32.totalorder %s49, 0
      %p82 = por %p80, %p81
      %p83 = scmp.ne.s32.totalorder %s69, %s70
      %p84 = scmp.eq.s32.totalorder %s50, 3
      %p85 = por %p83, %p84
      %p87 = scmp.ne.s32.totalorder %s70, %s86
      %p88 = scmp.eq.s32.totalorder %s50, 0
      %p89 = por %p87, %p88
      %s90 = ssub.s32 %s51, %s63
      %p91 = scmp.eq.s32.totalorder %s90, 0
      %s93 = sadd.s32 %s92, 1
      %s94 = scalar_select %p91, %s92, %s93
      %p97 = pneg %p91
      %p98 = scmp.eq.s32.totalorder %s44, 3
      %p99 = por %p97, %p98
      %p100 = scmp.ne.s32.totalorder %s92, %s95
      %p101 = scmp.eq.s32.totalorder %s44, 0
      %p102 = por %p100, %p101
      %p103 = scmp.ne.s32.totalorder %s92, %s95
      %p104 = scmp.eq.s32.totalorder %s49, 3
      %p105 = por %p103, %p104
      %p106 = scmp.ne.s32.totalorder %s95, %s96
      %p107 = scmp.eq.s32.totalorder %s49, 0
      %p108 = por %p106, %p107
      %p109 = scmp.ne.s32.totalorder %s95, %s96
      %p110 = scmp.eq.s32.totalorder %s50, 3
      %p111 = por %p109, %p110
      %p113 = scmp.ne.s32.totalorder %s96, %s112
      %p114 = scmp.eq.s32.totalorder %s50, 0
      %p115 = por %p113, %p114
      %s116 = ssub.s32 %s52, %s59
      %p117 = scmp.eq.s32.totalorder %s116, 0
      %s119 = sadd.s32 %s118, 1
      %s120 = scalar_select %p117, %s118, %s119
      %p123 = pneg %p117
      %p124 = scmp.eq.s32.totalorder %s44, 3
      %p125 = por %p123, %p124
      %p126 = scmp.ne.s32.totalorder %s118, %s121
      %p127 = scmp.eq.s32.totalorder %s44, 0
      %p128 = por %p126, %p127
      %p129 = scmp.ne.s32.totalorder %s118, %s121
      %p130 = scmp.eq.s32.totalorder %s49, 3
      %p131 = por %p129, %p130
      %p132 = scmp.ne.s32.totalorder %s121, %s122
      %p133 = scmp.eq.s32.totalorder %s49, 0
      %p134 = por %p132, %p133
      %p135 = scmp.ne.s32.totalorder %s121, %s122
      %p136 = scmp.eq.s32.totalorder %s50, 3
      %p137 = por %p135, %p136
      %p139 = scmp.ne.s32.totalorder %s122, %s138
      %p140 = scmp.eq.s32.totalorder %s50, 0
      %p141 = por %p139, %p140
      %s142 = ssub.s32 %s52, %s59
      %p143 = scmp.eq.s32.totalorder %s142, 0
      %s145 = sadd.s32 %s144, 1
      %s146 = scalar_select %p143, %s144, %s145
      %p149 = pneg %p143
      %p150 = scmp.eq.s32.totalorder %s44, 3
      %p151 = por %p149, %p150
      %p152 = scmp.ne.s32.totalorder %s144, %s147
      %p153 = scmp.eq.s32.totalorder %s44, 0
      %p154 = por %p152, %p153
      %p155 = scmp.ne.s32.totalorder %s144, %s147
      %p156 = scmp.eq.s32.totalorder %s49, 3
      %p157 = por %p155, %p156
      %p158 = scmp.ne.s32.totalorder %s147, %s148
      %p159 = scmp.eq.s32.totalorder %s49, 0
      %p160 = por %p158, %p159
      %p161 = scmp.ne.s32.totalorder %s147, %s148
      %p162 = scmp.eq.s32.totalorder %s50, 3
      %p163 = por %p161, %p162
      %p165 = scmp.ne.s32.totalorder %s148, %s164
      %p166 = scmp.eq.s32.totalorder %s50, 0
      %p167 = por %p165, %p166
      %s168 = ssub.s32 %s52, %s59
      %p169 = scmp.eq.s32.totalorder %s168, 0
      %s171 = sadd.s32 %s170, 1
      %s172 = scalar_select %p169, %s170, %s171
      %p175 = pneg %p169
      %p176 = scmp.eq.s32.totalorder %s44, 3
      %p177 = por %p175, %p176
      %p178 = scmp.ne.s32.totalorder %s170, %s173
      %p179 = scmp.eq.s32.totalorder %s44, 0
      %p180 = por %p178, %p179
      %p181 = scmp.ne.s32.totalorder %s170, %s173
      %p182 = scmp.eq.s32.totalorder %s49, 3
      %p183 = por %p181, %p182
      %p184 = scmp.ne.s32.totalorder %s173, %s174
      %p185 = scmp.eq.s32.totalorder %s49, 0
      %p186 = por %p184, %p185
      %p187 = scmp.ne.s32.totalorder %s173, %s174
      %p188 = scmp.eq.s32.totalorder %s50, 3
      %p189 = por %p187, %p188
      %p191 = scmp.ne.s32.totalorder %s174, %s190
      %p192 = scmp.eq.s32.totalorder %s50, 0
      %p193 = por %p191, %p192
      %s194 = ssub.s32 %s52, %s59
      %p195 = scmp.eq.s32.totalorder %s194, 0
      %s197 = sadd.s32 %s196, 1
      %s198 = scalar_select %p195, %s196, %s197
      %p201 = pneg %p195
      %p202 = scmp.eq.s32.totalorder %s44, 3
      %p203 = por %p201, %p202
      %p204 = scmp.ne.s32.totalorder %s196, %s199
      %p205 = scmp.eq.s32.totalorder %s44, 0
      %p206 = por %p204, %p205
      %p207 = scmp.ne.s32.totalorder %s196, %s199
      %p208 = scmp.eq.s32.totalorder %s49, 3
      %p209 = por %p207, %p208
      %p210 = scmp.ne.s32.totalorder %s199, %s200
      %p211 = scmp.eq.s32.totalorder %s49, 0
      %p212 = por %p210, %p211
      %p213 = scmp.ne.s32.totalorder %s199, %s200
      %p214 = scmp.eq.s32.totalorder %s50, 3
      %p215 = por %p213, %p214
      %p217 = scmp.ne.s32.totalorder %s200, %s216
      %p218 = scmp.eq.s32.totalorder %s50, 0
      %p219 = por %p217, %p218
      %s220 = ssub.s32 %s52, %s59
      %p221 = scmp.eq.s32.totalorder %s220, 0
      %s223 = sadd.s32 %s222, 1
      %s224 = scalar_select %p221, %s222, %s223
      %p227 = pneg %p221
      %p228 = scmp.eq.s32.totalorder %s44, 3
      %p229 = por %p227, %p228
      %p230 = scmp.ne.s32.totalorder %s222, %s225
      %p231 = scmp.eq.s32.totalorder %s44, 0
      %p232 = por %p230, %p231
      %p233 = scmp.ne.s32.totalorder %s222, %s225
      %p234 = scmp.eq.s32.totalorder %s49, 3
      %p235 = por %p233, %p234
      %p236 = scmp.ne.s32.totalorder %s225, %s226
      %p237 = scmp.eq.s32.totalorder %s49, 0
      %p238 = por %p236, %p237
      %p239 = scmp.ne.s32.totalorder %s225, %s226
      %p240 = scmp.eq.s32.totalorder %s50, 3
      %p241 = por %p239, %p240
      %p243 = scmp.ne.s32.totalorder %s226, %s242
      %p244 = scmp.eq.s32.totalorder %s50, 0
      %p245 = por %p243, %p244
      %s246 = ssub.s32 %s52, %s59
      %p247 = scmp.eq.s32.totalorder %s246, 0
      %s249 = sadd.s32 %s248, 1
      %s250 = scalar_select %p247, %s248, %s249
      %p253 = pneg %p247
      %p254 = scmp.eq.s32.totalorder %s44, 3
      %p255 = por %p253, %p254
      %p256 = scmp.ne.s32.totalorder %s248, %s251
      %p257 = scmp.eq.s32.totalorder %s44, 0
      %p258 = por %p256, %p257
      %p259 = scmp.ne.s32.totalorder %s248, %s251
      %p260 = scmp.eq.s32.totalorder %s49, 3
      %p261 = por %p259, %p260
      %p262 = scmp.ne.s32.totalorder %s251, %s252
      %p263 = scmp.eq.s32.totalorder %s49, 0
      %p264 = por %p262, %p263
      %p265 = scmp.ne.s32.totalorder %s251, %s252
      %p266 = scmp.eq.s32.totalorder %s50, 3
      %p267 = por %p265, %p266
      %p269 = scmp.ne.s32.totalorder %s252, %s268
      %p270 = scmp.eq.s32.totalorder %s50, 0
      %p271 = por %p269, %p270
      %s272 = ssub.s32 %s52, %s59
      %p273 = scmp.eq.s32.totalorder %s272, 0
      %s275 = sadd.s32 %s274, 1
      %s276 = scalar_select %p273, %s274, %s275
      %p279 = pneg %p273
      %p280 = scmp.eq.s32.totalorder %s44, 3
      %p281 = por %p279, %p280
      %p282 = scmp.ne.s32.totalorder %s274, %s277
      %p283 = scmp.eq.s32.totalorder %s44, 0
      %p284 = por %p282, %p283
      %p285 = scmp.ne.s32.totalorder %s274, %s277
      %p286 = scmp.eq.s32.totalorder %s49, 3
      %p287 = por %p285, %p286
      %p288 = scmp.ne.s32.totalorder %s277, %s278
      %p289 = scmp.eq.s32.totalorder %s49, 0
      %p290 = por %p288, %p289
      %p291 = scmp.ne.s32.totalorder %s277, %s278
      %p292 = scmp.eq.s32.totalorder %s50, 3
      %p293 = por %p291, %p292
      %p295 = scmp.ne.s32.totalorder %s278, %s294
      %p296 = scmp.eq.s32.totalorder %s50, 0
      %p297 = por %p295, %p296
      %s298 = ssub.s32 %s52, %s59
      %p299 = scmp.eq.s32.totalorder %s298, 0
      %s301 = sadd.s32 %s300, 1
      %s302 = scalar_select %p299, %s300, %s301
      %p305 = pneg %p299
      %p306 = scmp.eq.s32.totalorder %s44, 3
      %p307 = por %p305, %p306
      %p308 = scmp.ne.s32.totalorder %s300, %s303
      %p309 = scmp.eq.s32.totalorder %s44, 0
      %p310 = por %p308, %p309
      %p311 = scmp.ne.s32.totalorder %s300, %s303
      %p312 = scmp.eq.s32.totalorder %s49, 3
      %p313 = por %p311, %p312
      %p314 = scmp.ne.s32.totalorder %s303, %s304
      %p315 = scmp.eq.s32.totalorder %s49, 0
      %p316 = por %p314, %p315
      %p317 = scmp.ne.s32.totalorder %s303, %s304
      %p318 = scmp.eq.s32.totalorder %s50, 3
      %p319 = por %p317, %p318
      %p321 = scmp.ne.s32.totalorder %s304, %s320
      %p322 = scmp.eq.s32.totalorder %s50, 0
      %p323 = por %p321, %p322
      %s324 = ssub.s32 %s52, %s59
      %p325 = scmp.eq.s32.totalorder %s324, 0
      %s327 = sadd.s32 %s326, 1
      %s328 = scalar_select %p325, %s326, %s327
      %p331 = pneg %p325
      %p332 = scmp.eq.s32.totalorder %s44, 3
      %p333 = por %p331, %p332
      %p334 = scmp.ne.s32.totalorder %s326, %s329
      %p335 = scmp.eq.s32.totalorder %s44, 0
      %p336 = por %p334, %p335
      %p337 = scmp.ne.s32.totalorder %s326, %s329
      %p338 = scmp.eq.s32.totalorder %s49, 3
      %p339 = por %p337, %p338
      %p340 = scmp.ne.s32.totalorder %s329, %s330
      %p341 = scmp.eq.s32.totalorder %s49, 0
      %p342 = por %p340, %p341
      %p343 = scmp.ne.s32.totalorder %s329, %s330
      %p344 = scmp.eq.s32.totalorder %s50, 3
      %p345 = por %p343, %p344
      %p347 = scmp.ne.s32.totalorder %s330, %s346
      %p348 = scmp.eq.s32.totalorder %s50, 0
      %p349 = por %p347, %p348
      %s350 = ssub.s32 %s52, %s59
      %p351 = scmp.eq.s32.totalorder %s350, 0
      %s353 = sadd.s32 %s352, 1
      %s354 = scalar_select %p351, %s352, %s353
      %p357 = pneg %p351
      %p358 = scmp.eq.s32.totalorder %s44, 3
      %p359 = por %p357, %p358
      %p360 = scmp.ne.s32.totalorder %s352, %s355
      %p361 = scmp.eq.s32.totalorder %s44, 0
      %p362 = por %p360, %p361
      %p363 = scmp.ne.s32.totalorder %s352, %s355
      %p364 = scmp.eq.s32.totalorder %s49, 3
      %p365 = por %p363, %p364
      %p366 = scmp.ne.s32.totalorder %s355, %s356
      %p367 = scmp.eq.s32.totalorder %s49, 0
      %p368 = por %p366, %p367
      %p369 = scmp.ne.s32.totalorder %s355, %s356
      %p370 = scmp.eq.s32.totalorder %s50, 3
      %p371 = por %p369, %p370
      %p373 = scmp.ne.s32.totalorder %s356, %s372
      %p374 = scmp.eq.s32.totalorder %s50, 0
      %p375 = por %p373, %p374
      %s376 = ssub.s32 %s52, %s59
      %p377 = scmp.eq.s32.totalorder %s376, 0
      %s379 = sadd.s32 %s378, 1
      %s380 = scalar_select %p377, %s378, %s379
      %p383 = pneg %p377
      %p384 = scmp.eq.s32.totalorder %s44, 3
      %p385 = por %p383, %p384
      %p386 = scmp.ne.s32.totalorder %s378, %s381
      %p387 = scmp.eq.s32.totalorder %s44, 0
      %p388 = por %p386, %p387
      %p389 = scmp.ne.s32.totalorder %s378, %s381
      %p390 = scmp.eq.s32.totalorder %s49, 3
      %p391 = por %p389, %p390
      %p392 = scmp.ne.s32.totalorder %s381, %s382
      %p393 = scmp.eq.s32.totalorder %s49, 0
      %p394 = por %p392, %p393
      %p395 = scmp.ne.s32.totalorder %s381, %s382
      %p396 = scmp.eq.s32.totalorder %s50, 3
      %p397 = por %p395, %p396
      %p399 = scmp.ne.s32.totalorder %s382, %s398
      %p400 = scmp.eq.s32.totalorder %s50, 0
      %p401 = por %p399, %p400
      %s402 = ssub.s32 %s52, %s59
      %p403 = scmp.eq.s32.totalorder %s402, 0
      %s405 = sadd.s32 %s404, 1
      %s406 = scalar_select %p403, %s404, %s405
      %p409 = pneg %p403
      %p410 = scmp.eq.s32.totalorder %s44, 3
      %p411 = por %p409, %p410
      %p412 = scmp.ne.s32.totalorder %s404, %s407
      %p413 = scmp.eq.s32.totalorder %s44, 0
      %p414 = por %p412, %p413
      %p415 = scmp.ne.s32.totalorder %s404, %s407
      %p416 = scmp.eq.s32.totalorder %s49, 3
      %p417 = por %p415, %p416
      %p418 = scmp.ne.s32.totalorder %s407, %s408
      %p419 = scmp.eq.s32.totalorder %s49, 0
      %p420 = por %p418, %p419
      %p421 = scmp.ne.s32.totalorder %s407, %s408
      %p422 = scmp.eq.s32.totalorder %s50, 3
      %p423 = por %p421, %p422
      %p425 = scmp.ne.s32.totalorder %s408, %s424
      %p426 = scmp.eq.s32.totalorder %s50, 0
      %p427 = por %p425, %p426
      %s428 = ssub.s32 %s51, %s63
      %p429 = scmp.eq.s32.totalorder %s428, 0
      %s431 = sadd.s32 %s430, 1
      %s432 = scalar_select %p429, %s430, %s431
      %p435 = pneg %p429
      %p436 = scmp.eq.s32.totalorder %s44, 3
      %p437 = por %p435, %p436
      %p438 = scmp.ne.s32.totalorder %s430, %s433
      %p439 = scmp.eq.s32.totalorder %s44, 0
      %p440 = por %p438, %p439
      %p441 = scmp.ne.s32.totalorder %s430, %s433
      %p442 = scmp.eq.s32.totalorder %s49, 3
      %p443 = por %p441, %p442
      %p444 = scmp.ne.s32.totalorder %s433, %s434
      %p445 = scmp.eq.s32.totalorder %s49, 0
      %p446 = por %p444, %p445
      %p447 = scmp.ne.s32.totalorder %s433, %s434
      %p448 = scmp.eq.s32.totalorder %s50, 3
      %p449 = por %p447, %p448
      %p451 = scmp.ne.s32.totalorder %s434, %s450
      %p452 = scmp.eq.s32.totalorder %s50, 0
      %p453 = por %p451, %p452
      %p454 = scmp.le.s32.totalorder 1, %s44
      %p455 = scmp.lt.s32.totalorder %s44, 5
      %p456 = pnand %p454, %p455
      %p457 = pneg %p456
      // Predicated region
      $region9: #{tpu_custom_call.1} parent=5 // pred_check
        _
      $region10: #{tpu_custom_call.1} parent=5 // pred_check_branch
        %459 = sbr.rel (%p456) target = $region12
      $region11: #{tpu_custom_call.1} parent=5 // pred_region
        %s460 = ssub.s32 %s44, 1
      $region12: #{tpu_custom_call.1} parent=5 // pred_fallthru
        _
      %p461 = scmp.lt.s32.totalorder %s44, 4
      // Predicated region
      $region13: #{tpu_custom_call.1} parent=5 // pred_check
        %p462 = pneg %p461
      $region14: #{tpu_custom_call.1} parent=5 // pred_check_branch
        %464 = sbr.rel (%p462) target = $region16
      $region15: #{tpu_custom_call.1} parent=5 // pred_region
        // Predicated region
        $region17: #{tpu_custom_call.1} parent=15 // pred_check
          %p465 = pneg %p76
        $region18: #{tpu_custom_call.1} parent=15 // pred_check_branch
          %467 = sbr.rel (%p465) target = $region20
        $region19: #{tpu_custom_call.1} parent=15 // pred_region
          %s468 = sand.u32 %s66, 1
          %s469 = scalar_lea.sflag [#allocation3], %s468
          %s470 = sand.u32 %s66, 1
          %s471 = smul.addr %s470, 16
          %s472 = scalar_lea.vmem [#allocation2], %s471
          %474 = vsyncadd %s469, 0
          %s475 = smul.addr %s51, 4
          %s476 = smul.addr %s475, 4
          %s477 = scalar_lea.hbm %s0, %s476
          %s478 = sshll.u32 %s477, 4
          %s479 = int_to_ptr.hbm [resolvable:$true] %s478
          %s480 = sshll.u32 %s472, 4
          %s481 = int_to_ptr.vmem [resolvable:$true] %s480
          %486 = dma.hbm_to_vmem [thread:$0]  %s479, 256, %s481, %s469, 128, 128, 8
        $region20: #{tpu_custom_call.1} parent=15 // pred_fallthru
          _
        // Predicated region
        $region21: #{tpu_custom_call.1} parent=15 // pred_check
          %p487 = pneg %p102
        $region22: #{tpu_custom_call.1} parent=15 // pred_check_branch
          %489 = sbr.rel (%p487) target = $region24
        $region23: #{tpu_custom_call.1} parent=15 // pred_region
          %s490 = sand.u32 %s44, 1
          %s491 = scalar_lea.sflag [#allocation6], %s490
          %s492 = sand.u32 %s92, 1
          %s493 = scalar_lea.vmem [#allocation5], %s492
          %495 = vsyncadd %s491, 0
          %s496 = scalar_lea.hbm %s1, %s51
          %s498 = sshll.u32 %s496, 4
          %s499 = int_to_ptr.hbm [resolvable:$true] %s498
          %s500 = sshll.u32 %s493, 4
          %s501 = int_to_ptr.vmem [resolvable:$true] %s500
          %503 = dma.hbm_to_vmem [thread:$0]  %s499, 16, %s501, %s491
        $region24: #{tpu_custom_call.1} parent=15 // pred_fallthru
          _
        // Predicated region
        $region25: #{tpu_custom_call.1} parent=15 // pred_check
          %p504 = pneg %p128
        $region26: #{tpu_custom_call.1} parent=15 // pred_check_branch
          %506 = sbr.rel (%p504) target = $region28
        $region27: #{tpu_custom_call.1} parent=15 // pred_region
          %s507 = sand.u32 %s44, 1
          %s508 = scalar_lea.sflag [#allocation6], %s507
          %s509 = sand.u32 %s118, 1
          %s510 = smul.addr %s509, 768
          %s511 = scalar_lea.vmem [#allocation7], %s510
          %513 = vsyncadd %s508, 0
          %s514 = smul.addr %s52, 192
          %s515 = smul.addr %s514, 4
          %s516 = scalar_lea.hbm %s2, %s515
          %s517 = sshll.u32 %s516, 4
          %s518 = int_to_ptr.hbm [resolvable:$true] %s517
          %s519 = sshll.u32 %s511, 4
          %s520 = int_to_ptr.vmem [resolvable:$true] %s519
          %525 = dma.hbm_to_vmem [thread:$0]  %s518, 12288, %s520, %s508, 384, 384, 24
        $region28: #{tpu_custom_call.1} parent=15 // pred_fallthru
          _
        // Predicated region
        $region29: #{tpu_custom_call.1} parent=15 // pred_check
          %p526 = pneg %p154
        $region30: #{tpu_custom_call.1} parent=15 // pred_check_branch
          %528 = sbr.rel (%p526) target = $region32
        $region31: #{tpu_custom_call.1} parent=15 // pred_region
          %s529 = sand.u32 %s44, 1
          %s530 = scalar_lea.sflag [#allocation9], %s529
          %s531 = sand.u32 %s144, 1
          %s532 = smul.addr %s531, 6
          %s533 = scalar_lea.vmem [#allocation8], %s532
          %535 = vsyncadd %s530, 0
          %s536 = smul.addr %s52, 6
          %s537 = scalar_lea.hbm %s3, %s536
          %s539 = sshll.u32 %s537, 4
          %s540 = int_to_ptr.hbm [resolvable:$true] %s539
          %s541 = sshll.u32 %s533, 4
          %s542 = int_to_ptr.vmem [resolvable:$true] %s541
          %544 = dma.hbm_to_vmem [thread:$0]  %s540, 96, %s542, %s530
        $region32: #{tpu_custom_call.1} parent=15 // pred_fallthru
          _
        // Predicated region
        $region33: #{tpu_custom_call.1} parent=15 // pred_check
          %p545 = pneg %p180
        $region34: #{tpu_custom_call.1} parent=15 // pred_check_branch
          %547 = sbr.rel (%p545) target = $region36
        $region35: #{tpu_custom_call.1} parent=15 // pred_region
          %s548 = sand.u32 %s44, 1
          %s549 = scalar_lea.sflag [#allocation9], %s548
          %s550 = sand.u32 %s170, 1
          %s551 = smul.addr %s550, 256
          %s552 = scalar_lea.vmem [#allocation10], %s551
          %554 = vsyncadd %s549, 0
          %s555 = smul.addr %s52, 64
          %s556 = smul.addr %s555, 4
          %s557 = scalar_lea.hbm %s4, %s556
          %s558 = sshll.u32 %s557, 4
          %s559 = int_to_ptr.hbm [resolvable:$true] %s558
          %s560 = sshll.u32 %s552, 4
          %s561 = int_to_ptr.vmem [resolvable:$true] %s560
          %566 = dma.hbm_to_vmem [thread:$0]  %s559, 4096, %s561, %s549, 128, 128, 8
        $region36: #{tpu_custom_call.1} parent=15 // pred_fallthru
          _
        // Predicated region
        $region37: #{tpu_custom_call.1} parent=15 // pred_check
          %p567 = pneg %p206
        $region38: #{tpu_custom_call.1} parent=15 // pred_check_branch
          %569 = sbr.rel (%p567) target = $region40
        $region39: #{tpu_custom_call.1} parent=15 // pred_region
          %s570 = sand.u32 %s44, 1
          %s571 = scalar_lea.sflag [#allocation12], %s570
          %s572 = sand.u32 %s196, 1
          %s573 = smul.addr %s572, 2
          %s574 = scalar_lea.vmem [#allocation11], %s573
          %576 = vsyncadd %s571, 0
          %s577 = smul.addr %s52, 2
          %s578 = scalar_lea.hbm %s5, %s577
          %s580 = sshll.u32 %s578, 4
          %s581 = int_to_ptr.hbm [resolvable:$true] %s580
          %s582 = sshll.u32 %s574, 4
          %s583 = int_to_ptr.vmem [resolvable:$true] %s582
          %585 = dma.hbm_to_vmem [thread:$0]  %s581, 32, %s583, %s571
        $region40: #{tpu_custom_call.1} parent=15 // pred_fallthru
          _
        // Predicated region
        $region41: #{tpu_custom_call.1} parent=15 // pred_check
          %p586 = pneg %p232
        $region42: #{tpu_custom_call.1} parent=15 // pred_check_branch
          %588 = sbr.rel (%p586) target = $region44
        $region43: #{tpu_custom_call.1} parent=15 // pred_region
          %s589 = sand.u32 %s44, 1
          %s590 = scalar_lea.sflag [#allocation12], %s589
          %s591 = sand.u32 %s222, 1
          %s592 = smul.addr %s591, 2
          %s593 = scalar_lea.vmem [#allocation13], %s592
          %595 = vsyncadd %s590, 0
          %s596 = smul.addr %s52, 2
          %s597 = scalar_lea.hbm %s6, %s596
          %s599 = sshll.u32 %s597, 4
          %s600 = int_to_ptr.hbm [resolvable:$true] %s599
          %s601 = sshll.u32 %s593, 4
          %s602 = int_to_ptr.vmem [resolvable:$true] %s601
          %604 = dma.hbm_to_vmem [thread:$0]  %s600, 32, %s602, %s590
        $region44: #{tpu_custom_call.1} parent=15 // pred_fallthru
          _
        // Predicated region
        $region45: #{tpu_custom_call.1} parent=15 // pred_check
          %p605 = pneg %p258
        $region46: #{tpu_custom_call.1} parent=15 // pred_check_branch
          %607 = sbr.rel (%p605) target = $region48
        $region47: #{tpu_custom_call.1} parent=15 // pred_region
          %s608 = sand.u32 %s44, 1
          %s609 = scalar_lea.sflag [#allocation15], %s608
          %s610 = sand.u32 %s248, 1
          %s611 = smul.addr %s610, 2
          %s612 = scalar_lea.vmem [#allocation14], %s611
          %614 = vsyncadd %s609, 0
          %s615 = smul.addr %s52, 2
          %s616 = scalar_lea.hbm %s7, %s615
          %s618 = sshll.u32 %s616, 4
          %s619 = int_to_ptr.hbm [resolvable:$true] %s618
          %s620 = sshll.u32 %s612, 4
          %s621 = int_to_ptr.vmem [resolvable:$true] %s620
          %623 = dma.hbm_to_vmem [thread:$0]  %s619, 32, %s621, %s609
        $region48: #{tpu_custom_call.1} parent=15 // pred_fallthru
          _
        // Predicated region
        $region49: #{tpu_custom_call.1} parent=15 // pred_check
          %p624 = pneg %p284
        $region50: #{tpu_custom_call.1} parent=15 // pred_check_branch
          %626 = sbr.rel (%p624) target = $region52
        $region51: #{tpu_custom_call.1} parent=15 // pred_region
          %s627 = sand.u32 %s44, 1
          %s628 = scalar_lea.sflag [#allocation15], %s627
          %s629 = sand.u32 %s274, 1
          %s630 = smul.addr %s629, 512
          %s631 = scalar_lea.vmem [#allocation16], %s630
          %633 = vsyncadd %s628, 0
          %s634 = smul.addr %s52, 128
          %s635 = smul.addr %s634, 4
          %s636 = scalar_lea.hbm %s8, %s635
          %s637 = sshll.u32 %s636, 4
          %s638 = int_to_ptr.hbm [resolvable:$true] %s637
          %s639 = sshll.u32 %s631, 4
          %s640 = int_to_ptr.vmem [resolvable:$true] %s639
          %645 = dma.hbm_to_vmem [thread:$0]  %s638, 8192, %s640, %s628, 256, 256, 16
        $region52: #{tpu_custom_call.1} parent=15 // pred_fallthru
          _
        // Predicated region
        $region53: #{tpu_custom_call.1} parent=15 // pred_check
          %p646 = pneg %p310
        $region54: #{tpu_custom_call.1} parent=15 // pred_check_branch
          %648 = sbr.rel (%p646) target = $region56
        $region55: #{tpu_custom_call.1} parent=15 // pred_region
          %p649 = scmp.lt.s32.totalorder %s52, 1
          %s650 = scalar_select %p649, %s52, 1
          %s651 = smul.addr %s650, 4
          %s652 = scalar_lea.vmem %s9, %s651
        $region56: #{tpu_custom_call.1} parent=15 // pred_fallthru
          _
        // Predicated region
        $region57: #{tpu_custom_call.1} parent=15 // pred_check
          %p653 = pneg %p336
        $region58: #{tpu_custom_call.1} parent=15 // pred_check_branch
          %655 = sbr.rel (%p653) target = $region60
        $region59: #{tpu_custom_call.1} parent=15 // pred_region
          %s656 = sand.u32 %s44, 1
          %s657 = scalar_lea.sflag [#allocation18], %s656
          %s658 = sand.u32 %s326, 1
          %s659 = smul.addr %s658, 512
          %s660 = scalar_lea.vmem [#allocation17], %s659
          %662 = vsyncadd %s657, 0
          %s663 = smul.addr %s52, 128
          %s664 = smul.addr %s663, 4
          %s665 = scalar_lea.hbm %s10, %s664
          %s666 = sshll.u32 %s665, 4
          %s667 = int_to_ptr.hbm [resolvable:$true] %s666
          %s668 = sshll.u32 %s660, 4
          %s669 = int_to_ptr.vmem [resolvable:$true] %s668
          %674 = dma.hbm_to_vmem [thread:$0]  %s667, 8192, %s669, %s657, 128, 128, 8
        $region60: #{tpu_custom_call.1} parent=15 // pred_fallthru
          _
        // Predicated region
        $region61: #{tpu_custom_call.1} parent=15 // pred_check
          %p675 = pneg %p362
        $region62: #{tpu_custom_call.1} parent=15 // pred_check_branch
          %677 = sbr.rel (%p675) target = $region64
        $region63: #{tpu_custom_call.1} parent=15 // pred_region
          %s678 = sand.u32 %s44, 1
          %s679 = scalar_lea.sflag [#allocation18], %s678
          %s680 = sand.u32 %s352, 1
          %s681 = smul.addr %s680, 2
          %s682 = scalar_lea.vmem [#allocation19], %s681
          %684 = vsyncadd %s679, 0
          %s685 = smul.addr %s52, 2
          %s686 = scalar_lea.hbm %s11, %s685
          %s688 = sshll.u32 %s686, 4
          %s689 = int_to_ptr.hbm [resolvable:$true] %s688
          %s690 = sshll.u32 %s682, 4
          %s691 = int_to_ptr.vmem [resolvable:$true] %s690
          %693 = dma.hbm_to_vmem [thread:$0]  %s689, 32, %s691, %s679
        $region64: #{tpu_custom_call.1} parent=15 // pred_fallthru
          _
        // Predicated region
        $region65: #{tpu_custom_call.1} parent=15 // pred_check
          %p694 = pneg %p388
        $region66: #{tpu_custom_call.1} parent=15 // pred_check_branch
          %696 = sbr.rel (%p694) target = $region68
        $region67: #{tpu_custom_call.1} parent=15 // pred_region
          %s697 = sand.u32 %s378, 1
          %s698 = scalar_lea.sflag [#allocation21], %s697
          %s699 = sand.u32 %s378, 1
          %s700 = smul.addr %s699, 2
          %s701 = scalar_lea.vmem [#allocation20], %s700
          %703 = vsyncadd %s698, 0
          %s704 = smul.addr %s52, 2
          %s705 = scalar_lea.hbm %s12, %s704
          %s707 = sshll.u32 %s705, 4
          %s708 = int_to_ptr.hbm [resolvable:$true] %s707
          %s709 = sshll.u32 %s701, 4
          %s710 = int_to_ptr.vmem [resolvable:$true] %s709
          %712 = dma.hbm_to_vmem [thread:$0]  %s708, 32, %s710, %s698
        $region68: #{tpu_custom_call.1} parent=15 // pred_fallthru
          _
        // Predicated region
        $region69: #{tpu_custom_call.1} parent=15 // pred_check
          %p713 = pneg %p414
        $region70: #{tpu_custom_call.1} parent=15 // pred_check_branch
          %715 = sbr.rel (%p713) target = $region72
        $region71: #{tpu_custom_call.1} parent=15 // pred_region
          %p716 = scmp.lt.s32.totalorder %s52, 1
          %s717 = scalar_select %p716, %s52, 1
          %s718 = smul.addr %s717, 2
          %s719 = scalar_lea.vmem %s13, %s718
        $region72: #{tpu_custom_call.1} parent=15 // pred_fallthru
          _
      $region16: #{tpu_custom_call.1} parent=5 // pred_fallthru
        _
      %p720 = scmp.le.s32.totalorder 1, %s44
      %p721 = scmp.lt.s32.totalorder %s44, 5
      %p722 = pnand %p720, %p721
      %p723 = pneg %p722
      // Predicated region
      $region73: #{tpu_custom_call.1} parent=5 // pred_check
        _
      $region74: #{tpu_custom_call.1} parent=5 // pred_check_branch
        %725 = sbr.rel (%p722) target = $region76
      $region75: #{tpu_custom_call.1} parent=5 // pred_region
        %s726 = ssub.s32 %s44, 1
        %s727 = sand.u32 %s69, 1
        %s728 = scalar_lea.sflag [#allocation3], %s727
        %s729 = sand.u32 %s69, 1
        %s730 = smul.addr %s729, 16
        %s731 = scalar_lea.vmem [#allocation2], %s730
        // Predicated region
        $region77: #{tpu_custom_call.1} parent=75 // pred_check
          %p732 = pneg %p82
        $region78: #{tpu_custom_call.1} parent=75 // pred_check_branch
          %734 = sbr.rel (%p732) target = $region80
        $region79: #{tpu_custom_call.1} parent=75 // pred_region
          %736 = dma.done %s728, 256
        $region80: #{tpu_custom_call.1} parent=75 // pred_fallthru
          _
        %s737 = sand.u32 %s49, 1
        %s738 = scalar_lea.sflag [#allocation6], %s737
        %s739 = sand.u32 %s95, 1
        %s740 = scalar_lea.vmem [#allocation5], %s739
        // Predicated region
        $region81: #{tpu_custom_call.1} parent=75 // pred_check
          %p741 = pneg %p108
        $region82: #{tpu_custom_call.1} parent=75 // pred_check_branch
          %743 = sbr.rel (%p741) target = $region84
        $region83: #{tpu_custom_call.1} parent=75 // pred_region
          %745 = dma.done %s738, 16
        $region84: #{tpu_custom_call.1} parent=75 // pred_fallthru
          _
        %s746 = sand.u32 %s49, 1
        %s747 = scalar_lea.sflag [#allocation6], %s746
        %s748 = sand.u32 %s121, 1
        %s749 = smul.addr %s748, 768
        %s750 = scalar_lea.vmem [#allocation7], %s749
        // Predicated region
        $region85: #{tpu_custom_call.1} parent=75 // pred_check
          %p751 = pneg %p134
        $region86: #{tpu_custom_call.1} parent=75 // pred_check_branch
          %753 = sbr.rel (%p751) target = $region88
        $region87: #{tpu_custom_call.1} parent=75 // pred_region
          %755 = dma.done %s747, 12288
        $region88: #{tpu_custom_call.1} parent=75 // pred_fallthru
          _
        %s756 = sand.u32 %s49, 1
        %s757 = scalar_lea.sflag [#allocation9], %s756
        %s758 = sand.u32 %s147, 1
        %s759 = smul.addr %s758, 6
        %s760 = scalar_lea.vmem [#allocation8], %s759
        // Predicated region
        $region89: #{tpu_custom_call.1} parent=75 // pred_check
          %p761 = pneg %p160
        $region90: #{tpu_custom_call.1} parent=75 // pred_check_branch
          %763 = sbr.rel (%p761) target = $region92
        $region91: #{tpu_custom_call.1} parent=75 // pred_region
          %765 = dma.done %s757, 96
        $region92: #{tpu_custom_call.1} parent=75 // pred_fallthru
          _
        %s766 = sand.u32 %s49, 1
        %s767 = scalar_lea.sflag [#allocation9], %s766
        %s768 = sand.u32 %s173, 1
        %s769 = smul.addr %s768, 256
        %s770 = scalar_lea.vmem [#allocation10], %s769
        // Predicated region
        $region93: #{tpu_custom_call.1} parent=75 // pred_check
          %p771 = pneg %p186
        $region94: #{tpu_custom_call.1} parent=75 // pred_check_branch
          %773 = sbr.rel (%p771) target = $region96
        $region95: #{tpu_custom_call.1} parent=75 // pred_region
          %775 = dma.done %s767, 4096
        $region96: #{tpu_custom_call.1} parent=75 // pred_fallthru
          _
        %s776 = sand.u32 %s49, 1
        %s777 = scalar_lea.sflag [#allocation12], %s776
        %s778 = sand.u32 %s199, 1
        %s779 = smul.addr %s778, 2
        %s780 = scalar_lea.vmem [#allocation11], %s779
        // Predicated region
        $region97: #{tpu_custom_call.1} parent=75 // pred_check
          %p781 = pneg %p212
        $region98: #{tpu_custom_call.1} parent=75 // pred_check_branch
          %783 = sbr.rel (%p781) target = $region100
        $region99: #{tpu_custom_call.1} parent=75 // pred_region
          %785 = dma.done %s777, 32
        $region100: #{tpu_custom_call.1} parent=75 // pred_fallthru
          _
        %s786 = sand.u32 %s49, 1
        %s787 = scalar_lea.sflag [#allocation12], %s786
        %s788 = sand.u32 %s225, 1
        %s789 = smul.addr %s788, 2
        %s790 = scalar_lea.vmem [#allocation13], %s789
        // Predicated region
        $region101: #{tpu_custom_call.1} parent=75 // pred_check
          %p791 = pneg %p238
        $region102: #{tpu_custom_call.1} parent=75 // pred_check_branch
          %793 = sbr.rel (%p791) target = $region104
        $region103: #{tpu_custom_call.1} parent=75 // pred_region
          %795 = dma.done %s787, 32
        $region104: #{tpu_custom_call.1} parent=75 // pred_fallthru
          _
        %s796 = sand.u32 %s49, 1
        %s797 = scalar_lea.sflag [#allocation15], %s796
        %s798 = sand.u32 %s251, 1
        %s799 = smul.addr %s798, 2
        %s800 = scalar_lea.vmem [#allocation14], %s799
        // Predicated region
        $region105: #{tpu_custom_call.1} parent=75 // pred_check
          %p801 = pneg %p264
        $region106: #{tpu_custom_call.1} parent=75 // pred_check_branch
          %803 = sbr.rel (%p801) target = $region108
        $region107: #{tpu_custom_call.1} parent=75 // pred_region
          %805 = dma.done %s797, 32
        $region108: #{tpu_custom_call.1} parent=75 // pred_fallthru
          _
        %s806 = sand.u32 %s49, 1
        %s807 = scalar_lea.sflag [#allocation15], %s806
        %s808 = sand.u32 %s277, 1
        %s809 = smul.addr %s808, 512
        %s810 = scalar_lea.vmem [#allocation16], %s809
        // Predicated region
        $region109: #{tpu_custom_call.1} parent=75 // pred_check
          %p811 = pneg %p290
        $region110: #{tpu_custom_call.1} parent=75 // pred_check_branch
          %813 = sbr.rel (%p811) target = $region112
        $region111: #{tpu_custom_call.1} parent=75 // pred_region
          %815 = dma.done %s807, 8192
        $region112: #{tpu_custom_call.1} parent=75 // pred_fallthru
          _
        %s816 = sand.u32 %s49, 1
        %s817 = scalar_lea.sflag [#allocation18], %s816
        %s818 = sand.u32 %s329, 1
        %s819 = smul.addr %s818, 512
        %s820 = scalar_lea.vmem [#allocation17], %s819
        // Predicated region
        $region113: #{tpu_custom_call.1} parent=75 // pred_check
          %p821 = pneg %p342
        $region114: #{tpu_custom_call.1} parent=75 // pred_check_branch
          %823 = sbr.rel (%p821) target = $region116
        $region115: #{tpu_custom_call.1} parent=75 // pred_region
          %825 = dma.done %s817, 8192
        $region116: #{tpu_custom_call.1} parent=75 // pred_fallthru
          _
        %s826 = sand.u32 %s49, 1
        %s827 = scalar_lea.sflag [#allocation18], %s826
        %s828 = sand.u32 %s355, 1
        %s829 = smul.addr %s828, 2
        %s830 = scalar_lea.vmem [#allocation19], %s829
        // Predicated region
        $region117: #{tpu_custom_call.1} parent=75 // pred_check
          %p831 = pneg %p368
        $region118: #{tpu_custom_call.1} parent=75 // pred_check_branch
          %833 = sbr.rel (%p831) target = $region120
        $region119: #{tpu_custom_call.1} parent=75 // pred_region
          %835 = dma.done %s827, 32
        $region120: #{tpu_custom_call.1} parent=75 // pred_fallthru
          _
        %s836 = sand.u32 %s381, 1
        %s837 = scalar_lea.sflag [#allocation21], %s836
        %s838 = sand.u32 %s381, 1
        %s839 = smul.addr %s838, 2
        %s840 = scalar_lea.vmem [#allocation20], %s839
        // Predicated region
        $region121: #{tpu_custom_call.1} parent=75 // pred_check
          %p841 = pneg %p394
        $region122: #{tpu_custom_call.1} parent=75 // pred_check_branch
          %843 = sbr.rel (%p841) target = $region124
        $region123: #{tpu_custom_call.1} parent=75 // pred_region
          %845 = dma.done %s837, 32
        $region124: #{tpu_custom_call.1} parent=75 // pred_fallthru
          _
        %s846 = sand.u32 %s69, 1
        %s847 = scalar_lea.sflag [#allocation3], %s846
        %s848 = sand.u32 %s69, 1
        %s849 = smul.addr %s848, 16
        %s850 = scalar_lea.vmem [#allocation2], %s849
        %p851 = pneg %p82
        %p852 = pneg %p79
        %s853 = sand.u32 %s49, 1
        %s854 = scalar_lea.sflag [#allocation6], %s853
        %s855 = sand.u32 %s95, 1
        %s856 = scalar_lea.vmem [#allocation5], %s855
        %p857 = pneg %p108
        %p858 = pneg %p105
        %s859 = sand.u32 %s49, 1
        %s860 = scalar_lea.sflag [#allocation6], %s859
        %s861 = sand.u32 %s121, 1
        %s862 = smul.addr %s861, 768
        %s863 = scalar_lea.vmem [#allocation7], %s862
        %p864 = pneg %p134
        %p865 = pneg %p131
        %s866 = sand.u32 %s49, 1
        %s867 = scalar_lea.sflag [#allocation9], %s866
        %s868 = sand.u32 %s147, 1
        %s869 = smul.addr %s868, 6
        %s870 = scalar_lea.vmem [#allocation8], %s869
        %p871 = pneg %p160
        %p872 = pneg %p157
        %s873 = sand.u32 %s49, 1
        %s874 = scalar_lea.sflag [#allocation9], %s873
        %s875 = sand.u32 %s173, 1
        %s876 = smul.addr %s875, 256
        %s877 = scalar_lea.vmem [#allocation10], %s876
        %p878 = pneg %p186
        %p879 = pneg %p183
        %s880 = sand.u32 %s49, 1
        %s881 = scalar_lea.sflag [#allocation12], %s880
        %s882 = sand.u32 %s199, 1
        %s883 = smul.addr %s882, 2
        %s884 = scalar_lea.vmem [#allocation11], %s883
        %p885 = pneg %p212
        %p886 = pneg %p209
        %s887 = sand.u32 %s49, 1
        %s888 = scalar_lea.sflag [#allocation12], %s887
        %s889 = sand.u32 %s225, 1
        %s890 = smul.addr %s889, 2
        %s891 = scalar_lea.vmem [#allocation13], %s890
        %p892 = pneg %p238
        %p893 = pneg %p235
        %s894 = sand.u32 %s49, 1
        %s895 = scalar_lea.sflag [#allocation15], %s894
        %s896 = sand.u32 %s251, 1
        %s897 = smul.addr %s896, 2
        %s898 = scalar_lea.vmem [#allocation14], %s897
        %p899 = pneg %p264
        %p900 = pneg %p261
        %s901 = sand.u32 %s49, 1
        %s902 = scalar_lea.sflag [#allocation15], %s901
        %s903 = sand.u32 %s277, 1
        %s904 = smul.addr %s903, 512
        %s905 = scalar_lea.vmem [#allocation16], %s904
        %p906 = pneg %p290
        %p907 = pneg %p287
        %p908 = scmp.lt.s32.totalorder %s54, 1
        %s909 = scalar_select %p908, %s54, 1
        %s910 = smul.addr %s909, 4
        %s911 = scalar_lea.vmem %s9, %s910
        %p912 = pneg %p316
        %p913 = pneg %p313
        %s914 = sand.u32 %s49, 1
        %s915 = scalar_lea.sflag [#allocation18], %s914
        %s916 = sand.u32 %s329, 1
        %s917 = smul.addr %s916, 512
        %s918 = scalar_lea.vmem [#allocation17], %s917
        %p919 = pneg %p342
        %p920 = pneg %p339
        %s921 = sand.u32 %s49, 1
        %s922 = scalar_lea.sflag [#allocation18], %s921
        %s923 = sand.u32 %s355, 1
        %s924 = smul.addr %s923, 2
        %s925 = scalar_lea.vmem [#allocation19], %s924
        %p926 = pneg %p368
        %p927 = pneg %p365
        %s928 = sand.u32 %s381, 1
        %s929 = scalar_lea.sflag [#allocation21], %s928
        %s930 = sand.u32 %s381, 1
        %s931 = smul.addr %s930, 2
        %s932 = scalar_lea.vmem [#allocation20], %s931
        %p933 = pneg %p394
        %p934 = pneg %p391
        %p935 = scmp.lt.s32.totalorder %s54, 1
        %s936 = scalar_select %p935, %s54, 1
        %s937 = smul.addr %s936, 2
        %s938 = scalar_lea.vmem %s13, %s937
        %p939 = pneg %p420
        %p940 = pneg %p417
        %p941 = pneg %p446
        %p942 = pneg %p443
        %s943 = sand.u32 %s433, 1
        %s944 = scalar_lea.sflag [#allocation4], %s943
        %s945 = sand.u32 %s433, 1
        %s946 = smul.addr %s945, 32
        %s947 = scalar_lea.vmem [#allocation22], %s946
        %p948 = scmp.lt.s32.totalorder %s54, 1
        %s949 = scalar_select %p948, %s54, 1
        %s950 = smul.addr %s949, 4
        %s951 = scalar_lea.vmem %s9, %s950
        %p952 = scmp.lt.s32.totalorder %s54, 1
        %s953 = scalar_select %p952, %s54, 1
        %s954 = smul.addr %s953, 2
        %s955 = scalar_lea.vmem %s13, %s954
        %p957 = scmp.eq.s32.totalorder %s54, 0
        // Predicated region
        $region125: #{tpu_custom_call.1} parent=75 // pred_check
          %p958 = pneg %p957
        $region126: #{tpu_custom_call.1} parent=75 // pred_check_branch
          %960 = sbr.rel (%p958) target = $region128
        $region127: #{tpu_custom_call.1} parent=75 // pred_region
          %v961 = vld [vmem:[%s731] sm:$0xff]
          %v962 = vld [vmem:[%s731 + $0x8] sm:$0xff]
          %v963 = vunpack.c.l.bf16 %v961
          %v964 = vunpack.c.h.bf16 %v961
          %v965 = vunpack.c.l.bf16 %v962
          %v966 = vunpack.c.h.bf16 %v962
          %967 = vst [vmem:[%s947] sm:$0xff] %v963
          %968 = vst [vmem:[%s947 + $0x8] sm:$0xff] %v964
          %969 = vst [vmem:[%s947 + $0x10] sm:$0xff] %v965
          %970 = vst [vmem:[%s947 + $0x18] sm:$0xff] %v966
        $region128: #{tpu_custom_call.1} parent=75 // pred_fallthru
          _
        %v971 = vld [vmem:[%s947] sm:$0xff]
        %v972 = vld [vmem:[%s947 + $0x8] sm:$0xff]
        %v973 = vld [vmem:[%s947 + $0x10] sm:$0xff]
        %v974 = vld [vmem:[%s947 + $0x18] sm:$0xff]
        %v975 = vld [vmem:[%s740] sm:$0x1]
        %v976 = vsub.f32 %v975, 1.0
        %v977 = vmul.f32 %v976, 1e+09
        %v978 = vpack.c.bf16 %v973, %v971
        %v979 = vpack.c.bf16 %v974, %v972
        %v980 = vld [vmem:[%s750] sm:$0xff]
        %v981 = vld [vmem:[%s750 + $0x8] sm:$0xff]
        %v982 = vld [vmem:[%s750 + $0x10] sm:$0xff]
        %v983 = vld [vmem:[%s750 + $0x18] sm:$0xff]
        %v984 = vld [vmem:[%s750 + $0x20] sm:$0xff]
        %v985 = vld [vmem:[%s750 + $0x28] sm:$0xff]
        %v986 = vld [vmem:[%s750 + $0x30] sm:$0xff]
        %v987 = vld [vmem:[%s750 + $0x38] sm:$0xff]
        %v988 = vld [vmem:[%s750 + $0x40] sm:$0xff]
        %v989 = vld [vmem:[%s750 + $0x48] sm:$0xff]
        %v990 = vld [vmem:[%s750 + $0x50] sm:$0xff]
        %v991 = vld [vmem:[%s750 + $0x58] sm:$0xff]
        %v992 = vld [vmem:[%s750 + $0x60] sm:$0xff]
        %v993 = vld [vmem:[%s750 + $0x68] sm:$0xff]
        %v994 = vld [vmem:[%s750 + $0x70] sm:$0xff]
        %v995 = vld [vmem:[%s750 + $0x78] sm:$0xff]
        %v996 = vld [vmem:[%s750 + $0x80] sm:$0xff]
        %v997 = vld [vmem:[%s750 + $0x88] sm:$0xff]
        %v998 = vld [vmem:[%s750 + $0x90] sm:$0xff]
        %v999 = vld [vmem:[%s750 + $0x98] sm:$0xff]
        %v1000 = vld [vmem:[%s750 + $0xa0] sm:$0xff]
        %v1001 = vld [vmem:[%s750 + $0xa8] sm:$0xff]
        %v1002 = vld [vmem:[%s750 + $0xb0] sm:$0xff]
        %v1003 = vld [vmem:[%s750 + $0xb8] sm:$0xff]
        %v1004 = vld [vmem:[%s750 + $0xc0] sm:$0xff]
        %v1005 = vld [vmem:[%s750 + $0xc8] sm:$0xff]
        %v1006 = vld [vmem:[%s750 + $0xd0] sm:$0xff]
        %v1007 = vld [vmem:[%s750 + $0xd8] sm:$0xff]
        %v1008 = vld [vmem:[%s750 + $0xe0] sm:$0xff]
        %v1009 = vld [vmem:[%s750 + $0xe8] sm:$0xff]
        %v1010 = vld [vmem:[%s750 + $0xf0] sm:$0xff]
        %v1011 = vld [vmem:[%s750 + $0xf8] sm:$0xff]
        %v1012 = vld [vmem:[%s750 + $0x100] sm:$0xff]
        %v1013 = vld [vmem:[%s750 + $0x108] sm:$0xff]
        %v1014 = vld [vmem:[%s750 + $0x110] sm:$0xff]
        %v1015 = vld [vmem:[%s750 + $0x118] sm:$0xff]
        %v1016 = vld [vmem:[%s750 + $0x120] sm:$0xff]
        %v1017 = vld [vmem:[%s750 + $0x128] sm:$0xff]
        %v1018 = vld [vmem:[%s750 + $0x130] sm:$0xff]
        %v1019 = vld [vmem:[%s750 + $0x138] sm:$0xff]
        %v1020 = vld [vmem:[%s750 + $0x140] sm:$0xff]
        %v1021 = vld [vmem:[%s750 + $0x148] sm:$0xff]
        %v1022 = vld [vmem:[%s750 + $0x150] sm:$0xff]
        %v1023 = vld [vmem:[%s750 + $0x158] sm:$0xff]
        %v1024 = vld [vmem:[%s750 + $0x160] sm:$0xff]
        %v1025 = vld [vmem:[%s750 + $0x168] sm:$0xff]
        %v1026 = vld [vmem:[%s750 + $0x170] sm:$0xff]
        %v1027 = vld [vmem:[%s750 + $0x178] sm:$0xff]
        %v1028 = vld [vmem:[%s750 + $0x180] sm:$0xff]
        %v1029 = vld [vmem:[%s750 + $0x188] sm:$0xff]
        %v1030 = vld [vmem:[%s750 + $0x190] sm:$0xff]
        %v1031 = vld [vmem:[%s750 + $0x198] sm:$0xff]
        %v1032 = vld [vmem:[%s750 + $0x1a0] sm:$0xff]
        %v1033 = vld [vmem:[%s750 + $0x1a8] sm:$0xff]
        %v1034 = vld [vmem:[%s750 + $0x1b0] sm:$0xff]
        %v1035 = vld [vmem:[%s750 + $0x1b8] sm:$0xff]
        %v1036 = vld [vmem:[%s750 + $0x1c0] sm:$0xff]
        %v1037 = vld [vmem:[%s750 + $0x1c8] sm:$0xff]
        %v1038 = vld [vmem:[%s750 + $0x1d0] sm:$0xff]
        %v1039 = vld [vmem:[%s750 + $0x1d8] sm:$0xff]
        %v1040 = vld [vmem:[%s750 + $0x1e0] sm:$0xff]
        %v1041 = vld [vmem:[%s750 + $0x1e8] sm:$0xff]
        %v1042 = vld [vmem:[%s750 + $0x1f0] sm:$0xff]
        %v1043 = vld [vmem:[%s750 + $0x1f8] sm:$0xff]
        %v1044 = vld [vmem:[%s750 + $0x200] sm:$0xff]
        %v1045 = vld [vmem:[%s750 + $0x208] sm:$0xff]
        %v1046 = vld [vmem:[%s750 + $0x210] sm:$0xff]
        %v1047 = vld [vmem:[%s750 + $0x218] sm:$0xff]
        %v1048 = vld [vmem:[%s750 + $0x220] sm:$0xff]
        %v1049 = vld [vmem:[%s750 + $0x228] sm:$0xff]
        %v1050 = vld [vmem:[%s750 + $0x230] sm:$0xff]
        %v1051 = vld [vmem:[%s750 + $0x238] sm:$0xff]
        %v1052 = vld [vmem:[%s750 + $0x240] sm:$0xff]
        %v1053 = vld [vmem:[%s750 + $0x248] sm:$0xff]
        %v1054 = vld [vmem:[%s750 + $0x250] sm:$0xff]
        %v1055 = vld [vmem:[%s750 + $0x258] sm:$0xff]
        %v1056 = vld [vmem:[%s750 + $0x260] sm:$0xff]
        %v1057 = vld [vmem:[%s750 + $0x268] sm:$0xff]
        %v1058 = vld [vmem:[%s750 + $0x270] sm:$0xff]
        %v1059 = vld [vmem:[%s750 + $0x278] sm:$0xff]
        %v1060 = vld [vmem:[%s750 + $0x280] sm:$0xff]
        %v1061 = vld [vmem:[%s750 + $0x288] sm:$0xff]
        %v1062 = vld [vmem:[%s750 + $0x290] sm:$0xff]
        %v1063 = vld [vmem:[%s750 + $0x298] sm:$0xff]
        %v1064 = vld [vmem:[%s750 + $0x2a0] sm:$0xff]
        %v1065 = vld [vmem:[%s750 + $0x2a8] sm:$0xff]
        %v1066 = vld [vmem:[%s750 + $0x2b0] sm:$0xff]
        %v1067 = vld [vmem:[%s750 + $0x2b8] sm:$0xff]
        %v1068 = vld [vmem:[%s750 + $0x2c0] sm:$0xff]
        %v1069 = vld [vmem:[%s750 + $0x2c8] sm:$0xff]
        %v1070 = vld [vmem:[%s750 + $0x2d0] sm:$0xff]
        %v1071 = vld [vmem:[%s750 + $0x2d8] sm:$0xff]
        %v1072 = vld [vmem:[%s750 + $0x2e0] sm:$0xff]
        %v1073 = vld [vmem:[%s750 + $0x2e8] sm:$0xff]
        %v1074 = vld [vmem:[%s750 + $0x2f0] sm:$0xff]
        %v1075 = vld [vmem:[%s750 + $0x2f8] sm:$0xff]
        %v1076 = vld [vmem:[%s760] sm:$0x3f]
        %v1078 = vperm.slane %v1076, 0
        %v1079 = vperm.slane %v1076, 1
        %v1080 = vperm.slane %v1076, 2
        %v1081 = vperm.slane %v1076, 3
        %v1082 = vperm.slane %v1076, 4
        %v1083 = vperm.slane %v1076, 5
        %v1186 = vunpack.c.l.b16 %v980
        %v1187 = vunpack.c.h.b16 %v980
        %v1188 = vunpack.c.l.b16 %v981
        %v1189 = vunpack.c.h.b16 %v981
        %v1190 = vunpack.c.l.b16 %v982
        %v1191 = vunpack.c.h.b16 %v982
        %v1192 = vunpack.c.l.b16 %v983
        %v1193 = vunpack.c.h.b16 %v983
        %v1194 = vunpack.c.l.b16 %v984
        %v1195 = vunpack.c.h.b16 %v984
        %v1196 = vunpack.c.l.b16 %v985
        %v1197 = vunpack.c.h.b16 %v985
        %v1198 = vunpack.c.l.b16 %v986
        %v1199 = vunpack.c.h.b16 %v986
        %v1200 = vunpack.c.l.b16 %v987
        %v1201 = vunpack.c.h.b16 %v987
        %v1202 = vunpack.c.l.b16 %v988
        %v1203 = vunpack.c.h.b16 %v988
        %v1204 = vunpack.c.l.b16 %v989
        %v1205 = vunpack.c.h.b16 %v989
        %v1206 = vunpack.c.l.b16 %v990
        %v1207 = vunpack.c.h.b16 %v990
        %v1208 = vunpack.c.l.b16 %v991
        %v1209 = vunpack.c.h.b16 %v991
        %v1210 = vunpack.c.l.b16 %v992
        %v1211 = vunpack.c.h.b16 %v992
        %v1212 = vunpack.c.l.b16 %v993
        %v1213 = vunpack.c.h.b16 %v993
        %v1214 = vunpack.c.l.b16 %v994
        %v1215 = vunpack.c.h.b16 %v994
        %v1216 = vunpack.c.l.b16 %v995
        %v1217 = vunpack.c.h.b16 %v995
        %v1218 = vunpack.c.l.b16 %v996
        %v1219 = vunpack.c.h.b16 %v996
        %v1220 = vunpack.c.l.b16 %v997
        %v1221 = vunpack.c.h.b16 %v997
        %v1222 = vunpack.c.l.b16 %v998
        %v1223 = vunpack.c.h.b16 %v998
        %v1224 = vunpack.c.l.b16 %v999
        %v1225 = vunpack.c.h.b16 %v999
        %v1226 = vunpack.c.l.b16 %v1000
        %v1227 = vunpack.c.h.b16 %v1000
        %v1228 = vunpack.c.l.b16 %v1001
        %v1229 = vunpack.c.h.b16 %v1001
        %v1230 = vunpack.c.l.b16 %v1002
        %v1231 = vunpack.c.h.b16 %v1002
        %v1232 = vunpack.c.l.b16 %v1003
        %v1233 = vunpack.c.h.b16 %v1003
        %v1234 = vunpack.c.l.b16 %v1004
        %v1235 = vunpack.c.h.b16 %v1004
        %v1236 = vunpack.c.l.b16 %v1005
        %v1237 = vunpack.c.h.b16 %v1005
        %v1238 = vunpack.c.l.b16 %v1006
        %v1239 = vunpack.c.h.b16 %v1006
        %v1240 = vunpack.c.l.b16 %v1007
        %v1241 = vunpack.c.h.b16 %v1007
        %v1242 = vunpack.c.l.b16 %v1008
        %v1243 = vunpack.c.h.b16 %v1008
        %v1244 = vunpack.c.l.b16 %v1009
        %v1245 = vunpack.c.h.b16 %v1009
        %v1246 = vunpack.c.l.b16 %v1010
        %v1247 = vunpack.c.h.b16 %v1010
        %v1248 = vunpack.c.l.b16 %v1011
        %v1249 = vunpack.c.h.b16 %v1011
        %v1250 = vunpack.c.l.b16 %v1012
        %v1251 = vunpack.c.h.b16 %v1012
        %v1252 = vunpack.c.l.b16 %v1013
        %v1253 = vunpack.c.h.b16 %v1013
        %v1254 = vunpack.c.l.b16 %v1014
        %v1255 = vunpack.c.h.b16 %v1014
        %v1256 = vunpack.c.l.b16 %v1015
        %v1257 = vunpack.c.h.b16 %v1015
        %v1258 = vunpack.c.l.b16 %v1016
        %v1259 = vunpack.c.h.b16 %v1016
        %v1260 = vunpack.c.l.b16 %v1017
        %v1261 = vunpack.c.h.b16 %v1017
        %v1262 = vunpack.c.l.b16 %v1018
        %v1263 = vunpack.c.h.b16 %v1018
        %v1264 = vunpack.c.l.b16 %v1019
        %v1265 = vunpack.c.h.b16 %v1019
        %v1266 = vunpack.c.l.b16 %v1020
        %v1267 = vunpack.c.h.b16 %v1020
        %v1268 = vunpack.c.l.b16 %v1021
        %v1269 = vunpack.c.h.b16 %v1021
        %v1270 = vunpack.c.l.b16 %v1022
        %v1271 = vunpack.c.h.b16 %v1022
        %v1272 = vunpack.c.l.b16 %v1023
        %v1273 = vunpack.c.h.b16 %v1023
        %v1274 = vunpack.c.l.b16 %v1024
        %v1275 = vunpack.c.h.b16 %v1024
        %v1276 = vunpack.c.l.b16 %v1025
        %v1277 = vunpack.c.h.b16 %v1025
        %v1278 = vunpack.c.l.b16 %v1026
        %v1279 = vunpack.c.h.b16 %v1026
        %v1280 = vunpack.c.l.b16 %v1027
        %v1281 = vunpack.c.h.b16 %v1027
        %v1282 = vunpack.c.l.b16 %v1028
        %v1283 = vunpack.c.h.b16 %v1028
        %v1284 = vunpack.c.l.b16 %v1029
        %v1285 = vunpack.c.h.b16 %v1029
        %v1286 = vunpack.c.l.b16 %v1030
        %v1287 = vunpack.c.h.b16 %v1030
        %v1288 = vunpack.c.l.b16 %v1031
        %v1289 = vunpack.c.h.b16 %v1031
        %v1290 = vunpack.c.l.b16 %v1032
        %v1291 = vunpack.c.h.b16 %v1032
        %v1292 = vunpack.c.l.b16 %v1033
        %v1293 = vunpack.c.h.b16 %v1033
        %v1294 = vunpack.c.l.b16 %v1034
        %v1295 = vunpack.c.h.b16 %v1034
        %v1296 = vunpack.c.l.b16 %v1035
        %v1297 = vunpack.c.h.b16 %v1035
        %v1298 = vunpack.c.l.b16 %v1036
        %v1299 = vunpack.c.h.b16 %v1036
        %v1300 = vunpack.c.l.b16 %v1037
        %v1301 = vunpack.c.h.b16 %v1037
        %v1302 = vunpack.c.l.b16 %v1038
        %v1303 = vunpack.c.h.b16 %v1038
        %v1304 = vunpack.c.l.b16 %v1039
        %v1305 = vunpack.c.h.b16 %v1039
        %v1306 = vunpack.c.l.b16 %v1040
        %v1307 = vunpack.c.h.b16 %v1040
        %v1308 = vunpack.c.l.b16 %v1041
        %v1309 = vunpack.c.h.b16 %v1041
        %v1310 = vunpack.c.l.b16 %v1042
        %v1311 = vunpack.c.h.b16 %v1042
        %v1312 = vunpack.c.l.b16 %v1043
        %v1313 = vunpack.c.h.b16 %v1043
        %v1314 = vunpack.c.l.b16 %v1044
        %v1315 = vunpack.c.h.b16 %v1044
        %v1316 = vunpack.c.l.b16 %v1045
        %v1317 = vunpack.c.h.b16 %v1045
        %v1318 = vunpack.c.l.b16 %v1046
        %v1319 = vunpack.c.h.b16 %v1046
        %v1320 = vunpack.c.l.b16 %v1047
        %v1321 = vunpack.c.h.b16 %v1047
        %v1322 = vunpack.c.l.b16 %v1048
        %v1323 = vunpack.c.h.b16 %v1048
        %v1324 = vunpack.c.l.b16 %v1049
        %v1325 = vunpack.c.h.b16 %v1049
        %v1326 = vunpack.c.l.b16 %v1050
        %v1327 = vunpack.c.h.b16 %v1050
        %v1328 = vunpack.c.l.b16 %v1051
        %v1329 = vunpack.c.h.b16 %v1051
        %v1330 = vunpack.c.l.b16 %v1052
        %v1331 = vunpack.c.h.b16 %v1052
        %v1332 = vunpack.c.l.b16 %v1053
        %v1333 = vunpack.c.h.b16 %v1053
        %v1334 = vunpack.c.l.b16 %v1054
        %v1335 = vunpack.c.h.b16 %v1054
        %v1336 = vunpack.c.l.b16 %v1055
        %v1337 = vunpack.c.h.b16 %v1055
        %v1338 = vunpack.c.l.b16 %v1056
        %v1339 = vunpack.c.h.b16 %v1056
        %v1340 = vunpack.c.l.b16 %v1057
        %v1341 = vunpack.c.h.b16 %v1057
        %v1342 = vunpack.c.l.b16 %v1058
        %v1343 = vunpack.c.h.b16 %v1058
        %v1344 = vunpack.c.l.b16 %v1059
        %v1345 = vunpack.c.h.b16 %v1059
        %v1346 = vunpack.c.l.b16 %v1060
        %v1347 = vunpack.c.h.b16 %v1060
        %v1348 = vunpack.c.l.b16 %v1061
        %v1349 = vunpack.c.h.b16 %v1061
        %v1350 = vunpack.c.l.b16 %v1062
        %v1351 = vunpack.c.h.b16 %v1062
        %v1352 = vunpack.c.l.b16 %v1063
        %v1353 = vunpack.c.h.b16 %v1063
        %v1354 = vunpack.c.l.b16 %v1064
        %v1355 = vunpack.c.h.b16 %v1064
        %v1356 = vunpack.c.l.b16 %v1065
        %v1357 = vunpack.c.h.b16 %v1065
        %v1358 = vunpack.c.l.b16 %v1066
        %v1359 = vunpack.c.h.b16 %v1066
        %v1360 = vunpack.c.l.b16 %v1067
        %v1361 = vunpack.c.h.b16 %v1067
        %v1362 = vunpack.c.l.b16 %v1068
        %v1363 = vunpack.c.h.b16 %v1068
        %v1364 = vunpack.c.l.b16 %v1069
        %v1365 = vunpack.c.h.b16 %v1069
        %v1366 = vunpack.c.l.b16 %v1070
        %v1367 = vunpack.c.h.b16 %v1070
        %v1368 = vunpack.c.l.b16 %v1071
        %v1369 = vunpack.c.h.b16 %v1071
        %v1370 = vunpack.c.l.b16 %v1072
        %v1371 = vunpack.c.h.b16 %v1072
        %v1372 = vunpack.c.l.b16 %v1073
        %v1373 = vunpack.c.h.b16 %v1073
        %v1374 = vunpack.c.l.b16 %v1074
        %v1375 = vunpack.c.h.b16 %v1074
        %v1376 = vunpack.c.l.b16 %v1075
        %v1377 = vunpack.c.h.b16 %v1075
        %v1378 = vpack.c.b16 %v1192, %v1186
        %v1379 = vpack.c.b16 %v1193, %v1187
        %v1380 = vpack.c.b16 %v1194, %v1188
        %v1381 = vpack.c.b16 %v1195, %v1189
        %v1382 = vpack.c.b16 %v1196, %v1190
        %v1383 = vpack.c.b16 %v1197, %v1191
        %v1384 = vpack.c.b16 %v1204, %v1198
        %v1385 = vpack.c.b16 %v1205, %v1199
        %v1386 = vpack.c.b16 %v1206, %v1200
        %v1387 = vpack.c.b16 %v1207, %v1201
        %v1388 = vpack.c.b16 %v1208, %v1202
        %v1389 = vpack.c.b16 %v1209, %v1203
        %v1390 = vpack.c.b16 %v1216, %v1210
        %v1391 = vpack.c.b16 %v1217, %v1211
        %v1392 = vpack.c.b16 %v1218, %v1212
        %v1393 = vpack.c.b16 %v1219, %v1213
        %v1394 = vpack.c.b16 %v1220, %v1214
        %v1395 = vpack.c.b16 %v1221, %v1215
        %v1396 = vpack.c.b16 %v1228, %v1222
        %v1397 = vpack.c.b16 %v1229, %v1223
        %v1398 = vpack.c.b16 %v1230, %v1224
        %v1399 = vpack.c.b16 %v1231, %v1225
        %v1400 = vpack.c.b16 %v1232, %v1226
        %v1401 = vpack.c.b16 %v1233, %v1227
        %v1402 = vpack.c.b16 %v1240, %v1234
        %v1403 = vpack.c.b16 %v1241, %v1235
        %v1404 = vpack.c.b16 %v1242, %v1236
        %v1405 = vpack.c.b16 %v1243, %v1237
        %v1406 = vpack.c.b16 %v1244, %v1238
        %v1407 = vpack.c.b16 %v1245, %v1239
        %v1408 = vpack.c.b16 %v1252, %v1246
        %v1409 = vpack.c.b16 %v1253, %v1247
        %v1410 = vpack.c.b16 %v1254, %v1248
        %v1411 = vpack.c.b16 %v1255, %v1249
        %v1412 = vpack.c.b16 %v1256, %v1250
        %v1413 = vpack.c.b16 %v1257, %v1251
        %v1414 = vpack.c.b16 %v1264, %v1258
        %v1415 = vpack.c.b16 %v1265, %v1259
        %v1416 = vpack.c.b16 %v1266, %v1260
        %v1417 = vpack.c.b16 %v1267, %v1261
        %v1418 = vpack.c.b16 %v1268, %v1262
        %v1419 = vpack.c.b16 %v1269, %v1263
        %v1420 = vpack.c.b16 %v1276, %v1270
        %v1421 = vpack.c.b16 %v1277, %v1271
        %v1422 = vpack.c.b16 %v1278, %v1272
        %v1423 = vpack.c.b16 %v1279, %v1273
        %v1424 = vpack.c.b16 %v1280, %v1274
        %v1425 = vpack.c.b16 %v1281, %v1275
        %v1426 = vpack.c.b16 %v1288, %v1282
        %v1427 = vpack.c.b16 %v1289, %v1283
        %v1428 = vpack.c.b16 %v1290, %v1284
        %v1429 = vpack.c.b16 %v1291, %v1285
        %v1430 = vpack.c.b16 %v1292, %v1286
        %v1431 = vpack.c.b16 %v1293, %v1287
        %v1432 = vpack.c.b16 %v1300, %v1294
        %v1433 = vpack.c.b16 %v1301, %v1295
        %v1434 = vpack.c.b16 %v1302, %v1296
        %v1435 = vpack.c.b16 %v1303, %v1297
        %v1436 = vpack.c.b16 %v1304, %v1298
        %v1437 = vpack.c.b16 %v1305, %v1299
        %v1438 = vpack.c.b16 %v1312, %v1306
        %v1439 = vpack.c.b16 %v1313, %v1307
        %v1440 = vpack.c.b16 %v1314, %v1308
        %v1441 = vpack.c.b16 %v1315, %v1309
        %v1442 = vpack.c.b16 %v1316, %v1310
        %v1443 = vpack.c.b16 %v1317, %v1311
        %v1444 = vpack.c.b16 %v1324, %v1318
        %v1445 = vpack.c.b16 %v1325, %v1319
        %v1446 = vpack.c.b16 %v1326, %v1320
        %v1447 = vpack.c.b16 %v1327, %v1321
        %v1448 = vpack.c.b16 %v1328, %v1322
        %v1449 = vpack.c.b16 %v1329, %v1323
        %v1450 = vpack.c.b16 %v1336, %v1330
        %v1451 = vpack.c.b16 %v1337, %v1331
        %v1452 = vpack.c.b16 %v1338, %v1332
        %v1453 = vpack.c.b16 %v1339, %v1333
        %v1454 = vpack.c.b16 %v1340, %v1334
        %v1455 = vpack.c.b16 %v1341, %v1335
        %v1456 = vpack.c.b16 %v1348, %v1342
        %v1457 = vpack.c.b16 %v1349, %v1343
        %v1458 = vpack.c.b16 %v1350, %v1344
        %v1459 = vpack.c.b16 %v1351, %v1345
        %v1460 = vpack.c.b16 %v1352, %v1346
        %v1461 = vpack.c.b16 %v1353, %v1347
        %v1462 = vpack.c.b16 %v1360, %v1354
        %v1463 = vpack.c.b16 %v1361, %v1355
        %v1464 = vpack.c.b16 %v1362, %v1356
        %v1465 = vpack.c.b16 %v1363, %v1357
        %v1466 = vpack.c.b16 %v1364, %v1358
        %v1467 = vpack.c.b16 %v1365, %v1359
        %v1468 = vpack.c.b16 %v1372, %v1366
        %v1469 = vpack.c.b16 %v1373, %v1367
        %v1470 = vpack.c.b16 %v1374, %v1368
        %v1471 = vpack.c.b16 %v1375, %v1369
        %v1472 = vpack.c.b16 %v1376, %v1370
        %v1473 = vpack.c.b16 %v1377, %v1371
        %1570 = vmatpush.bf16.msra.mxu0 %v1420
        %1571 = vmatpush.bf16.msra.mxu0 %v1414
        %1572 = vmatpush.bf16.msra.mxu0 %v1408
        %1573 = vmatpush.bf16.msra.mxu0 %v1402
        %1574 = vmatpush.bf16.msra.mxu0 %v1396
        %1575 = vmatpush.bf16.msra.mxu0 %v1390
        %1576 = vmatpush.bf16.msra.mxu0 %v1384
        %1577 = vmatpush.bf16.msra.mxu0 %v1378
        %1578 = vmatmul.bf16.gmra.mxu0 %v978
        %v1579 = vpop.f32.mrf.mxu0
        %v1580 = vadd.f32 %v1078, %v1579
        %v1581 = vpop.f32.mrf.mxu0
        %v1582 = vadd.f32 %v1078, %v1581
        %1583 = vdwg.mxu0
        %1584 = vmatpush.bf16.msra.mxu0 %v1468
        %1585 = vmatpush.bf16.msra.mxu0 %v1462
        %1586 = vmatpush.bf16.msra.mxu0 %v1456
        %1587 = vmatpush.bf16.msra.mxu0 %v1450
        %1588 = vmatpush.bf16.msra.mxu0 %v1444
        %1589 = vmatpush.bf16.msra.mxu0 %v1438
        %1590 = vmatpush.bf16.msra.mxu0 %v1432
        %1591 = vmatpush.bf16.msra.mxu0 %v1426
        %1592 = vmatmul.bf16.gmra.mxu0 %v979
        %v1593 = vpop.f32.mrf.mxu0
        %v1594 = vadd.f32 %v1580, %v1593
        %v1595 = vpop.f32.mrf.mxu0
        %v1596 = vadd.f32 %v1582, %v1595
        %1597 = vdwg.mxu0
        %1598 = vmatpush.bf16.msra.mxu0 %v1421
        %1599 = vmatpush.bf16.msra.mxu0 %v1415
        %1600 = vmatpush.bf16.msra.mxu0 %v1409
        %1601 = vmatpush.bf16.msra.mxu0 %v1403
        %1602 = vmatpush.bf16.msra.mxu0 %v1397
        %1603 = vmatpush.bf16.msra.mxu0 %v1391
        %1604 = vmatpush.bf16.msra.mxu0 %v1385
        %1605 = vmatpush.bf16.msra.mxu0 %v1379
        %1606 = vmatmul.bf16.gmra.mxu0 %v978
        %v1607 = vpop.f32.mrf.mxu0
        %v1608 = vadd.f32 %v1079, %v1607
        %v1609 = vpop.f32.mrf.mxu0
        %v1610 = vadd.f32 %v1079, %v1609
        %1611 = vdwg.mxu0
        %1612 = vmatpush.bf16.msra.mxu0 %v1469
        %1613 = vmatpush.bf16.msra.mxu0 %v1463
        %1614 = vmatpush.bf16.msra.mxu0 %v1457
        %1615 = vmatpush.bf16.msra.mxu0 %v1451
        %1616 = vmatpush.bf16.msra.mxu0 %v1445
        %1617 = vmatpush.bf16.msra.mxu0 %v1439
        %1618 = vmatpush.bf16.msra.mxu0 %v1433
        %1619 = vmatpush.bf16.msra.mxu0 %v1427
        %1620 = vmatmul.bf16.gmra.mxu0 %v979
        %v1621 = vpop.f32.mrf.mxu0
        %v1622 = vadd.f32 %v1608, %v1621
        %v1623 = vpop.f32.mrf.mxu0
        %v1624 = vadd.f32 %v1610, %v1623
        %1625 = vdwg.mxu0
        %1626 = vmatpush.bf16.msra.mxu0 %v1422
        %1627 = vmatpush.bf16.msra.mxu0 %v1416
        %1628 = vmatpush.bf16.msra.mxu0 %v1410
        %1629 = vmatpush.bf16.msra.mxu0 %v1404
        %1630 = vmatpush.bf16.msra.mxu0 %v1398
        %1631 = vmatpush.bf16.msra.mxu0 %v1392
        %1632 = vmatpush.bf16.msra.mxu0 %v1386
        %1633 = vmatpush.bf16.msra.mxu0 %v1380
        %1634 = vmatmul.bf16.gmra.mxu0 %v978
        %v1635 = vpop.f32.mrf.mxu0
        %v1636 = vadd.f32 %v1080, %v1635
        %v1637 = vpop.f32.mrf.mxu0
        %v1638 = vadd.f32 %v1080, %v1637
        %1639 = vdwg.mxu0
        %1640 = vmatpush.bf16.msra.mxu0 %v1470
        %1641 = vmatpush.bf16.msra.mxu0 %v1464
        %1642 = vmatpush.bf16.msra.mxu0 %v1458
        %1643 = vmatpush.bf16.msra.mxu0 %v1452
        %1644 = vmatpush.bf16.msra.mxu0 %v1446
        %1645 = vmatpush.bf16.msra.mxu0 %v1440
        %1646 = vmatpush.bf16.msra.mxu0 %v1434
        %1647 = vmatpush.bf16.msra.mxu0 %v1428
        %1648 = vmatmul.bf16.gmra.mxu0 %v979
        %v1649 = vpop.f32.mrf.mxu0
        %v1650 = vadd.f32 %v1636, %v1649
        %v1651 = vpop.f32.mrf.mxu0
        %v1652 = vadd.f32 %v1638, %v1651
        %1653 = vdwg.mxu0
        %1654 = vmatpush.bf16.msra.mxu0 %v1423
        %1655 = vmatpush.bf16.msra.mxu0 %v1417
        %1656 = vmatpush.bf16.msra.mxu0 %v1411
        %1657 = vmatpush.bf16.msra.mxu0 %v1405
        %1658 = vmatpush.bf16.msra.mxu0 %v1399
        %1659 = vmatpush.bf16.msra.mxu0 %v1393
        %1660 = vmatpush.bf16.msra.mxu0 %v1387
        %1661 = vmatpush.bf16.msra.mxu0 %v1381
        %1662 = vmatmul.bf16.gmra.mxu0 %v978
        %v1663 = vpop.f32.mrf.mxu0
        %v1664 = vadd.f32 %v1081, %v1663
        %v1665 = vpop.f32.mrf.mxu0
        %v1666 = vadd.f32 %v1081, %v1665
        %1667 = vdwg.mxu0
        %1668 = vmatpush.bf16.msra.mxu0 %v1471
        %1669 = vmatpush.bf16.msra.mxu0 %v1465
        %1670 = vmatpush.bf16.msra.mxu0 %v1459
        %1671 = vmatpush.bf16.msra.mxu0 %v1453
        %1672 = vmatpush.bf16.msra.mxu0 %v1447
        %1673 = vmatpush.bf16.msra.mxu0 %v1441
        %1674 = vmatpush.bf16.msra.mxu0 %v1435
        %1675 = vmatpush.bf16.msra.mxu0 %v1429
        %1676 = vmatmul.bf16.gmra.mxu0 %v979
        %v1677 = vpop.f32.mrf.mxu0
        %v1678 = vadd.f32 %v1664, %v1677
        %v1679 = vpop.f32.mrf.mxu0
        %v1680 = vadd.f32 %v1666, %v1679
        %1681 = vdwg.mxu0
        %1682 = vmatpush.bf16.msra.mxu0 %v1424
        %1683 = vmatpush.bf16.msra.mxu0 %v1418
        %1684 = vmatpush.bf16.msra.mxu0 %v1412
        %1685 = vmatpush.bf16.msra.mxu0 %v1406
        %1686 = vmatpush.bf16.msra.mxu0 %v1400
        %1687 = vmatpush.bf16.msra.mxu0 %v1394
        %1688 = vmatpush.bf16.msra.mxu0 %v1388
        %1689 = vmatpush.bf16.msra.mxu0 %v1382
        %1690 = vmatmul.bf16.gmra.mxu0 %v978
        %v1691 = vpop.f32.mrf.mxu0
        %v1692 = vadd.f32 %v1082, %v1691
        %v1693 = vpop.f32.mrf.mxu0
        %v1694 = vadd.f32 %v1082, %v1693
        %1695 = vdwg.mxu0
        %1696 = vmatpush.bf16.msra.mxu0 %v1472
        %1697 = vmatpush.bf16.msra.mxu0 %v1466
        %1698 = vmatpush.bf16.msra.mxu0 %v1460
        %1699 = vmatpush.bf16.msra.mxu0 %v1454
        %1700 = vmatpush.bf16.msra.mxu0 %v1448
        %1701 = vmatpush.bf16.msra.mxu0 %v1442
        %1702 = vmatpush.bf16.msra.mxu0 %v1436
        %1703 = vmatpush.bf16.msra.mxu0 %v1430
        %1704 = vmatmul.bf16.gmra.mxu0 %v979
        %v1705 = vpop.f32.mrf.mxu0
        %v1706 = vadd.f32 %v1692, %v1705
        %v1707 = vpop.f32.mrf.mxu0
        %v1708 = vadd.f32 %v1694, %v1707
        %1709 = vdwg.mxu0
        %1710 = vmatpush.bf16.msra.mxu0 %v1425
        %1711 = vmatpush.bf16.msra.mxu0 %v1419
        %1712 = vmatpush.bf16.msra.mxu0 %v1413
        %1713 = vmatpush.bf16.msra.mxu0 %v1407
        %1714 = vmatpush.bf16.msra.mxu0 %v1401
        %1715 = vmatpush.bf16.msra.mxu0 %v1395
        %1716 = vmatpush.bf16.msra.mxu0 %v1389
        %1717 = vmatpush.bf16.msra.mxu0 %v1383
        %1718 = vmatmul.bf16.gmra.mxu0 %v978
        %v1719 = vpop.f32.mrf.mxu0
        %v1720 = vadd.f32 %v1083, %v1719
        %v1721 = vpop.f32.mrf.mxu0
        %v1722 = vadd.f32 %v1083, %v1721
        %1723 = vdwg.mxu0
        %1724 = vmatpush.bf16.msra.mxu0 %v1473
        %1725 = vmatpush.bf16.msra.mxu0 %v1467
        %1726 = vmatpush.bf16.msra.mxu0 %v1461
        %1727 = vmatpush.bf16.msra.mxu0 %v1455
        %1728 = vmatpush.bf16.msra.mxu0 %v1449
        %1729 = vmatpush.bf16.msra.mxu0 %v1443
        %1730 = vmatpush.bf16.msra.mxu0 %v1437
        %1731 = vmatpush.bf16.msra.mxu0 %v1431
        %1732 = vmatmul.bf16.gmra.mxu0 %v979
        %v1733 = vpop.f32.mrf.mxu0
        %v1734 = vadd.f32 %v1720, %v1733
        %v1735 = vpop.f32.mrf.mxu0
        %v1736 = vadd.f32 %v1722, %v1735
        %1737 = vdwg.mxu0
        %v1738 = vpack.c.bf16 %v1596, %v1594
        %v1739 = vpack.c.bf16 %v1652, %v1650
        %v1740 = vpack.c.bf16 %v1708, %v1706
        %v1742 = vperm.slane %v977, 0
        %1744 = vmatpush.bf16.xpose.msra.mxu0 0
        %1745 = vmatpush.bf16.xpose.msra.mxu0 0
        %1746 = vmatpush.bf16.xpose.msra.mxu0 0
        %1747 = vmatpush.bf16.xpose.msra.mxu0 0
        %1748 = vmatpush.bf16.xpose.msra.mxu0 0
        %1749 = vmatpush.bf16.xpose.msra.mxu0 0
        %1750 = vmatpush.bf16.xpose.msra.mxu0 0
        %1751 = vmatpush.bf16.xpose.msra.mxu0 %v1739
        %1752 = vmatmul.bf16.gmra.mxu0 %v1738
        %v1753 = vpop.f32.mrf.mxu0
        %v1754 = vadd.f32 %v1742, %v1753
        %v1755 = vpop.f32.mrf.mxu0
        %v1756 = vadd.f32 %v1742, %v1755
        %1757 = vdwg.mxu0
        %vm1758 = vcmask 130048
        %v1759 = vsel %vm1758, %v1754, -inf
        %1760 = vmax.xlane.f32.xlu0 %v1759
        %v1761 = vpop.xlane.xlu0 %1760
        %v1762 = vsel %vm1758, %v1756, -inf
        %1763 = vmax.xlane.f32.xlu0 %v1762
        %v1764 = vpop.xlane.xlu0 %1763
        %v1765 = vsub.f32 %v1754, %v1761
        %v1766 = vsub.f32 %v1756, %v1764
        %v1767 = vmul.f32 %v1765, 1.442695
        %v1768 = vpow.pop %v1767
        %v1769 = vmul.f32 %v1766, 1.442695
        %v1770 = vpow.pop %v1769
        %v1771 = vsel %vm1758, %v1768, 0.0
        %1772 = vadd.xlane.f32.xlu0 %v1771
        %v1773 = vpop.xlane.xlu0 %1772
        %v1774 = vsel %vm1758, %v1770, 0.0
        %1775 = vadd.xlane.f32.xlu0 %v1774
        %v1776 = vpop.xlane.xlu0 %1775
        %v1777 = vrcp.pop %v1773
        %v1778 = vrcp.pop %v1776
        %v1779 = vmul.f32 %v1768, %v1777
        %v1780 = vmul.f32 %v1770, %v1778
        %v1781 = vpack.c.bf16 %v1780, %v1779
        %v1783 = vsel %vm1758, %v1781, 0
        %1785 = vmatpush.bf16.msra.mxu0 0
        %1786 = vmatpush.bf16.msra.mxu0 0
        %1787 = vmatpush.bf16.msra.mxu0 0
        %1788 = vmatpush.bf16.msra.mxu0 0
        %1789 = vmatpush.bf16.msra.mxu0 0
        %1790 = vmatpush.bf16.msra.mxu0 0
        %1791 = vmatpush.bf16.msra.mxu0 0
        %1792 = vmatpush.bf16.msra.mxu0 %v1740
        %1793 = vmatmul.bf16.gmra.mxu0 %v1783
        %v1794 = vpop.f32.mrf.mxu0
        %v1795 = vadd.f32 0.0, %v1794
        %v1796 = vpop.f32.mrf.mxu0
        %v1797 = vadd.f32 0.0, %v1796
        %1798 = vdwg.mxu0
        %v1799 = vpack.c.bf16 %v1797, %v1795
        %v1800 = vld [vmem:[%s770] sm:$0xff]
        %v1801 = vld [vmem:[%s770 + $0x8] sm:$0xff]
        %v1802 = vld [vmem:[%s770 + $0x10] sm:$0xff]
        %v1803 = vld [vmem:[%s770 + $0x18] sm:$0xff]
        %v1804 = vld [vmem:[%s770 + $0x20] sm:$0xff]
        %v1805 = vld [vmem:[%s770 + $0x28] sm:$0xff]
        %v1806 = vld [vmem:[%s770 + $0x30] sm:$0xff]
        %v1807 = vld [vmem:[%s770 + $0x38] sm:$0xff]
        %v1808 = vld [vmem:[%s770 + $0x40] sm:$0xff]
        %v1809 = vld [vmem:[%s770 + $0x48] sm:$0xff]
        %v1810 = vld [vmem:[%s770 + $0x50] sm:$0xff]
        %v1811 = vld [vmem:[%s770 + $0x58] sm:$0xff]
        %v1812 = vld [vmem:[%s770 + $0x60] sm:$0xff]
        %v1813 = vld [vmem:[%s770 + $0x68] sm:$0xff]
        %v1814 = vld [vmem:[%s770 + $0x70] sm:$0xff]
        %v1815 = vld [vmem:[%s770 + $0x78] sm:$0xff]
        %v1816 = vpack.c.bf16 %v1624, %v1622
        %v1817 = vpack.c.bf16 %v1680, %v1678
        %v1818 = vpack.c.bf16 %v1736, %v1734
        %1819 = vmatpush.bf16.xpose.msra.mxu0 0
        %1820 = vmatpush.bf16.xpose.msra.mxu0 0
        %1821 = vmatpush.bf16.xpose.msra.mxu0 0
        %1822 = vmatpush.bf16.xpose.msra.mxu0 0
        %1823 = vmatpush.bf16.xpose.msra.mxu0 0
        %1824 = vmatpush.bf16.xpose.msra.mxu0 0
        %1825 = vmatpush.bf16.xpose.msra.mxu0 0
        %1826 = vmatpush.bf16.xpose.msra.mxu0 %v1817
        %1827 = vmatmul.bf16.gmra.mxu0 %v1816
        %v1828 = vpop.f32.mrf.mxu0
        %v1829 = vadd.f32 %v1742, %v1828
        %v1830 = vpop.f32.mrf.mxu0
        %v1831 = vadd.f32 %v1742, %v1830
        %1832 = vdwg.mxu0
        %v1833 = vsel %vm1758, %v1829, -inf
        %1834 = vmax.xlane.f32.xlu0 %v1833
        %v1835 = vpop.xlane.xlu0 %1834
        %v1836 = vsel %vm1758, %v1831, -inf
        %1837 = vmax.xlane.f32.xlu0 %v1836
        %v1838 = vpop.xlane.xlu0 %1837
        %v1839 = vsub.f32 %v1829, %v1835
        %v1840 = vsub.f32 %v1831, %v1838
        %v1841 = vmul.f32 %v1839, 1.442695
        %v1842 = vpow.pop %v1841
        %v1843 = vmul.f32 %v1840, 1.442695
        %v1844 = vpow.pop %v1843
        %v1845 = vsel %vm1758, %v1842, 0.0
        %1846 = vadd.xlane.f32.xlu0 %v1845
        %v1847 = vpop.xlane.xlu0 %1846
        %v1848 = vsel %vm1758, %v1844, 0.0
        %1849 = vadd.xlane.f32.xlu0 %v1848
        %v1850 = vpop.xlane.xlu0 %1849
        %v1851 = vrcp.pop %v1847
        %v1852 = vrcp.pop %v1850
        %v1853 = vmul.f32 %v1842, %v1851
        %v1854 = vmul.f32 %v1844, %v1852
        %v1855 = vpack.c.bf16 %v1854, %v1853
        %v1857 = vsel %vm1758, %v1855, 0
        %1859 = vmatpush.bf16.msra.mxu0 0
        %1860 = vmatpush.bf16.msra.mxu0 0
        %1861 = vmatpush.bf16.msra.mxu0 0
        %1862 = vmatpush.bf16.msra.mxu0 0
        %1863 = vmatpush.bf16.msra.mxu0 0
        %1864 = vmatpush.bf16.msra.mxu0 0
        %1865 = vmatpush.bf16.msra.mxu0 0
        %1866 = vmatpush.bf16.msra.mxu0 %v1818
        %1867 = vmatmul.bf16.gmra.mxu0 %v1857
        %v1868 = vpop.f32.mrf.mxu0
        %v1869 = vadd.f32 0.0, %v1868
        %v1870 = vpop.f32.mrf.mxu0
        %v1871 = vadd.f32 0.0, %v1870
        %1872 = vdwg.mxu0
        %v1873 = vpack.c.bf16 %v1871, %v1869
        %v1874 = vld [vmem:[%s770 + $0x80] sm:$0xff]
        %v1875 = vld [vmem:[%s770 + $0x88] sm:$0xff]
        %v1876 = vld [vmem:[%s770 + $0x90] sm:$0xff]
        %v1877 = vld [vmem:[%s770 + $0x98] sm:$0xff]
        %v1878 = vld [vmem:[%s770 + $0xa0] sm:$0xff]
        %v1879 = vld [vmem:[%s770 + $0xa8] sm:$0xff]
        %v1880 = vld [vmem:[%s770 + $0xb0] sm:$0xff]
        %v1881 = vld [vmem:[%s770 + $0xb8] sm:$0xff]
        %v1882 = vld [vmem:[%s770 + $0xc0] sm:$0xff]
        %v1883 = vld [vmem:[%s770 + $0xc8] sm:$0xff]
        %v1884 = vld [vmem:[%s770 + $0xd0] sm:$0xff]
        %v1885 = vld [vmem:[%s770 + $0xd8] sm:$0xff]
        %v1886 = vld [vmem:[%s770 + $0xe0] sm:$0xff]
        %v1887 = vld [vmem:[%s770 + $0xe8] sm:$0xff]
        %v1888 = vld [vmem:[%s770 + $0xf0] sm:$0xff]
        %v1889 = vld [vmem:[%s770 + $0xf8] sm:$0xff]
        %v1906 = vunpack.c.l.b16 %v1874
        %v1907 = vunpack.c.h.b16 %v1874
        %v1908 = vunpack.c.l.b16 %v1875
        %v1909 = vunpack.c.h.b16 %v1875
        %v1910 = vunpack.c.l.b16 %v1876
        %v1911 = vunpack.c.h.b16 %v1876
        %v1912 = vunpack.c.l.b16 %v1877
        %v1913 = vunpack.c.h.b16 %v1877
        %v1914 = vunpack.c.l.b16 %v1878
        %v1915 = vunpack.c.h.b16 %v1878
        %v1916 = vunpack.c.l.b16 %v1879
        %v1917 = vunpack.c.h.b16 %v1879
        %v1918 = vunpack.c.l.b16 %v1880
        %v1919 = vunpack.c.h.b16 %v1880
        %v1920 = vunpack.c.l.b16 %v1881
        %v1921 = vunpack.c.h.b16 %v1881
        %v1922 = vunpack.c.l.b16 %v1882
        %v1923 = vunpack.c.h.b16 %v1882
        %v1924 = vunpack.c.l.b16 %v1883
        %v1925 = vunpack.c.h.b16 %v1883
        %v1926 = vunpack.c.l.b16 %v1884
        %v1927 = vunpack.c.h.b16 %v1884
        %v1928 = vunpack.c.l.b16 %v1885
        %v1929 = vunpack.c.h.b16 %v1885
        %v1930 = vunpack.c.l.b16 %v1886
        %v1931 = vunpack.c.h.b16 %v1886
        %v1932 = vunpack.c.l.b16 %v1887
        %v1933 = vunpack.c.h.b16 %v1887
        %v1934 = vunpack.c.l.b16 %v1888
        %v1935 = vunpack.c.h.b16 %v1888
        %v1936 = vunpack.c.l.b16 %v1889
        %v1937 = vunpack.c.h.b16 %v1889
        %v1938 = vpack.c.b16 %v1908, %v1906
        %v1939 = vpack.c.b16 %v1909, %v1907
        %v1940 = vpack.c.b16 %v1912, %v1910
        %v1941 = vpack.c.b16 %v1913, %v1911
        %v1942 = vpack.c.b16 %v1916, %v1914
        %v1943 = vpack.c.b16 %v1917, %v1915
        %v1944 = vpack.c.b16 %v1920, %v1918
        %v1945 = vpack.c.b16 %v1921, %v1919
        %v1946 = vpack.c.b16 %v1924, %v1922
        %v1947 = vpack.c.b16 %v1925, %v1923
        %v1948 = vpack.c.b16 %v1928, %v1926
        %v1949 = vpack.c.b16 %v1929, %v1927
        %v1950 = vpack.c.b16 %v1932, %v1930
        %v1951 = vpack.c.b16 %v1933, %v1931
        %v1952 = vpack.c.b16 %v1936, %v1934
        %v1953 = vpack.c.b16 %v1937, %v1935
        %1970 = vmatpush.bf16.msra.mxu0 %v1952
        %1971 = vmatpush.bf16.msra.mxu0 %v1950
        %1972 = vmatpush.bf16.msra.mxu0 %v1948
        %1973 = vmatpush.bf16.msra.mxu0 %v1946
        %1974 = vmatpush.bf16.msra.mxu0 %v1944
        %1975 = vmatpush.bf16.msra.mxu0 %v1942
        %1976 = vmatpush.bf16.msra.mxu0 %v1940
        %1977 = vmatpush.bf16.msra.mxu0 %v1938
        %1978 = vmatmul.bf16.gmra.mxu0 %v1873
        %v1979 = vpop.f32.mrf.mxu0
        %v1980 = vadd.f32 0.0, %v1979
        %v1981 = vpop.f32.mrf.mxu0
        %v1982 = vadd.f32 0.0, %v1981
        %1983 = vdwg.mxu0
        %1984 = vmatpush.bf16.msra.mxu0 %v1953
        %1985 = vmatpush.bf16.msra.mxu0 %v1951
        %1986 = vmatpush.bf16.msra.mxu0 %v1949
        %1987 = vmatpush.bf16.msra.mxu0 %v1947
        %1988 = vmatpush.bf16.msra.mxu0 %v1945
        %1989 = vmatpush.bf16.msra.mxu0 %v1943
        %1990 = vmatpush.bf16.msra.mxu0 %v1941
        %1991 = vmatpush.bf16.msra.mxu0 %v1939
        %1992 = vmatmul.bf16.gmra.mxu0 %v1873
        %v1993 = vpop.f32.mrf.mxu0
        %v1994 = vadd.f32 0.0, %v1993
        %v1995 = vpop.f32.mrf.mxu0
        %v1996 = vadd.f32 0.0, %v1995
        %1997 = vdwg.mxu0
        %v2014 = vunpack.c.l.b16 %v1800
        %v2015 = vunpack.c.h.b16 %v1800
        %v2016 = vunpack.c.l.b16 %v1801
        %v2017 = vunpack.c.h.b16 %v1801
        %v2018 = vunpack.c.l.b16 %v1802
        %v2019 = vunpack.c.h.b16 %v1802
        %v2020 = vunpack.c.l.b16 %v1803
        %v2021 = vunpack.c.h.b16 %v1803
        %v2022 = vunpack.c.l.b16 %v1804
        %v2023 = vunpack.c.h.b16 %v1804
        %v2024 = vunpack.c.l.b16 %v1805
        %v2025 = vunpack.c.h.b16 %v1805
        %v2026 = vunpack.c.l.b16 %v1806
        %v2027 = vunpack.c.h.b16 %v1806
        %v2028 = vunpack.c.l.b16 %v1807
        %v2029 = vunpack.c.h.b16 %v1807
        %v2030 = vunpack.c.l.b16 %v1808
        %v2031 = vunpack.c.h.b16 %v1808
        %v2032 = vunpack.c.l.b16 %v1809
        %v2033 = vunpack.c.h.b16 %v1809
        %v2034 = vunpack.c.l.b16 %v1810
        %v2035 = vunpack.c.h.b16 %v1810
        %v2036 = vunpack.c.l.b16 %v1811
        %v2037 = vunpack.c.h.b16 %v1811
        %v2038 = vunpack.c.l.b16 %v1812
        %v2039 = vunpack.c.h.b16 %v1812
        %v2040 = vunpack.c.l.b16 %v1813
        %v2041 = vunpack.c.h.b16 %v1813
        %v2042 = vunpack.c.l.b16 %v1814
        %v2043 = vunpack.c.h.b16 %v1814
        %v2044 = vunpack.c.l.b16 %v1815
        %v2045 = vunpack.c.h.b16 %v1815
        %v2046 = vpack.c.b16 %v2016, %v2014
        %v2047 = vpack.c.b16 %v2017, %v2015
        %v2048 = vpack.c.b16 %v2020, %v2018
        %v2049 = vpack.c.b16 %v2021, %v2019
        %v2050 = vpack.c.b16 %v2024, %v2022
        %v2051 = vpack.c.b16 %v2025, %v2023
        %v2052 = vpack.c.b16 %v2028, %v2026
        %v2053 = vpack.c.b16 %v2029, %v2027
        %v2054 = vpack.c.b16 %v2032, %v2030
        %v2055 = vpack.c.b16 %v2033, %v2031
        %v2056 = vpack.c.b16 %v2036, %v2034
        %v2057 = vpack.c.b16 %v2037, %v2035
        %v2058 = vpack.c.b16 %v2040, %v2038
        %v2059 = vpack.c.b16 %v2041, %v2039
        %v2060 = vpack.c.b16 %v2044, %v2042
        %v2061 = vpack.c.b16 %v2045, %v2043
        %2078 = vmatpush.bf16.msra.mxu0 %v2060
        %2079 = vmatpush.bf16.msra.mxu0 %v2058
        %2080 = vmatpush.bf16.msra.mxu0 %v2056
        %2081 = vmatpush.bf16.msra.mxu0 %v2054
        %2082 = vmatpush.bf16.msra.mxu0 %v2052
        %2083 = vmatpush.bf16.msra.mxu0 %v2050
        %2084 = vmatpush.bf16.msra.mxu0 %v2048
        %2085 = vmatpush.bf16.msra.mxu0 %v2046
        %2086 = vmatmul.bf16.gmra.mxu0 %v1799
        %v2087 = vpop.f32.mrf.mxu0
        %v2088 = vadd.f32 %v1980, %v2087
        %v2089 = vpop.f32.mrf.mxu0
        %v2090 = vadd.f32 %v1982, %v2089
        %2091 = vdwg.mxu0
        %2092 = vmatpush.bf16.msra.mxu0 %v2061
        %2093 = vmatpush.bf16.msra.mxu0 %v2059
        %2094 = vmatpush.bf16.msra.mxu0 %v2057
        %2095 = vmatpush.bf16.msra.mxu0 %v2055
        %2096 = vmatpush.bf16.msra.mxu0 %v2053
        %2097 = vmatpush.bf16.msra.mxu0 %v2051
        %2098 = vmatpush.bf16.msra.mxu0 %v2049
        %2099 = vmatpush.bf16.msra.mxu0 %v2047
        %2100 = vmatmul.bf16.gmra.mxu0 %v1799
        %v2101 = vpop.f32.mrf.mxu0
        %v2102 = vadd.f32 %v1994, %v2101
        %v2103 = vpop.f32.mrf.mxu0
        %v2104 = vadd.f32 %v1996, %v2103
        %2105 = vdwg.mxu0
        %v2106 = vld [vmem:[%s780] sm:$0x3]
        %v2108 = vperm.slane %v2106, 0
        %v2109 = vperm.slane %v2106, 1
        %v2112 = vadd.f32 %v2088, %v2108
        %v2113 = vadd.f32 %v2102, %v2109
        %v2114 = vadd.f32 %v2090, %v2108
        %v2115 = vadd.f32 %v2104, %v2109
        %v2116 = vadd.f32 %v971, %v2112
        %v2117 = vadd.f32 %v972, %v2113
        %v2118 = vadd.f32 %v973, %v2114
        %v2119 = vadd.f32 %v974, %v2115
        %v2120 = vld [vmem:[%s790] sm:$0x3]
        %v2121 = vld [vmem:[%s800] sm:$0x3]
        %v2122 = vadd.f32 %v2116, %v2117
        %2123 = vadd.xlane.f32.xlu0 %v2122
        %v2124 = vpop.xlane.xlu0 %2123
        %v2125 = vadd.f32 %v2118, %v2119
        %2126 = vadd.xlane.f32.xlu0 %v2125
        %v2127 = vpop.xlane.xlu0 %2126
        %v2128 = vrcp.pop 256.0
        %v2129 = vmul.f32 256.0, %v2128
        %v2130 = vsub.f32 1.0, %v2129
        %v2131 = vmul.f32 %v2128, %v2130
        %v2132 = vadd.f32 %v2128, %v2131
        %vm2133 = vweird.f32 %v2128
        %v2134 = vsel %vm2133, %v2128, %v2132
        %v2135 = vmul.f32 %v2124, %v2134
        %v2136 = vmul.f32 %v2127, %v2134
        %v2137 = vsub.f32 %v2116, %v2135
        %v2138 = vsub.f32 %v2117, %v2135
        %v2139 = vsub.f32 %v2118, %v2136
        %v2140 = vsub.f32 %v2119, %v2136
        %v2141 = vmul.f32 %v2137, %v2137
        %v2142 = vmul.f32 %v2138, %v2138
        %v2143 = vmul.f32 %v2139, %v2139
        %v2144 = vmul.f32 %v2140, %v2140
        %v2145 = vadd.f32 %v2141, %v2142
        %2146 = vadd.xlane.f32.xlu0 %v2145
        %v2147 = vpop.xlane.xlu0 %2146
        %v2148 = vadd.f32 %v2143, %v2144
        %2149 = vadd.xlane.f32.xlu0 %v2148
        %v2150 = vpop.xlane.xlu0 %2149
        %v2151 = vmul.f32 %v2147, %v2134
        %v2152 = vmul.f32 %v2150, %v2134
        %v2153 = vadd.f32 %v2151, 1e-12
        %v2154 = vadd.f32 %v2152, 1e-12
        %v2155 = vrsqrt.pop %v2153
        %v2156 = vmul.f32 %v2155, %v2153
        %v2157 = vmul.f32 %v2156, %v2155
        %v2158 = vmul.f32 0.5, %v2157
        %v2159 = vsub.f32 1.5, %v2158
        %v2160 = vmul.f32 %v2155, %v2159
        %vm2161 = vweird.f32 %v2153
        %vm2162 = vweird.f32 %v2155
        %vm2163 = vmor %vm2161, %vm2162
        %v2164 = vsel %vm2163, %v2155, %v2160
        %v2165 = vrsqrt.pop %v2154
        %v2166 = vmul.f32 %v2165, %v2154
        %v2167 = vmul.f32 %v2166, %v2165
        %v2168 = vmul.f32 0.5, %v2167
        %v2169 = vsub.f32 1.5, %v2168
        %v2170 = vmul.f32 %v2165, %v2169
        %vm2171 = vweird.f32 %v2154
        %vm2172 = vweird.f32 %v2165
        %vm2173 = vmor %vm2171, %vm2172
        %v2174 = vsel %vm2173, %v2165, %v2170
        %v2175 = vmul.f32 %v2137, %v2164
        %v2176 = vmul.f32 %v2138, %v2164
        %v2177 = vmul.f32 %v2139, %v2174
        %v2178 = vmul.f32 %v2140, %v2174
        %v2180 = vperm.slane %v2120, 0
        %v2181 = vperm.slane %v2120, 1
        %v2184 = vmul.f32 %v2175, %v2180
        %v2185 = vmul.f32 %v2176, %v2181
        %v2186 = vmul.f32 %v2177, %v2180
        %v2187 = vmul.f32 %v2178, %v2181
        %v2189 = vperm.slane %v2121, 0
        %v2190 = vperm.slane %v2121, 1
        %v2193 = vadd.f32 %v2184, %v2189
        %v2194 = vadd.f32 %v2185, %v2190
        %v2195 = vadd.f32 %v2186, %v2189
        %v2196 = vadd.f32 %v2187, %v2190
        %v2197 = vpack.c.bf16 %v2195, %v2193
        %v2198 = vpack.c.bf16 %v2196, %v2194
        %v2199 = vld [vmem:[%s810] sm:$0xff]
        %v2200 = vld [vmem:[%s810 + $0x8] sm:$0xff]
        %v2201 = vld [vmem:[%s810 + $0x10] sm:$0xff]
        %v2202 = vld [vmem:[%s810 + $0x18] sm:$0xff]
        %v2203 = vld [vmem:[%s810 + $0x20] sm:$0xff]
        %v2204 = vld [vmem:[%s810 + $0x28] sm:$0xff]
        %v2205 = vld [vmem:[%s810 + $0x30] sm:$0xff]
        %v2206 = vld [vmem:[%s810 + $0x38] sm:$0xff]
        %v2207 = vld [vmem:[%s810 + $0x40] sm:$0xff]
        %v2208 = vld [vmem:[%s810 + $0x48] sm:$0xff]
        %v2209 = vld [vmem:[%s810 + $0x50] sm:$0xff]
        %v2210 = vld [vmem:[%s810 + $0x58] sm:$0xff]
        %v2211 = vld [vmem:[%s810 + $0x60] sm:$0xff]
        %v2212 = vld [vmem:[%s810 + $0x68] sm:$0xff]
        %v2213 = vld [vmem:[%s810 + $0x70] sm:$0xff]
        %v2214 = vld [vmem:[%s810 + $0x78] sm:$0xff]
        %v2215 = vld [vmem:[%s810 + $0x80] sm:$0xff]
        %v2216 = vld [vmem:[%s810 + $0x88] sm:$0xff]
        %v2217 = vld [vmem:[%s810 + $0x90] sm:$0xff]
        %v2218 = vld [vmem:[%s810 + $0x98] sm:$0xff]
        %v2219 = vld [vmem:[%s810 + $0xa0] sm:$0xff]
        %v2220 = vld [vmem:[%s810 + $0xa8] sm:$0xff]
        %v2221 = vld [vmem:[%s810 + $0xb0] sm:$0xff]
        %v2222 = vld [vmem:[%s810 + $0xb8] sm:$0xff]
        %v2223 = vld [vmem:[%s810 + $0xc0] sm:$0xff]
        %v2224 = vld [vmem:[%s810 + $0xc8] sm:$0xff]
        %v2225 = vld [vmem:[%s810 + $0xd0] sm:$0xff]
        %v2226 = vld [vmem:[%s810 + $0xd8] sm:$0xff]
        %v2227 = vld [vmem:[%s810 + $0xe0] sm:$0xff]
        %v2228 = vld [vmem:[%s810 + $0xe8] sm:$0xff]
        %v2229 = vld [vmem:[%s810 + $0xf0] sm:$0xff]
        %v2230 = vld [vmem:[%s810 + $0xf8] sm:$0xff]
        %v2231 = vld [vmem:[%s810 + $0x100] sm:$0xff]
        %v2232 = vld [vmem:[%s810 + $0x108] sm:$0xff]
        %v2233 = vld [vmem:[%s810 + $0x110] sm:$0xff]
        %v2234 = vld [vmem:[%s810 + $0x118] sm:$0xff]
        %v2235 = vld [vmem:[%s810 + $0x120] sm:$0xff]
        %v2236 = vld [vmem:[%s810 + $0x128] sm:$0xff]
        %v2237 = vld [vmem:[%s810 + $0x130] sm:$0xff]
        %v2238 = vld [vmem:[%s810 + $0x138] sm:$0xff]
        %v2239 = vld [vmem:[%s810 + $0x140] sm:$0xff]
        %v2240 = vld [vmem:[%s810 + $0x148] sm:$0xff]
        %v2241 = vld [vmem:[%s810 + $0x150] sm:$0xff]
        %v2242 = vld [vmem:[%s810 + $0x158] sm:$0xff]
        %v2243 = vld [vmem:[%s810 + $0x160] sm:$0xff]
        %v2244 = vld [vmem:[%s810 + $0x168] sm:$0xff]
        %v2245 = vld [vmem:[%s810 + $0x170] sm:$0xff]
        %v2246 = vld [vmem:[%s810 + $0x178] sm:$0xff]
        %v2247 = vld [vmem:[%s810 + $0x180] sm:$0xff]
        %v2248 = vld [vmem:[%s810 + $0x188] sm:$0xff]
        %v2249 = vld [vmem:[%s810 + $0x190] sm:$0xff]
        %v2250 = vld [vmem:[%s810 + $0x198] sm:$0xff]
        %v2251 = vld [vmem:[%s810 + $0x1a0] sm:$0xff]
        %v2252 = vld [vmem:[%s810 + $0x1a8] sm:$0xff]
        %v2253 = vld [vmem:[%s810 + $0x1b0] sm:$0xff]
        %v2254 = vld [vmem:[%s810 + $0x1b8] sm:$0xff]
        %v2255 = vld [vmem:[%s810 + $0x1c0] sm:$0xff]
        %v2256 = vld [vmem:[%s810 + $0x1c8] sm:$0xff]
        %v2257 = vld [vmem:[%s810 + $0x1d0] sm:$0xff]
        %v2258 = vld [vmem:[%s810 + $0x1d8] sm:$0xff]
        %v2259 = vld [vmem:[%s810 + $0x1e0] sm:$0xff]
        %v2260 = vld [vmem:[%s810 + $0x1e8] sm:$0xff]
        %v2261 = vld [vmem:[%s810 + $0x1f0] sm:$0xff]
        %v2262 = vld [vmem:[%s810 + $0x1f8] sm:$0xff]
        %v2263 = vld [vmem:[%s951] sm:$0xf]
        %v2265 = vperm.slane %v2263, 0
        %v2266 = vperm.slane %v2263, 1
        %v2267 = vperm.slane %v2263, 2
        %v2268 = vperm.slane %v2263, 3
        %v2337 = vunpack.c.l.b16 %v2199
        %v2338 = vunpack.c.h.b16 %v2199
        %v2339 = vunpack.c.l.b16 %v2200
        %v2340 = vunpack.c.h.b16 %v2200
        %v2341 = vunpack.c.l.b16 %v2201
        %v2342 = vunpack.c.h.b16 %v2201
        %v2343 = vunpack.c.l.b16 %v2202
        %v2344 = vunpack.c.h.b16 %v2202
        %v2345 = vunpack.c.l.b16 %v2203
        %v2346 = vunpack.c.h.b16 %v2203
        %v2347 = vunpack.c.l.b16 %v2204
        %v2348 = vunpack.c.h.b16 %v2204
        %v2349 = vunpack.c.l.b16 %v2205
        %v2350 = vunpack.c.h.b16 %v2205
        %v2351 = vunpack.c.l.b16 %v2206
        %v2352 = vunpack.c.h.b16 %v2206
        %v2353 = vunpack.c.l.b16 %v2207
        %v2354 = vunpack.c.h.b16 %v2207
        %v2355 = vunpack.c.l.b16 %v2208
        %v2356 = vunpack.c.h.b16 %v2208
        %v2357 = vunpack.c.l.b16 %v2209
        %v2358 = vunpack.c.h.b16 %v2209
        %v2359 = vunpack.c.l.b16 %v2210
        %v2360 = vunpack.c.h.b16 %v2210
        %v2361 = vunpack.c.l.b16 %v2211
        %v2362 = vunpack.c.h.b16 %v2211
        %v2363 = vunpack.c.l.b16 %v2212
        %v2364 = vunpack.c.h.b16 %v2212
        %v2365 = vunpack.c.l.b16 %v2213
        %v2366 = vunpack.c.h.b16 %v2213
        %v2367 = vunpack.c.l.b16 %v2214
        %v2368 = vunpack.c.h.b16 %v2214
        %v2369 = vunpack.c.l.b16 %v2215
        %v2370 = vunpack.c.h.b16 %v2215
        %v2371 = vunpack.c.l.b16 %v2216
        %v2372 = vunpack.c.h.b16 %v2216
        %v2373 = vunpack.c.l.b16 %v2217
        %v2374 = vunpack.c.h.b16 %v2217
        %v2375 = vunpack.c.l.b16 %v2218
        %v2376 = vunpack.c.h.b16 %v2218
        %v2377 = vunpack.c.l.b16 %v2219
        %v2378 = vunpack.c.h.b16 %v2219
        %v2379 = vunpack.c.l.b16 %v2220
        %v2380 = vunpack.c.h.b16 %v2220
        %v2381 = vunpack.c.l.b16 %v2221
        %v2382 = vunpack.c.h.b16 %v2221
        %v2383 = vunpack.c.l.b16 %v2222
        %v2384 = vunpack.c.h.b16 %v2222
        %v2385 = vunpack.c.l.b16 %v2223
        %v2386 = vunpack.c.h.b16 %v2223
        %v2387 = vunpack.c.l.b16 %v2224
        %v2388 = vunpack.c.h.b16 %v2224
        %v2389 = vunpack.c.l.b16 %v2225
        %v2390 = vunpack.c.h.b16 %v2225
        %v2391 = vunpack.c.l.b16 %v2226
        %v2392 = vunpack.c.h.b16 %v2226
        %v2393 = vunpack.c.l.b16 %v2227
        %v2394 = vunpack.c.h.b16 %v2227
        %v2395 = vunpack.c.l.b16 %v2228
        %v2396 = vunpack.c.h.b16 %v2228
        %v2397 = vunpack.c.l.b16 %v2229
        %v2398 = vunpack.c.h.b16 %v2229
        %v2399 = vunpack.c.l.b16 %v2230
        %v2400 = vunpack.c.h.b16 %v2230
        %v2401 = vunpack.c.l.b16 %v2231
        %v2402 = vunpack.c.h.b16 %v2231
        %v2403 = vunpack.c.l.b16 %v2232
        %v2404 = vunpack.c.h.b16 %v2232
        %v2405 = vunpack.c.l.b16 %v2233
        %v2406 = vunpack.c.h.b16 %v2233
        %v2407 = vunpack.c.l.b16 %v2234
        %v2408 = vunpack.c.h.b16 %v2234
        %v2409 = vunpack.c.l.b16 %v2235
        %v2410 = vunpack.c.h.b16 %v2235
        %v2411 = vunpack.c.l.b16 %v2236
        %v2412 = vunpack.c.h.b16 %v2236
        %v2413 = vunpack.c.l.b16 %v2237
        %v2414 = vunpack.c.h.b16 %v2237
        %v2415 = vunpack.c.l.b16 %v2238
        %v2416 = vunpack.c.h.b16 %v2238
        %v2417 = vunpack.c.l.b16 %v2239
        %v2418 = vunpack.c.h.b16 %v2239
        %v2419 = vunpack.c.l.b16 %v2240
        %v2420 = vunpack.c.h.b16 %v2240
        %v2421 = vunpack.c.l.b16 %v2241
        %v2422 = vunpack.c.h.b16 %v2241
        %v2423 = vunpack.c.l.b16 %v2242
        %v2424 = vunpack.c.h.b16 %v2242
        %v2425 = vunpack.c.l.b16 %v2243
        %v2426 = vunpack.c.h.b16 %v2243
        %v2427 = vunpack.c.l.b16 %v2244
        %v2428 = vunpack.c.h.b16 %v2244
        %v2429 = vunpack.c.l.b16 %v2245
        %v2430 = vunpack.c.h.b16 %v2245
        %v2431 = vunpack.c.l.b16 %v2246
        %v2432 = vunpack.c.h.b16 %v2246
        %v2433 = vunpack.c.l.b16 %v2247
        %v2434 = vunpack.c.h.b16 %v2247
        %v2435 = vunpack.c.l.b16 %v2248
        %v2436 = vunpack.c.h.b16 %v2248
        %v2437 = vunpack.c.l.b16 %v2249
        %v2438 = vunpack.c.h.b16 %v2249
        %v2439 = vunpack.c.l.b16 %v2250
        %v2440 = vunpack.c.h.b16 %v2250
        %v2441 = vunpack.c.l.b16 %v2251
        %v2442 = vunpack.c.h.b16 %v2251
        %v2443 = vunpack.c.l.b16 %v2252
        %v2444 = vunpack.c.h.b16 %v2252
        %v2445 = vunpack.c.l.b16 %v2253
        %v2446 = vunpack.c.h.b16 %v2253
        %v2447 = vunpack.c.l.b16 %v2254
        %v2448 = vunpack.c.h.b16 %v2254
        %v2449 = vunpack.c.l.b16 %v2255
        %v2450 = vunpack.c.h.b16 %v2255
        %v2451 = vunpack.c.l.b16 %v2256
        %v2452 = vunpack.c.h.b16 %v2256
        %v2453 = vunpack.c.l.b16 %v2257
        %v2454 = vunpack.c.h.b16 %v2257
        %v2455 = vunpack.c.l.b16 %v2258
        %v2456 = vunpack.c.h.b16 %v2258
        %v2457 = vunpack.c.l.b16 %v2259
        %v2458 = vunpack.c.h.b16 %v2259
        %v2459 = vunpack.c.l.b16 %v2260
        %v2460 = vunpack.c.h.b16 %v2260
        %v2461 = vunpack.c.l.b16 %v2261
        %v2462 = vunpack.c.h.b16 %v2261
        %v2463 = vunpack.c.l.b16 %v2262
        %v2464 = vunpack.c.h.b16 %v2262
        %v2465 = vpack.c.b16 %v2341, %v2337
        %v2466 = vpack.c.b16 %v2342, %v2338
        %v2467 = vpack.c.b16 %v2343, %v2339
        %v2468 = vpack.c.b16 %v2344, %v2340
        %v2469 = vpack.c.b16 %v2349, %v2345
        %v2470 = vpack.c.b16 %v2350, %v2346
        %v2471 = vpack.c.b16 %v2351, %v2347
        %v2472 = vpack.c.b16 %v2352, %v2348
        %v2473 = vpack.c.b16 %v2357, %v2353
        %v2474 = vpack.c.b16 %v2358, %v2354
        %v2475 = vpack.c.b16 %v2359, %v2355
        %v2476 = vpack.c.b16 %v2360, %v2356
        %v2477 = vpack.c.b16 %v2365, %v2361
        %v2478 = vpack.c.b16 %v2366, %v2362
        %v2479 = vpack.c.b16 %v2367, %v2363
        %v2480 = vpack.c.b16 %v2368, %v2364
        %v2481 = vpack.c.b16 %v2373, %v2369
        %v2482 = vpack.c.b16 %v2374, %v2370
        %v2483 = vpack.c.b16 %v2375, %v2371
        %v2484 = vpack.c.b16 %v2376, %v2372
        %v2485 = vpack.c.b16 %v2381, %v2377
        %v2486 = vpack.c.b16 %v2382, %v2378
        %v2487 = vpack.c.b16 %v2383, %v2379
        %v2488 = vpack.c.b16 %v2384, %v2380
        %v2489 = vpack.c.b16 %v2389, %v2385
        %v2490 = vpack.c.b16 %v2390, %v2386
        %v2491 = vpack.c.b16 %v2391, %v2387
        %v2492 = vpack.c.b16 %v2392, %v2388
        %v2493 = vpack.c.b16 %v2397, %v2393
        %v2494 = vpack.c.b16 %v2398, %v2394
        %v2495 = vpack.c.b16 %v2399, %v2395
        %v2496 = vpack.c.b16 %v2400, %v2396
        %v2497 = vpack.c.b16 %v2405, %v2401
        %v2498 = vpack.c.b16 %v2406, %v2402
        %v2499 = vpack.c.b16 %v2407, %v2403
        %v2500 = vpack.c.b16 %v2408, %v2404
        %v2501 = vpack.c.b16 %v2413, %v2409
        %v2502 = vpack.c.b16 %v2414, %v2410
        %v2503 = vpack.c.b16 %v2415, %v2411
        %v2504 = vpack.c.b16 %v2416, %v2412
        %v2505 = vpack.c.b16 %v2421, %v2417
        %v2506 = vpack.c.b16 %v2422, %v2418
        %v2507 = vpack.c.b16 %v2423, %v2419
        %v2508 = vpack.c.b16 %v2424, %v2420
        %v2509 = vpack.c.b16 %v2429, %v2425
        %v2510 = vpack.c.b16 %v2430, %v2426
        %v2511 = vpack.c.b16 %v2431, %v2427
        %v2512 = vpack.c.b16 %v2432, %v2428
        %v2513 = vpack.c.b16 %v2437, %v2433
        %v2514 = vpack.c.b16 %v2438, %v2434
        %v2515 = vpack.c.b16 %v2439, %v2435
        %v2516 = vpack.c.b16 %v2440, %v2436
        %v2517 = vpack.c.b16 %v2445, %v2441
        %v2518 = vpack.c.b16 %v2446, %v2442
        %v2519 = vpack.c.b16 %v2447, %v2443
        %v2520 = vpack.c.b16 %v2448, %v2444
        %v2521 = vpack.c.b16 %v2453, %v2449
        %v2522 = vpack.c.b16 %v2454, %v2450
        %v2523 = vpack.c.b16 %v2455, %v2451
        %v2524 = vpack.c.b16 %v2456, %v2452
        %v2525 = vpack.c.b16 %v2461, %v2457
        %v2526 = vpack.c.b16 %v2462, %v2458
        %v2527 = vpack.c.b16 %v2463, %v2459
        %v2528 = vpack.c.b16 %v2464, %v2460
        %2593 = vmatpush.bf16.msra.mxu0 %v2493
        %2594 = vmatpush.bf16.msra.mxu0 %v2489
        %2595 = vmatpush.bf16.msra.mxu0 %v2485
        %2596 = vmatpush.bf16.msra.mxu0 %v2481
        %2597 = vmatpush.bf16.msra.mxu0 %v2477
        %2598 = vmatpush.bf16.msra.mxu0 %v2473
        %2599 = vmatpush.bf16.msra.mxu0 %v2469
        %2600 = vmatpush.bf16.msra.mxu0 %v2465
        %2601 = vmatmul.bf16.gmra.mxu0 %v2197
        %v2602 = vpop.f32.mrf.mxu0
        %v2603 = vadd.f32 %v2265, %v2602
        %v2604 = vpop.f32.mrf.mxu0
        %v2605 = vadd.f32 %v2265, %v2604
        %2606 = vdwg.mxu0
        %2607 = vmatpush.bf16.msra.mxu0 %v2525
        %2608 = vmatpush.bf16.msra.mxu0 %v2521
        %2609 = vmatpush.bf16.msra.mxu0 %v2517
        %2610 = vmatpush.bf16.msra.mxu0 %v2513
        %2611 = vmatpush.bf16.msra.mxu0 %v2509
        %2612 = vmatpush.bf16.msra.mxu0 %v2505
        %2613 = vmatpush.bf16.msra.mxu0 %v2501
        %2614 = vmatpush.bf16.msra.mxu0 %v2497
        %2615 = vmatmul.bf16.gmra.mxu0 %v2198
        %v2616 = vpop.f32.mrf.mxu0
        %v2617 = vadd.f32 %v2603, %v2616
        %v2618 = vpop.f32.mrf.mxu0
        %v2619 = vadd.f32 %v2605, %v2618
        %2620 = vdwg.mxu0
        %2621 = vmatpush.bf16.msra.mxu0 %v2494
        %2622 = vmatpush.bf16.msra.mxu0 %v2490
        %2623 = vmatpush.bf16.msra.mxu0 %v2486
        %2624 = vmatpush.bf16.msra.mxu0 %v2482
        %2625 = vmatpush.bf16.msra.mxu0 %v2478
        %2626 = vmatpush.bf16.msra.mxu0 %v2474
        %2627 = vmatpush.bf16.msra.mxu0 %v2470
        %2628 = vmatpush.bf16.msra.mxu0 %v2466
        %2629 = vmatmul.bf16.gmra.mxu0 %v2197
        %v2630 = vpop.f32.mrf.mxu0
        %v2631 = vadd.f32 %v2266, %v2630
        %v2632 = vpop.f32.mrf.mxu0
        %v2633 = vadd.f32 %v2266, %v2632
        %2634 = vdwg.mxu0
        %2635 = vmatpush.bf16.msra.mxu0 %v2526
        %2636 = vmatpush.bf16.msra.mxu0 %v2522
        %2637 = vmatpush.bf16.msra.mxu0 %v2518
        %2638 = vmatpush.bf16.msra.mxu0 %v2514
        %2639 = vmatpush.bf16.msra.mxu0 %v2510
        %2640 = vmatpush.bf16.msra.mxu0 %v2506
        %2641 = vmatpush.bf16.msra.mxu0 %v2502
        %2642 = vmatpush.bf16.msra.mxu0 %v2498
        %2643 = vmatmul.bf16.gmra.mxu0 %v2198
        %v2644 = vpop.f32.mrf.mxu0
        %v2645 = vadd.f32 %v2631, %v2644
        %v2646 = vpop.f32.mrf.mxu0
        %v2647 = vadd.f32 %v2633, %v2646
        %2648 = vdwg.mxu0
        %2649 = vmatpush.bf16.msra.mxu0 %v2495
        %2650 = vmatpush.bf16.msra.mxu0 %v2491
        %2651 = vmatpush.bf16.msra.mxu0 %v2487
        %2652 = vmatpush.bf16.msra.mxu0 %v2483
        %2653 = vmatpush.bf16.msra.mxu0 %v2479
        %2654 = vmatpush.bf16.msra.mxu0 %v2475
        %2655 = vmatpush.bf16.msra.mxu0 %v2471
        %2656 = vmatpush.bf16.msra.mxu0 %v2467
        %2657 = vmatmul.bf16.gmra.mxu0 %v2197
        %v2658 = vpop.f32.mrf.mxu0
        %v2659 = vadd.f32 %v2267, %v2658
        %v2660 = vpop.f32.mrf.mxu0
        %v2661 = vadd.f32 %v2267, %v2660
        %2662 = vdwg.mxu0
        %2663 = vmatpush.bf16.msra.mxu0 %v2527
        %2664 = vmatpush.bf16.msra.mxu0 %v2523
        %2665 = vmatpush.bf16.msra.mxu0 %v2519
        %2666 = vmatpush.bf16.msra.mxu0 %v2515
        %2667 = vmatpush.bf16.msra.mxu0 %v2511
        %2668 = vmatpush.bf16.msra.mxu0 %v2507
        %2669 = vmatpush.bf16.msra.mxu0 %v2503
        %2670 = vmatpush.bf16.msra.mxu0 %v2499
        %2671 = vmatmul.bf16.gmra.mxu0 %v2198
        %v2672 = vpop.f32.mrf.mxu0
        %v2673 = vadd.f32 %v2659, %v2672
        %v2674 = vpop.f32.mrf.mxu0
        %v2675 = vadd.f32 %v2661, %v2674
        %2676 = vdwg.mxu0
        %2677 = vmatpush.bf16.msra.mxu0 %v2496
        %2678 = vmatpush.bf16.msra.mxu0 %v2492
        %2679 = vmatpush.bf16.msra.mxu0 %v2488
        %2680 = vmatpush.bf16.msra.mxu0 %v2484
        %2681 = vmatpush.bf16.msra.mxu0 %v2480
        %2682 = vmatpush.bf16.msra.mxu0 %v2476
        %2683 = vmatpush.bf16.msra.mxu0 %v2472
        %2684 = vmatpush.bf16.msra.mxu0 %v2468
        %2685 = vmatmul.bf16.gmra.mxu0 %v2197
        %v2686 = vpop.f32.mrf.mxu0
        %v2687 = vadd.f32 %v2268, %v2686
        %v2688 = vpop.f32.mrf.mxu0
        %v2689 = vadd.f32 %v2268, %v2688
        %2690 = vdwg.mxu0
        %2691 = vmatpush.bf16.msra.mxu0 %v2528
        %2692 = vmatpush.bf16.msra.mxu0 %v2524
        %2693 = vmatpush.bf16.msra.mxu0 %v2520
        %2694 = vmatpush.bf16.msra.mxu0 %v2516
        %2695 = vmatpush.bf16.msra.mxu0 %v2512
        %2696 = vmatpush.bf16.msra.mxu0 %v2508
        %2697 = vmatpush.bf16.msra.mxu0 %v2504
        %2698 = vmatpush.bf16.msra.mxu0 %v2500
        %2699 = vmatmul.bf16.gmra.mxu0 %v2198
        %v2700 = vpop.f32.mrf.mxu0
        %v2701 = vadd.f32 %v2687, %v2700
        %v2702 = vpop.f32.mrf.mxu0
        %v2703 = vadd.f32 %v2689, %v2702
        %2704 = vdwg.mxu0
        %v2705 = vmul.f32 %v2617, %v2617
        %v2706 = vmul.f32 %v2645, %v2645
        %v2707 = vmul.f32 %v2673, %v2673
        %v2708 = vmul.f32 %v2701, %v2701
        %v2709 = vmul.f32 %v2619, %v2619
        %v2710 = vmul.f32 %v2647, %v2647
        %v2711 = vmul.f32 %v2675, %v2675
        %v2712 = vmul.f32 %v2703, %v2703
        %v2713 = vmul.f32 %v2617, %v2705
        %v2714 = vmul.f32 %v2645, %v2706
        %v2715 = vmul.f32 %v2673, %v2707
        %v2716 = vmul.f32 %v2701, %v2708
        %v2717 = vmul.f32 %v2619, %v2709
        %v2718 = vmul.f32 %v2647, %v2710
        %v2719 = vmul.f32 %v2675, %v2711
        %v2720 = vmul.f32 %v2703, %v2712
        %v2721 = vmul.f32 %v2713, 0.044715
        %v2722 = vmul.f32 %v2714, 0.044715
        %v2723 = vmul.f32 %v2715, 0.044715
        %v2724 = vmul.f32 %v2716, 0.044715
        %v2725 = vmul.f32 %v2717, 0.044715
        %v2726 = vmul.f32 %v2718, 0.044715
        %v2727 = vmul.f32 %v2719, 0.044715
        %v2728 = vmul.f32 %v2720, 0.044715
        %v2729 = vadd.f32 %v2617, %v2721
        %v2730 = vadd.f32 %v2645, %v2722
        %v2731 = vadd.f32 %v2673, %v2723
        %v2732 = vadd.f32 %v2701, %v2724
        %v2733 = vadd.f32 %v2619, %v2725
        %v2734 = vadd.f32 %v2647, %v2726
        %v2735 = vadd.f32 %v2675, %v2727
        %v2736 = vadd.f32 %v2703, %v2728
        %v2737 = vmul.f32 %v2729, 0.7978846
        %v2738 = vmul.f32 %v2730, 0.7978846
        %v2739 = vmul.f32 %v2731, 0.7978846
        %v2740 = vmul.f32 %v2732, 0.7978846
        %v2741 = vmul.f32 %v2733, 0.7978846
        %v2742 = vmul.f32 %v2734, 0.7978846
        %v2743 = vmul.f32 %v2735, 0.7978846
        %v2744 = vmul.f32 %v2736, 0.7978846
        %v2745 = vtanh.pop %v2737
        %v2746 = vtanh.pop %v2738
        %v2747 = vtanh.pop %v2739
        %v2748 = vtanh.pop %v2740
        %v2749 = vtanh.pop %v2741
        %v2750 = vtanh.pop %v2742
        %v2751 = vtanh.pop %v2743
        %v2752 = vtanh.pop %v2744
        %v2753 = vadd.f32 %v2745, 1.0
        %v2754 = vadd.f32 %v2746, 1.0
        %v2755 = vadd.f32 %v2747, 1.0
        %v2756 = vadd.f32 %v2748, 1.0
        %v2757 = vadd.f32 %v2749, 1.0
        %v2758 = vadd.f32 %v2750, 1.0
        %v2759 = vadd.f32 %v2751, 1.0
        %v2760 = vadd.f32 %v2752, 1.0
        %v2761 = vmul.f32 %v2753, 0.5
        %v2762 = vmul.f32 %v2754, 0.5
        %v2763 = vmul.f32 %v2755, 0.5
        %v2764 = vmul.f32 %v2756, 0.5
        %v2765 = vmul.f32 %v2757, 0.5
        %v2766 = vmul.f32 %v2758, 0.5
        %v2767 = vmul.f32 %v2759, 0.5
        %v2768 = vmul.f32 %v2760, 0.5
        %v2769 = vmul.f32 %v2617, %v2761
        %v2770 = vmul.f32 %v2645, %v2762
        %v2771 = vmul.f32 %v2673, %v2763
        %v2772 = vmul.f32 %v2701, %v2764
        %v2773 = vmul.f32 %v2619, %v2765
        %v2774 = vmul.f32 %v2647, %v2766
        %v2775 = vmul.f32 %v2675, %v2767
        %v2776 = vmul.f32 %v2703, %v2768
        %v2777 = vpack.c.bf16 %v2773, %v2769
        %v2778 = vpack.c.bf16 %v2774, %v2770
        %v2779 = vpack.c.bf16 %v2775, %v2771
        %v2780 = vpack.c.bf16 %v2776, %v2772
        %v2781 = vld [vmem:[%s820] sm:$0xff]
        %v2782 = vld [vmem:[%s820 + $0x8] sm:$0xff]
        %v2783 = vld [vmem:[%s820 + $0x10] sm:$0xff]
        %v2784 = vld [vmem:[%s820 + $0x18] sm:$0xff]
        %v2785 = vld [vmem:[%s820 + $0x20] sm:$0xff]
        %v2786 = vld [vmem:[%s820 + $0x28] sm:$0xff]
        %v2787 = vld [vmem:[%s820 + $0x30] sm:$0xff]
        %v2788 = vld [vmem:[%s820 + $0x38] sm:$0xff]
        %v2789 = vld [vmem:[%s820 + $0x40] sm:$0xff]
        %v2790 = vld [vmem:[%s820 + $0x48] sm:$0xff]
        %v2791 = vld [vmem:[%s820 + $0x50] sm:$0xff]
        %v2792 = vld [vmem:[%s820 + $0x58] sm:$0xff]
        %v2793 = vld [vmem:[%s820 + $0x60] sm:$0xff]
        %v2794 = vld [vmem:[%s820 + $0x68] sm:$0xff]
        %v2795 = vld [vmem:[%s820 + $0x70] sm:$0xff]
        %v2796 = vld [vmem:[%s820 + $0x78] sm:$0xff]
        %v2797 = vld [vmem:[%s820 + $0x80] sm:$0xff]
        %v2798 = vld [vmem:[%s820 + $0x88] sm:$0xff]
        %v2799 = vld [vmem:[%s820 + $0x90] sm:$0xff]
        %v2800 = vld [vmem:[%s820 + $0x98] sm:$0xff]
        %v2801 = vld [vmem:[%s820 + $0xa0] sm:$0xff]
        %v2802 = vld [vmem:[%s820 + $0xa8] sm:$0xff]
        %v2803 = vld [vmem:[%s820 + $0xb0] sm:$0xff]
        %v2804 = vld [vmem:[%s820 + $0xb8] sm:$0xff]
        %v2805 = vld [vmem:[%s820 + $0xc0] sm:$0xff]
        %v2806 = vld [vmem:[%s820 + $0xc8] sm:$0xff]
        %v2807 = vld [vmem:[%s820 + $0xd0] sm:$0xff]
        %v2808 = vld [vmem:[%s820 + $0xd8] sm:$0xff]
        %v2809 = vld [vmem:[%s820 + $0xe0] sm:$0xff]
        %v2810 = vld [vmem:[%s820 + $0xe8] sm:$0xff]
        %v2811 = vld [vmem:[%s820 + $0xf0] sm:$0xff]
        %v2812 = vld [vmem:[%s820 + $0xf8] sm:$0xff]
        %v2813 = vld [vmem:[%s820 + $0x100] sm:$0xff]
        %v2814 = vld [vmem:[%s820 + $0x108] sm:$0xff]
        %v2815 = vld [vmem:[%s820 + $0x110] sm:$0xff]
        %v2816 = vld [vmem:[%s820 + $0x118] sm:$0xff]
        %v2817 = vld [vmem:[%s820 + $0x120] sm:$0xff]
        %v2818 = vld [vmem:[%s820 + $0x128] sm:$0xff]
        %v2819 = vld [vmem:[%s820 + $0x130] sm:$0xff]
        %v2820 = vld [vmem:[%s820 + $0x138] sm:$0xff]
        %v2821 = vld [vmem:[%s820 + $0x140] sm:$0xff]
        %v2822 = vld [vmem:[%s820 + $0x148] sm:$0xff]
        %v2823 = vld [vmem:[%s820 + $0x150] sm:$0xff]
        %v2824 = vld [vmem:[%s820 + $0x158] sm:$0xff]
        %v2825 = vld [vmem:[%s820 + $0x160] sm:$0xff]
        %v2826 = vld [vmem:[%s820 + $0x168] sm:$0xff]
        %v2827 = vld [vmem:[%s820 + $0x170] sm:$0xff]
        %v2828 = vld [vmem:[%s820 + $0x178] sm:$0xff]
        %v2829 = vld [vmem:[%s820 + $0x180] sm:$0xff]
        %v2830 = vld [vmem:[%s820 + $0x188] sm:$0xff]
        %v2831 = vld [vmem:[%s820 + $0x190] sm:$0xff]
        %v2832 = vld [vmem:[%s820 + $0x198] sm:$0xff]
        %v2833 = vld [vmem:[%s820 + $0x1a0] sm:$0xff]
        %v2834 = vld [vmem:[%s820 + $0x1a8] sm:$0xff]
        %v2835 = vld [vmem:[%s820 + $0x1b0] sm:$0xff]
        %v2836 = vld [vmem:[%s820 + $0x1b8] sm:$0xff]
        %v2837 = vld [vmem:[%s820 + $0x1c0] sm:$0xff]
        %v2838 = vld [vmem:[%s820 + $0x1c8] sm:$0xff]
        %v2839 = vld [vmem:[%s820 + $0x1d0] sm:$0xff]
        %v2840 = vld [vmem:[%s820 + $0x1d8] sm:$0xff]
        %v2841 = vld [vmem:[%s820 + $0x1e0] sm:$0xff]
        %v2842 = vld [vmem:[%s820 + $0x1e8] sm:$0xff]
        %v2843 = vld [vmem:[%s820 + $0x1f0] sm:$0xff]
        %v2844 = vld [vmem:[%s820 + $0x1f8] sm:$0xff]
        %v2845 = vld [vmem:[%s830] sm:$0x3]
        %v2847 = vperm.slane %v2845, 0
        %v2848 = vperm.slane %v2845, 1
        %v2915 = vunpack.c.l.b16 %v2781
        %v2916 = vunpack.c.h.b16 %v2781
        %v2917 = vunpack.c.l.b16 %v2782
        %v2918 = vunpack.c.h.b16 %v2782
        %v2919 = vunpack.c.l.b16 %v2783
        %v2920 = vunpack.c.h.b16 %v2783
        %v2921 = vunpack.c.l.b16 %v2784
        %v2922 = vunpack.c.h.b16 %v2784
        %v2923 = vunpack.c.l.b16 %v2785
        %v2924 = vunpack.c.h.b16 %v2785
        %v2925 = vunpack.c.l.b16 %v2786
        %v2926 = vunpack.c.h.b16 %v2786
        %v2927 = vunpack.c.l.b16 %v2787
        %v2928 = vunpack.c.h.b16 %v2787
        %v2929 = vunpack.c.l.b16 %v2788
        %v2930 = vunpack.c.h.b16 %v2788
        %v2931 = vunpack.c.l.b16 %v2789
        %v2932 = vunpack.c.h.b16 %v2789
        %v2933 = vunpack.c.l.b16 %v2790
        %v2934 = vunpack.c.h.b16 %v2790
        %v2935 = vunpack.c.l.b16 %v2791
        %v2936 = vunpack.c.h.b16 %v2791
        %v2937 = vunpack.c.l.b16 %v2792
        %v2938 = vunpack.c.h.b16 %v2792
        %v2939 = vunpack.c.l.b16 %v2793
        %v2940 = vunpack.c.h.b16 %v2793
        %v2941 = vunpack.c.l.b16 %v2794
        %v2942 = vunpack.c.h.b16 %v2794
        %v2943 = vunpack.c.l.b16 %v2795
        %v2944 = vunpack.c.h.b16 %v2795
        %v2945 = vunpack.c.l.b16 %v2796
        %v2946 = vunpack.c.h.b16 %v2796
        %v2947 = vunpack.c.l.b16 %v2797
        %v2948 = vunpack.c.h.b16 %v2797
        %v2949 = vunpack.c.l.b16 %v2798
        %v2950 = vunpack.c.h.b16 %v2798
        %v2951 = vunpack.c.l.b16 %v2799
        %v2952 = vunpack.c.h.b16 %v2799
        %v2953 = vunpack.c.l.b16 %v2800
        %v2954 = vunpack.c.h.b16 %v2800
        %v2955 = vunpack.c.l.b16 %v2801
        %v2956 = vunpack.c.h.b16 %v2801
        %v2957 = vunpack.c.l.b16 %v2802
        %v2958 = vunpack.c.h.b16 %v2802
        %v2959 = vunpack.c.l.b16 %v2803
        %v2960 = vunpack.c.h.b16 %v2803
        %v2961 = vunpack.c.l.b16 %v2804
        %v2962 = vunpack.c.h.b16 %v2804
        %v2963 = vunpack.c.l.b16 %v2805
        %v2964 = vunpack.c.h.b16 %v2805
        %v2965 = vunpack.c.l.b16 %v2806
        %v2966 = vunpack.c.h.b16 %v2806
        %v2967 = vunpack.c.l.b16 %v2807
        %v2968 = vunpack.c.h.b16 %v2807
        %v2969 = vunpack.c.l.b16 %v2808
        %v2970 = vunpack.c.h.b16 %v2808
        %v2971 = vunpack.c.l.b16 %v2809
        %v2972 = vunpack.c.h.b16 %v2809
        %v2973 = vunpack.c.l.b16 %v2810
        %v2974 = vunpack.c.h.b16 %v2810
        %v2975 = vunpack.c.l.b16 %v2811
        %v2976 = vunpack.c.h.b16 %v2811
        %v2977 = vunpack.c.l.b16 %v2812
        %v2978 = vunpack.c.h.b16 %v2812
        %v2979 = vunpack.c.l.b16 %v2813
        %v2980 = vunpack.c.h.b16 %v2813
        %v2981 = vunpack.c.l.b16 %v2814
        %v2982 = vunpack.c.h.b16 %v2814
        %v2983 = vunpack.c.l.b16 %v2815
        %v2984 = vunpack.c.h.b16 %v2815
        %v2985 = vunpack.c.l.b16 %v2816
        %v2986 = vunpack.c.h.b16 %v2816
        %v2987 = vunpack.c.l.b16 %v2817
        %v2988 = vunpack.c.h.b16 %v2817
        %v2989 = vunpack.c.l.b16 %v2818
        %v2990 = vunpack.c.h.b16 %v2818
        %v2991 = vunpack.c.l.b16 %v2819
        %v2992 = vunpack.c.h.b16 %v2819
        %v2993 = vunpack.c.l.b16 %v2820
        %v2994 = vunpack.c.h.b16 %v2820
        %v2995 = vunpack.c.l.b16 %v2821
        %v2996 = vunpack.c.h.b16 %v2821
        %v2997 = vunpack.c.l.b16 %v2822
        %v2998 = vunpack.c.h.b16 %v2822
        %v2999 = vunpack.c.l.b16 %v2823
        %v3000 = vunpack.c.h.b16 %v2823
        %v3001 = vunpack.c.l.b16 %v2824
        %v3002 = vunpack.c.h.b16 %v2824
        %v3003 = vunpack.c.l.b16 %v2825
        %v3004 = vunpack.c.h.b16 %v2825
        %v3005 = vunpack.c.l.b16 %v2826
        %v3006 = vunpack.c.h.b16 %v2826
        %v3007 = vunpack.c.l.b16 %v2827
        %v3008 = vunpack.c.h.b16 %v2827
        %v3009 = vunpack.c.l.b16 %v2828
        %v3010 = vunpack.c.h.b16 %v2828
        %v3011 = vunpack.c.l.b16 %v2829
        %v3012 = vunpack.c.h.b16 %v2829
        %v3013 = vunpack.c.l.b16 %v2830
        %v3014 = vunpack.c.h.b16 %v2830
        %v3015 = vunpack.c.l.b16 %v2831
        %v3016 = vunpack.c.h.b16 %v2831
        %v3017 = vunpack.c.l.b16 %v2832
        %v3018 = vunpack.c.h.b16 %v2832
        %v3019 = vunpack.c.l.b16 %v2833
        %v3020 = vunpack.c.h.b16 %v2833
        %v3021 = vunpack.c.l.b16 %v2834
        %v3022 = vunpack.c.h.b16 %v2834
        %v3023 = vunpack.c.l.b16 %v2835
        %v3024 = vunpack.c.h.b16 %v2835
        %v3025 = vunpack.c.l.b16 %v2836
        %v3026 = vunpack.c.h.b16 %v2836
        %v3027 = vunpack.c.l.b16 %v2837
        %v3028 = vunpack.c.h.b16 %v2837
        %v3029 = vunpack.c.l.b16 %v2838
        %v3030 = vunpack.c.h.b16 %v2838
        %v3031 = vunpack.c.l.b16 %v2839
        %v3032 = vunpack.c.h.b16 %v2839
        %v3033 = vunpack.c.l.b16 %v2840
        %v3034 = vunpack.c.h.b16 %v2840
        %v3035 = vunpack.c.l.b16 %v2841
        %v3036 = vunpack.c.h.b16 %v2841
        %v3037 = vunpack.c.l.b16 %v2842
        %v3038 = vunpack.c.h.b16 %v2842
        %v3039 = vunpack.c.l.b16 %v2843
        %v3040 = vunpack.c.h.b16 %v2843
        %v3041 = vunpack.c.l.b16 %v2844
        %v3042 = vunpack.c.h.b16 %v2844
        %v3043 = vpack.c.b16 %v2917, %v2915
        %v3044 = vpack.c.b16 %v2918, %v2916
        %v3045 = vpack.c.b16 %v2921, %v2919
        %v3046 = vpack.c.b16 %v2922, %v2920
        %v3047 = vpack.c.b16 %v2925, %v2923
        %v3048 = vpack.c.b16 %v2926, %v2924
        %v3049 = vpack.c.b16 %v2929, %v2927
        %v3050 = vpack.c.b16 %v2930, %v2928
        %v3051 = vpack.c.b16 %v2933, %v2931
        %v3052 = vpack.c.b16 %v2934, %v2932
        %v3053 = vpack.c.b16 %v2937, %v2935
        %v3054 = vpack.c.b16 %v2938, %v2936
        %v3055 = vpack.c.b16 %v2941, %v2939
        %v3056 = vpack.c.b16 %v2942, %v2940
        %v3057 = vpack.c.b16 %v2945, %v2943
        %v3058 = vpack.c.b16 %v2946, %v2944
        %v3059 = vpack.c.b16 %v2949, %v2947
        %v3060 = vpack.c.b16 %v2950, %v2948
        %v3061 = vpack.c.b16 %v2953, %v2951
        %v3062 = vpack.c.b16 %v2954, %v2952
        %v3063 = vpack.c.b16 %v2957, %v2955
        %v3064 = vpack.c.b16 %v2958, %v2956
        %v3065 = vpack.c.b16 %v2961, %v2959
        %v3066 = vpack.c.b16 %v2962, %v2960
        %v3067 = vpack.c.b16 %v2965, %v2963
        %v3068 = vpack.c.b16 %v2966, %v2964
        %v3069 = vpack.c.b16 %v2969, %v2967
        %v3070 = vpack.c.b16 %v2970, %v2968
        %v3071 = vpack.c.b16 %v2973, %v2971
        %v3072 = vpack.c.b16 %v2974, %v2972
        %v3073 = vpack.c.b16 %v2977, %v2975
        %v3074 = vpack.c.b16 %v2978, %v2976
        %v3075 = vpack.c.b16 %v2981, %v2979
        %v3076 = vpack.c.b16 %v2982, %v2980
        %v3077 = vpack.c.b16 %v2985, %v2983
        %v3078 = vpack.c.b16 %v2986, %v2984
        %v3079 = vpack.c.b16 %v2989, %v2987
        %v3080 = vpack.c.b16 %v2990, %v2988
        %v3081 = vpack.c.b16 %v2993, %v2991
        %v3082 = vpack.c.b16 %v2994, %v2992
        %v3083 = vpack.c.b16 %v2997, %v2995
        %v3084 = vpack.c.b16 %v2998, %v2996
        %v3085 = vpack.c.b16 %v3001, %v2999
        %v3086 = vpack.c.b16 %v3002, %v3000
        %v3087 = vpack.c.b16 %v3005, %v3003
        %v3088 = vpack.c.b16 %v3006, %v3004
        %v3089 = vpack.c.b16 %v3009, %v3007
        %v3090 = vpack.c.b16 %v3010, %v3008
        %v3091 = vpack.c.b16 %v3013, %v3011
        %v3092 = vpack.c.b16 %v3014, %v3012
        %v3093 = vpack.c.b16 %v3017, %v3015
        %v3094 = vpack.c.b16 %v3018, %v3016
        %v3095 = vpack.c.b16 %v3021, %v3019
        %v3096 = vpack.c.b16 %v3022, %v3020
        %v3097 = vpack.c.b16 %v3025, %v3023
        %v3098 = vpack.c.b16 %v3026, %v3024
        %v3099 = vpack.c.b16 %v3029, %v3027
        %v3100 = vpack.c.b16 %v3030, %v3028
        %v3101 = vpack.c.b16 %v3033, %v3031
        %v3102 = vpack.c.b16 %v3034, %v3032
        %v3103 = vpack.c.b16 %v3037, %v3035
        %v3104 = vpack.c.b16 %v3038, %v3036
        %v3105 = vpack.c.b16 %v3041, %v3039
        %v3106 = vpack.c.b16 %v3042, %v3040
        %3171 = vmatpush.bf16.msra.mxu0 %v3057
        %3172 = vmatpush.bf16.msra.mxu0 %v3055
        %3173 = vmatpush.bf16.msra.mxu0 %v3053
        %3174 = vmatpush.bf16.msra.mxu0 %v3051
        %3175 = vmatpush.bf16.msra.mxu0 %v3049
        %3176 = vmatpush.bf16.msra.mxu0 %v3047
        %3177 = vmatpush.bf16.msra.mxu0 %v3045
        %3178 = vmatpush.bf16.msra.mxu0 %v3043
        %3179 = vmatmul.bf16.gmra.mxu0 %v2777
        %v3180 = vpop.f32.mrf.mxu0
        %v3181 = vadd.f32 %v2847, %v3180
        %v3182 = vpop.f32.mrf.mxu0
        %v3183 = vadd.f32 %v2847, %v3182
        %3184 = vdwg.mxu0
        %3185 = vmatpush.bf16.msra.mxu0 %v3073
        %3186 = vmatpush.bf16.msra.mxu0 %v3071
        %3187 = vmatpush.bf16.msra.mxu0 %v3069
        %3188 = vmatpush.bf16.msra.mxu0 %v3067
        %3189 = vmatpush.bf16.msra.mxu0 %v3065
        %3190 = vmatpush.bf16.msra.mxu0 %v3063
        %3191 = vmatpush.bf16.msra.mxu0 %v3061
        %3192 = vmatpush.bf16.msra.mxu0 %v3059
        %3193 = vmatmul.bf16.gmra.mxu0 %v2778
        %v3194 = vpop.f32.mrf.mxu0
        %v3195 = vadd.f32 %v3181, %v3194
        %v3196 = vpop.f32.mrf.mxu0
        %v3197 = vadd.f32 %v3183, %v3196
        %3198 = vdwg.mxu0
        %3199 = vmatpush.bf16.msra.mxu0 %v3089
        %3200 = vmatpush.bf16.msra.mxu0 %v3087
        %3201 = vmatpush.bf16.msra.mxu0 %v3085
        %3202 = vmatpush.bf16.msra.mxu0 %v3083
        %3203 = vmatpush.bf16.msra.mxu0 %v3081
        %3204 = vmatpush.bf16.msra.mxu0 %v3079
        %3205 = vmatpush.bf16.msra.mxu0 %v3077
        %3206 = vmatpush.bf16.msra.mxu0 %v3075
        %3207 = vmatmul.bf16.gmra.mxu0 %v2779
        %v3208 = vpop.f32.mrf.mxu0
        %v3209 = vadd.f32 %v3195, %v3208
        %v3210 = vpop.f32.mrf.mxu0
        %v3211 = vadd.f32 %v3197, %v3210
        %3212 = vdwg.mxu0
        %3213 = vmatpush.bf16.msra.mxu0 %v3105
        %3214 = vmatpush.bf16.msra.mxu0 %v3103
        %3215 = vmatpush.bf16.msra.mxu0 %v3101
        %3216 = vmatpush.bf16.msra.mxu0 %v3099
        %3217 = vmatpush.bf16.msra.mxu0 %v3097
        %3218 = vmatpush.bf16.msra.mxu0 %v3095
        %3219 = vmatpush.bf16.msra.mxu0 %v3093
        %3220 = vmatpush.bf16.msra.mxu0 %v3091
        %3221 = vmatmul.bf16.gmra.mxu0 %v2780
        %v3222 = vpop.f32.mrf.mxu0
        %v3223 = vadd.f32 %v3209, %v3222
        %v3224 = vpop.f32.mrf.mxu0
        %v3225 = vadd.f32 %v3211, %v3224
        %3226 = vdwg.mxu0
        %3227 = vmatpush.bf16.msra.mxu0 %v3058
        %3228 = vmatpush.bf16.msra.mxu0 %v3056
        %3229 = vmatpush.bf16.msra.mxu0 %v3054
        %3230 = vmatpush.bf16.msra.mxu0 %v3052
        %3231 = vmatpush.bf16.msra.mxu0 %v3050
        %3232 = vmatpush.bf16.msra.mxu0 %v3048
        %3233 = vmatpush.bf16.msra.mxu0 %v3046
        %3234 = vmatpush.bf16.msra.mxu0 %v3044
        %3235 = vmatmul.bf16.gmra.mxu0 %v2777
        %v3236 = vpop.f32.mrf.mxu0
        %v3237 = vadd.f32 %v2848, %v3236
        %v3238 = vpop.f32.mrf.mxu0
        %v3239 = vadd.f32 %v2848, %v3238
        %3240 = vdwg.mxu0
        %3241 = vmatpush.bf16.msra.mxu0 %v3074
        %3242 = vmatpush.bf16.msra.mxu0 %v3072
        %3243 = vmatpush.bf16.msra.mxu0 %v3070
        %3244 = vmatpush.bf16.msra.mxu0 %v3068
        %3245 = vmatpush.bf16.msra.mxu0 %v3066
        %3246 = vmatpush.bf16.msra.mxu0 %v3064
        %3247 = vmatpush.bf16.msra.mxu0 %v3062
        %3248 = vmatpush.bf16.msra.mxu0 %v3060
        %3249 = vmatmul.bf16.gmra.mxu0 %v2778
        %v3250 = vpop.f32.mrf.mxu0
        %v3251 = vadd.f32 %v3237, %v3250
        %v3252 = vpop.f32.mrf.mxu0
        %v3253 = vadd.f32 %v3239, %v3252
        %3254 = vdwg.mxu0
        %3255 = vmatpush.bf16.msra.mxu0 %v3090
        %3256 = vmatpush.bf16.msra.mxu0 %v3088
        %3257 = vmatpush.bf16.msra.mxu0 %v3086
        %3258 = vmatpush.bf16.msra.mxu0 %v3084
        %3259 = vmatpush.bf16.msra.mxu0 %v3082
        %3260 = vmatpush.bf16.msra.mxu0 %v3080
        %3261 = vmatpush.bf16.msra.mxu0 %v3078
        %3262 = vmatpush.bf16.msra.mxu0 %v3076
        %3263 = vmatmul.bf16.gmra.mxu0 %v2779
        %v3264 = vpop.f32.mrf.mxu0
        %v3265 = vadd.f32 %v3251, %v3264
        %v3266 = vpop.f32.mrf.mxu0
        %v3267 = vadd.f32 %v3253, %v3266
        %3268 = vdwg.mxu0
        %3269 = vmatpush.bf16.msra.mxu0 %v3106
        %3270 = vmatpush.bf16.msra.mxu0 %v3104
        %3271 = vmatpush.bf16.msra.mxu0 %v3102
        %3272 = vmatpush.bf16.msra.mxu0 %v3100
        %3273 = vmatpush.bf16.msra.mxu0 %v3098
        %3274 = vmatpush.bf16.msra.mxu0 %v3096
        %3275 = vmatpush.bf16.msra.mxu0 %v3094
        %3276 = vmatpush.bf16.msra.mxu0 %v3092
        %3277 = vmatmul.bf16.gmra.mxu0 %v2780
        %v3278 = vpop.f32.mrf.mxu0
        %v3279 = vadd.f32 %v3265, %v3278
        %v3280 = vpop.f32.mrf.mxu0
        %v3281 = vadd.f32 %v3267, %v3280
        %3282 = vdwg.mxu0
        %v3283 = vadd.f32 %v2193, %v3223
        %v3284 = vadd.f32 %v2194, %v3279
        %v3285 = vadd.f32 %v2195, %v3225
        %v3286 = vadd.f32 %v2196, %v3281
        %v3287 = vld [vmem:[%s840] sm:$0x3]
        %v3288 = vld [vmem:[%s955] sm:$0x3]
        %v3289 = vadd.f32 %v3283, %v3284
        %3290 = vadd.xlane.f32.xlu0 %v3289
        %v3291 = vpop.xlane.xlu0 %3290
        %v3292 = vadd.f32 %v3285, %v3286
        %3293 = vadd.xlane.f32.xlu0 %v3292
        %v3294 = vpop.xlane.xlu0 %3293
        %v3295 = vmul.f32 %v3291, %v2134
        %v3296 = vmul.f32 %v3294, %v2134
        %v3297 = vsub.f32 %v3283, %v3295
        %v3298 = vsub.f32 %v3284, %v3295
        %v3299 = vsub.f32 %v3285, %v3296
        %v3300 = vsub.f32 %v3286, %v3296
        %v3301 = vmul.f32 %v3297, %v3297
        %v3302 = vmul.f32 %v3298, %v3298
        %v3303 = vmul.f32 %v3299, %v3299
        %v3304 = vmul.f32 %v3300, %v3300
        %v3305 = vadd.f32 %v3301, %v3302
        %3306 = vadd.xlane.f32.xlu0 %v3305
        %v3307 = vpop.xlane.xlu0 %3306
        %v3308 = vadd.f32 %v3303, %v3304
        %3309 = vadd.xlane.f32.xlu0 %v3308
        %v3310 = vpop.xlane.xlu0 %3309
        %v3311 = vmul.f32 %v3307, %v2134
        %v3312 = vmul.f32 %v3310, %v2134
        %v3313 = vadd.f32 %v3311, 1e-12
        %v3314 = vadd.f32 %v3312, 1e-12
        %v3315 = vrsqrt.pop %v3313
        %v3316 = vmul.f32 %v3315, %v3313
        %v3317 = vmul.f32 %v3316, %v3315
        %v3318 = vmul.f32 0.5, %v3317
        %v3319 = vsub.f32 1.5, %v3318
        %v3320 = vmul.f32 %v3315, %v3319
        %vm3321 = vweird.f32 %v3313
        %vm3322 = vweird.f32 %v3315
        %vm3323 = vmor %vm3321, %vm3322
        %v3324 = vsel %vm3323, %v3315, %v3320
        %v3325 = vrsqrt.pop %v3314
        %v3326 = vmul.f32 %v3325, %v3314
        %v3327 = vmul.f32 %v3326, %v3325
        %v3328 = vmul.f32 0.5, %v3327
        %v3329 = vsub.f32 1.5, %v3328
        %v3330 = vmul.f32 %v3325, %v3329
        %vm3331 = vweird.f32 %v3314
        %vm3332 = vweird.f32 %v3325
        %vm3333 = vmor %vm3331, %vm3332
        %v3334 = vsel %vm3333, %v3325, %v3330
        %v3335 = vmul.f32 %v3297, %v3324
        %v3336 = vmul.f32 %v3298, %v3324
        %v3337 = vmul.f32 %v3299, %v3334
        %v3338 = vmul.f32 %v3300, %v3334
        %v3340 = vperm.slane %v3287, 0
        %v3341 = vperm.slane %v3287, 1
        %v3344 = vmul.f32 %v3335, %v3340
        %v3345 = vmul.f32 %v3336, %v3341
        %v3346 = vmul.f32 %v3337, %v3340
        %v3347 = vmul.f32 %v3338, %v3341
        %v3349 = vperm.slane %v3288, 0
        %v3350 = vperm.slane %v3288, 1
        %v3353 = vadd.f32 %v3344, %v3349
        %v3354 = vadd.f32 %v3345, %v3350
        %v3355 = vadd.f32 %v3346, %v3349
        %v3356 = vadd.f32 %v3347, %v3350
        %3357 = vst [vmem:[%s947] sm:$0xff] %v3353
        %3358 = vst [vmem:[%s947 + $0x8] sm:$0xff] %v3354
        %3359 = vst [vmem:[%s947 + $0x10] sm:$0xff] %v3355
        %3360 = vst [vmem:[%s947 + $0x18] sm:$0xff] %v3356
        %s3361 = sand.u32 %s433, 1
        %s3362 = scalar_lea.sflag [#allocation4], %s3361
        %s3363 = sand.u32 %s433, 1
        %s3364 = smul.addr %s3363, 32
        %s3365 = scalar_lea.vmem [#allocation22], %s3364
        // Predicated region
        $region129: #{tpu_custom_call.1} parent=75 // pred_check
          %p3366 = pneg %p443
        $region130: #{tpu_custom_call.1} parent=75 // pred_check_branch
          %3368 = sbr.rel (%p3366) target = $region132
        $region131: #{tpu_custom_call.1} parent=75 // pred_region
          %3370 = vsyncadd %s3362, 0
          %s3371 = smul.addr %s53, 4
          %s3372 = smul.addr %s3371, 8
          %s3373 = scalar_lea.hbm %s14, %s3372
          %s3374 = sshll.u32 %s3365, 4
          %s3375 = int_to_ptr.vmem [resolvable:$true] %s3374
          %s3376 = sshll.u32 %s3373, 4
          %s3377 = int_to_ptr.hbm [resolvable:$true] %s3376
          %3382 = dma.vmem_to_hbm [thread:$0]  %s3375, 512, %s3377, %s3362, 256, 256, 16
        $region132: #{tpu_custom_call.1} parent=75 // pred_fallthru
          _
      $region76: #{tpu_custom_call.1} parent=5 // pred_fallthru
        _
      %p3383 = scmp.le.s32.totalorder 2, %s44
      // Predicated region
      $region133: #{tpu_custom_call.1} parent=5 // pred_check
        %p3384 = pneg %p3383
      $region134: #{tpu_custom_call.1} parent=5 // pred_check_branch
        %3386 = sbr.rel (%p3384) target = $region136
      $region135: #{tpu_custom_call.1} parent=5 // pred_region
        %s3387 = ssub.s32 %s44, 2
        // Predicated region
        $region137: #{tpu_custom_call.1} parent=135 // pred_check
          %p3388 = pneg %p449
        $region138: #{tpu_custom_call.1} parent=135 // pred_check_branch
          %3390 = sbr.rel (%p3388) target = $region140
        $region139: #{tpu_custom_call.1} parent=135 // pred_region
          %s3391 = sand.u32 %s434, 1
          %s3392 = scalar_lea.sflag [#allocation4], %s3391
          %s3393 = sand.u32 %s434, 1
          %s3394 = smul.addr %s3393, 32
          %s3395 = scalar_lea.vmem [#allocation22], %s3394
          %3397 = dma.done %s3392, 512
        $region140: #{tpu_custom_call.1} parent=135 // pred_fallthru
          _
      $region136: #{tpu_custom_call.1} parent=5 // pred_fallthru
        _
    $region6: #{tpu_custom_call.1} parent=1 // loop_footer
      %s48 = sadd.s32 1, %s44
    $region7: #{tpu_custom_call.1} parent=1 // loop_footer_branch
      %43 = sbr.rel target = $region3
    $region8: #{tpu_custom_call.1} parent=1 // loop_exit
      _
    %3398 = vsyncpa [#allocation3], 1
    %s3399 = scalar_lea.sflag [#allocation3], 1
    %3400 = vsyncpa %s3399, 1
    %3401 = vsyncpa [#allocation6], 1
    %s3402 = scalar_lea.sflag [#allocation6], 1
    %3403 = vsyncpa %s3402, 1
    %3404 = vsyncpa [#allocation9], 1
    %s3405 = scalar_lea.sflag [#allocation9], 1
    %3406 = vsyncpa %s3405, 1
    %3407 = vsyncpa [#allocation12], 1
    %s3408 = scalar_lea.sflag [#allocation12], 1
    %3409 = vsyncpa %s3408, 1
    %3410 = vsyncpa [#allocation15], 1
    %s3411 = scalar_lea.sflag [#allocation15], 1
    %3412 = vsyncpa %s3411, 1
    %3413 = vsyncpa [#allocation18], 1
    %s3414 = scalar_lea.sflag [#allocation18], 1
    %3415 = vsyncpa %s3414, 1
    %3416 = vsyncpa [#allocation21], 1
    %s3417 = scalar_lea.sflag [#allocation21], 1
    %3418 = vsyncpa %s3417, 1
    %3419 = vsyncpa [#allocation4], 1
    %s3420 = scalar_lea.sflag [#allocation4], 1
    %3421 = vsyncpa %s3420, 1

</llo_original>
